<compile_context>
chip_gen: v5e
topology: v5e:2x2
jax: 0.10.0
libtpu: 0.0.40
codegen_flags: <defaults>
</compile_context>

<pallas_src>
import functools
import numpy as np

import jax
import jax.numpy as jnp
from jax import lax
from jax.experimental import pallas as pl
from jax.experimental.pallas import tpu as pltpu


def _row_block(H, W, max_rows=128):
    """Largest divisor of H (halving) such that rb*W <= max_rows rows/matmul."""
    rb = H
    while rb > 1 and (rb * W > max_rows) and (rb % 2 == 0):
        rb //= 2
    return rb


# ---------------------------------------------------------------------------
# Pallas kernel: one ConvLSTM cell step for one batch image
# ---------------------------------------------------------------------------
def _convlstm_cell_kernel(xp_ref, c_ref, w_ref, b_ref, h_out_ref, c_out_ref,
                          *, H, W, C, Chid, kh, kw, rb):
    # xp_ref: (1, H+2ph, W+2pw, C) zero-padded cat([x, h_cur]) for this batch
    # c_ref:  (1, H, W, Chid)  current cell state
    # w_ref:  (kh*kw, C, 4*Chid) tap-major conv weight (x @ W layout)
    # b_ref:  (1, 4*Chid) conv bias
    G = 4 * Chid

    # Lane scale: 1.0 on the i/f/o lanes, 2.0 on the g lanes.  One lane-dense
    # sigmoid over all 4*Chid lanes then covers i/f/o directly and gives the
    # g gate via the exact identity tanh(x) = 2*sigmoid(2x) - 1.
    # Hoisted out of the row-block / tap loops (traced once).
    lane = lax.broadcasted_iota(jnp.int32, (1, G), 1)
    g_scale = jnp.where(lane < 3 * Chid, 1.0, 2.0).astype(jnp.float32)

    for r0 in range(0, H, rb):                      # static row-block loop
        # --- convolution as kh*kw shifted, lane-dense matmuls (f32 acc) ----
        acc = jnp.broadcast_to(b_ref[...], (rb * W, G)).astype(jnp.float32)
        for t in range(kh * kw):
            dy, dx = divmod(t, kw)
            win = xp_ref[0, r0 + dy:r0 + dy + rb, dx:dx + W, :]   # (rb, W, C)
            acc = acc + jnp.dot(win.reshape(rb * W, C), w_ref[t],
                                preferred_element_type=jnp.float32)  # (rb*W, G)

        # --- fused LSTM gate math (split order i, f, o, g as in torch) -----
        # Single EUP pass over all 128 gate lanes.
        act = 1.0 / (1.0 + jnp.exp(-(acc * g_scale)))
        i_g = act[:, 0:Chid]
        f_g = act[:, Chid:2 * Chid]
        o_g = act[:, 2 * Chid:3 * Chid]
        g_g = 2.0 * act[:, 3 * Chid:4 * Chid] - 1.0    # == tanh(pre_g)

        c_cur = c_ref[0, r0:r0 + rb].reshape(rb * W, Chid)
        c_next = f_g * c_cur + i_g * g_g
        h_next = o_g * jnp.tanh(c_next)

        h_out_ref[0, r0:r0 + rb] = h_next.reshape(rb, W, Chid)
        c_out_ref[0, r0:r0 + rb] = c_next.reshape(rb, W, Chid)


# ---------------------------------------------------------------------------
# NHWC core wrapper around pallas_call
# ---------------------------------------------------------------------------
def convlstm_cell_nhwc(x, h, c, w_taps, bias, *, kh, kw):
    B, H, W, Cin = x.shape
    Chid = h.shape[-1]
    C = Cin + Chid
    ph, pw = kh // 2, kw // 2
    Hp, Wp = H + 2 * ph, W + 2 * pw

    combined = jnp.concatenate([x, h], axis=-1)                       # (B,H,W,C)
    padded = jnp.pad(combined, ((0, 0), (ph, ph), (pw, pw), (0, 0)))  # zero pad

    rb = _row_block(H, W)
    assert H % rb == 0

    kernel = functools.partial(_convlstm_cell_kernel,
                               H=H, W=W, C=C, Chid=Chid, kh=kh, kw=kw, rb=rb)

    out_shape = (jax.ShapeDtypeStruct((B, H, W, Chid), jnp.float32),
                 jax.ShapeDtypeStruct((B, H, W, Chid), jnp.float32))

    h_next, c_next = pl.pallas_call(
        kernel,
        out_shape=out_shape,
        grid=(B,),
        in_specs=[
            pl.BlockSpec((1, Hp, Wp, C), lambda b: (b, 0, 0, 0)),      # padded feats
            pl.BlockSpec((1, H, W, Chid), lambda b: (b, 0, 0, 0)),     # c_cur
            pl.BlockSpec((kh * kw, C, 4 * Chid), lambda b: (0, 0, 0)), # weights
            pl.BlockSpec((1, 4 * Chid), lambda b: (0, 0)),             # bias
        ],
        out_specs=(
            pl.BlockSpec((1, H, W, Chid), lambda b: (b, 0, 0, 0)),
            pl.BlockSpec((1, H, W, Chid), lambda b: (b, 0, 0, 0)),
        ),
        compiler_params=pltpu.CompilerParams(
            dimension_semantics=("parallel",)),
    )(padded, c, w_taps, bias)
    return h_next, c_next


# ---------------------------------------------------------------------------
# Top-level wrapper with PyTorch (NCHW / Conv2d weight layout) semantics
# ---------------------------------------------------------------------------
def convlstm_cell_forward(x_nchw, h_nchw, c_nchw, w_conv, b_conv):
    # w_conv: (4*Chid, Cin+Chid, kh, kw)  (torch nn.Conv2d layout), b_conv: (4*Chid,)
    kh, kw = int(w_conv.shape[-2]), int(w_conv.shape[-1])
    x = jnp.transpose(x_nchw, (0, 2, 3, 1))
    h = jnp.transpose(h_nchw, (0, 2, 3, 1))
    c = jnp.transpose(c_nchw, (0, 2, 3, 1))
    # tap-major, transposed for x @ W:  w_taps[t, cin, cout] = w_conv[cout, cin, dy, dx]
    w_taps = jnp.transpose(w_conv, (2, 3, 1, 0)).reshape(
        kh * kw, w_conv.shape[1], w_conv.shape[0])
    bias = b_conv.reshape(1, -1)
    h_next, c_next = convlstm_cell_nhwc(x, h, c, w_taps, bias, kh=kh, kw=kw)
    return (jnp.transpose(h_next, (0, 3, 1, 2)),
            jnp.transpose(c_next, (0, 3, 1, 2)))


# ---------------------------------------------------------------------------
# Pure-JAX (XLA conv) reference for a sanity check
# ---------------------------------------------------------------------------
def reference_forward(x_nchw, h_nchw, c_nchw, w_conv, b_conv):
    kh, kw = int(w_conv.shape[-2]), int(w_conv.shape[-1])
    x = jnp.transpose(x_nchw, (0, 2, 3, 1))
    h = jnp.transpose(h_nchw, (0, 2, 3, 1))
    c = jnp.transpose(c_nchw, (0, 2, 3, 1))
    combined = jnp.concatenate([x, h], axis=-1)
    w_hwio = jnp.transpose(w_conv, (2, 3, 1, 0))
    gates = lax.conv_general_dilated(
        combined, w_hwio, window_strides=(1, 1),
        padding=((kh // 2, kh // 2), (kw // 2, kw // 2)),
        dimension_numbers=('NHWC', 'HWIO', 'NHWC')) + b_conv
    i, f, o, g = jnp.split(gates, 4, axis=-1)
    i, f, o = jax.nn.sigmoid(i), jax.nn.sigmoid(f), jax.nn.sigmoid(o)
    g = jnp.tanh(g)
    c_next = f * c + i * g
    h_next = o * jnp.tanh(c_next)
    return (jnp.transpose(h_next, (0, 3, 1, 2)),
            jnp.transpose(c_next, (0, 3, 1, 2)))


if __name__ == "__main__":
    # Small stand-in shapes consistent with the module's forward.
    batch, input_dim, hidden_dim = 2, 4, 32
    height = width = 16
    kh = kw = 3

    key = jax.random.PRNGKey(0)
    kx, kh_, kc, kw_, kb = jax.random.split(key, 5)
    x = jax.random.normal(kx, (batch, input_dim, height, width), jnp.float32)
    h_cur = jax.random.normal(kh_, (batch, hidden_dim, height, width), jnp.float32)
    c_cur = jax.random.normal(kc, (batch, hidden_dim, height, width), jnp.float32)
    w_conv = 0.1 * jax.random.normal(
        kw_, (4 * hidden_dim, input_dim + hidden_dim, kh, kw), jnp.float32)
    b_conv = 0.05 * jax.random.normal(kb, (4 * hidden_dim,), jnp.float32)

    fwd = jax.jit(convlstm_cell_forward)
    h_next, c_next = jax.block_until_ready(fwd(x, h_cur, c_cur, w_conv, b_conv))
    assert h_next.shape == (batch, hidden_dim, height, width), h_next.shape
    assert c_next.shape == (batch, hidden_dim, height, width), c_next.shape

    # Sanity check against an independent XLA-conv reference.
    h_ref, c_ref = reference_forward(x, h_cur, c_cur, w_conv, b_conv)
    np.testing.assert_allclose(np.asarray(h_next), np.asarray(h_ref),
                               atol=1e-3, rtol=1e-3)
    np.testing.assert_allclose(np.asarray(c_next), np.asarray(c_ref),
                               atol=1e-3, rtol=1e-3)

    print("KERNEL_OK")
</pallas_src>

<mosaic_0001>
module attributes {stable_mosaic.version = 11 : i64} {
  func.func @_convlstm_cell_kernel(%arg0: i32, %arg1: memref<1x18x18x36xf32, #tpu.memory_space<vmem>>, %arg2: memref<1x16x16x32xf32, #tpu.memory_space<vmem>>, %arg3: memref<9x36x128xf32, #tpu.memory_space<vmem>>, %arg4: memref<1x128xf32, #tpu.memory_space<vmem>>, %arg5: memref<1x16x16x32xf32, #tpu.memory_space<vmem>>, %arg6: memref<1x16x16x32xf32, #tpu.memory_space<vmem>>) attributes {dimension_semantics = [#tpu.dimension_semantics<parallel>], iteration_bounds = array<i64: 2>, scalar_prefetch = 0 : i64, scratch_operands = 0 : i64, tpu.core_type = #tpu.core_type<tc>, window_params = [{transform_indices = @transform_0, window_bounds = array<i64: 1, 18, 18, 36>}, {transform_indices = @transform_1, window_bounds = array<i64: 1, 16, 16, 32>}, {pipeline_mode = #tpu.pipeline_mode<synchronous>, transform_indices = @transform_2, window_bounds = array<i64: 9, 36, 128>}, {pipeline_mode = #tpu.pipeline_mode<synchronous>, transform_indices = @transform_3, window_bounds = array<i64: 1, 128>}, {transform_indices = @transform_4, window_bounds = array<i64: 1, 16, 16, 32>}, {transform_indices = @transform_5, window_bounds = array<i64: 1, 16, 16, 32>}]} {
    %0 = tpu.iota {dimensions = array<i32: 1>} : vector<1x128xi32>
    %c96_i32 = arith.constant 96 : i32
    %1 = vector.broadcast %c96_i32 : i32 to vector<1x128xi32>
    %2 = arith.cmpi slt, %0, %1 : vector<1x128xi32>
    %cst = arith.constant 1.000000e+00 : f32
    %cst_0 = arith.constant 2.000000e+00 : f32
    %3 = vector.broadcast %cst : f32 to vector<1x128xf32>
    %4 = vector.broadcast %cst_0 : f32 to vector<1x128xf32>
    %5 = arith.select %2, %3, %4 : vector<1x128xi1>, vector<1x128xf32>
    %c0 = arith.constant 0 : index
    %c0_1 = arith.constant 0 : index
    %6 = vector.load %arg4[%c0, %c0_1] : memref<1x128xf32, #tpu.memory_space<vmem>>, vector<1x128xf32>
    %7 = vector.shape_cast %6 : vector<1x128xf32> to vector<1x128xf32>
    %8 = vector.broadcast %7 : vector<1x128xf32> to vector<128x128xf32>
    %c0_2 = arith.constant 0 : index
    %c0_3 = arith.constant 0 : index
    %c0_4 = arith.constant 0 : index
    %c0_5 = arith.constant 0 : index
    %9 = vector.load %arg1[%c0_2, %c0_3, %c0_4, %c0_5] : memref<1x18x18x36xf32, #tpu.memory_space<vmem>>, vector<1x8x16x36xf32>
    %10 = vector.shape_cast %9 : vector<1x8x16x36xf32> to vector<8x16x36xf32>
    %11 = vector.shape_cast %10 : vector<8x16x36xf32> to vector<128x36xf32>
    %c0_6 = arith.constant 0 : index
    %c0_7 = arith.constant 0 : index
    %c0_8 = arith.constant 0 : index
    %12 = vector.load %arg3[%c0_6, %c0_7, %c0_8] : memref<9x36x128xf32, #tpu.memory_space<vmem>>, vector<1x36x128xf32>
    %13 = vector.shape_cast %12 : vector<1x36x128xf32> to vector<36x128xf32>
    %cst_9 = arith.constant dense<0.000000e+00> : vector<128x128xf32>
    %14 = tpu.matmul %11, %13, %cst_9 {dimension_numbers = #tpu.dot_dimension_numbers<[1], [0], [0], [1], [0, 0, 1, 1], [], []>} : vector<128x36xf32>, vector<36x128xf32>, vector<128x128xf32> -> vector<128x128xf32>
    %15 = arith.addf %8, %14 : vector<128x128xf32>
    %c0_10 = arith.constant 0 : index
    %c0_11 = arith.constant 0 : index
    %c1 = arith.constant 1 : index
    %c0_12 = arith.constant 0 : index
    %16 = vector.load %arg1[%c0_10, %c0_11, %c1, %c0_12] : memref<1x18x18x36xf32, #tpu.memory_space<vmem>>, vector<1x8x16x36xf32>
    %17 = vector.shape_cast %16 : vector<1x8x16x36xf32> to vector<8x16x36xf32>
    %18 = vector.shape_cast %17 : vector<8x16x36xf32> to vector<128x36xf32>
    %c1_13 = arith.constant 1 : index
    %c0_14 = arith.constant 0 : index
    %c0_15 = arith.constant 0 : index
    %19 = vector.load %arg3[%c1_13, %c0_14, %c0_15] : memref<9x36x128xf32, #tpu.memory_space<vmem>>, vector<1x36x128xf32>
    %20 = vector.shape_cast %19 : vector<1x36x128xf32> to vector<36x128xf32>
    %cst_16 = arith.constant dense<0.000000e+00> : vector<128x128xf32>
    %21 = tpu.matmul %18, %20, %cst_16 {dimension_numbers = #tpu.dot_dimension_numbers<[1], [0], [0], [1], [0, 0, 1, 1], [], []>} : vector<128x36xf32>, vector<36x128xf32>, vector<128x128xf32> -> vector<128x128xf32>
    %22 = arith.addf %15, %21 : vector<128x128xf32>
    %c0_17 = arith.constant 0 : index
    %c0_18 = arith.constant 0 : index
    %c2 = arith.constant 2 : index
    %c0_19 = arith.constant 0 : index
    %23 = vector.load %arg1[%c0_17, %c0_18, %c2, %c0_19] : memref<1x18x18x36xf32, #tpu.memory_space<vmem>>, vector<1x8x16x36xf32>
    %24 = vector.shape_cast %23 : vector<1x8x16x36xf32> to vector<8x16x36xf32>
    %25 = vector.shape_cast %24 : vector<8x16x36xf32> to vector<128x36xf32>
    %c2_20 = arith.constant 2 : index
    %c0_21 = arith.constant 0 : index
    %c0_22 = arith.constant 0 : index
    %26 = vector.load %arg3[%c2_20, %c0_21, %c0_22] : memref<9x36x128xf32, #tpu.memory_space<vmem>>, vector<1x36x128xf32>
    %27 = vector.shape_cast %26 : vector<1x36x128xf32> to vector<36x128xf32>
    %cst_23 = arith.constant dense<0.000000e+00> : vector<128x128xf32>
    %28 = tpu.matmul %25, %27, %cst_23 {dimension_numbers = #tpu.dot_dimension_numbers<[1], [0], [0], [1], [0, 0, 1, 1], [], []>} : vector<128x36xf32>, vector<36x128xf32>, vector<128x128xf32> -> vector<128x128xf32>
    %29 = arith.addf %22, %28 : vector<128x128xf32>
    %c0_24 = arith.constant 0 : index
    %c1_25 = arith.constant 1 : index
    %c0_26 = arith.constant 0 : index
    %c0_27 = arith.constant 0 : index
    %30 = vector.load %arg1[%c0_24, %c1_25, %c0_26, %c0_27] : memref<1x18x18x36xf32, #tpu.memory_space<vmem>>, vector<1x8x16x36xf32>
    %31 = vector.shape_cast %30 : vector<1x8x16x36xf32> to vector<8x16x36xf32>
    %32 = vector.shape_cast %31 : vector<8x16x36xf32> to vector<128x36xf32>
    %c3 = arith.constant 3 : index
    %c0_28 = arith.constant 0 : index
    %c0_29 = arith.constant 0 : index
    %33 = vector.load %arg3[%c3, %c0_28, %c0_29] : memref<9x36x128xf32, #tpu.memory_space<vmem>>, vector<1x36x128xf32>
    %34 = vector.shape_cast %33 : vector<1x36x128xf32> to vector<36x128xf32>
    %cst_30 = arith.constant dense<0.000000e+00> : vector<128x128xf32>
    %35 = tpu.matmul %32, %34, %cst_30 {dimension_numbers = #tpu.dot_dimension_numbers<[1], [0], [0], [1], [0, 0, 1, 1], [], []>} : vector<128x36xf32>, vector<36x128xf32>, vector<128x128xf32> -> vector<128x128xf32>
    %36 = arith.addf %29, %35 : vector<128x128xf32>
    %c0_31 = arith.constant 0 : index
    %c1_32 = arith.constant 1 : index
    %c1_33 = arith.constant 1 : index
    %c0_34 = arith.constant 0 : index
    %37 = vector.load %arg1[%c0_31, %c1_32, %c1_33, %c0_34] : memref<1x18x18x36xf32, #tpu.memory_space<vmem>>, vector<1x8x16x36xf32>
    %38 = vector.shape_cast %37 : vector<1x8x16x36xf32> to vector<8x16x36xf32>
    %39 = vector.shape_cast %38 : vector<8x16x36xf32> to vector<128x36xf32>
    %c4 = arith.constant 4 : index
    %c0_35 = arith.constant 0 : index
    %c0_36 = arith.constant 0 : index
    %40 = vector.load %arg3[%c4, %c0_35, %c0_36] : memref<9x36x128xf32, #tpu.memory_space<vmem>>, vector<1x36x128xf32>
    %41 = vector.shape_cast %40 : vector<1x36x128xf32> to vector<36x128xf32>
    %cst_37 = arith.constant dense<0.000000e+00> : vector<128x128xf32>
    %42 = tpu.matmul %39, %41, %cst_37 {dimension_numbers = #tpu.dot_dimension_numbers<[1], [0], [0], [1], [0, 0, 1, 1], [], []>} : vector<128x36xf32>, vector<36x128xf32>, vector<128x128xf32> -> vector<128x128xf32>
    %43 = arith.addf %36, %42 : vector<128x128xf32>
    %c0_38 = arith.constant 0 : index
    %c1_39 = arith.constant 1 : index
    %c2_40 = arith.constant 2 : index
    %c0_41 = arith.constant 0 : index
    %44 = vector.load %arg1[%c0_38, %c1_39, %c2_40, %c0_41] : memref<1x18x18x36xf32, #tpu.memory_space<vmem>>, vector<1x8x16x36xf32>
    %45 = vector.shape_cast %44 : vector<1x8x16x36xf32> to vector<8x16x36xf32>
    %46 = vector.shape_cast %45 : vector<8x16x36xf32> to vector<128x36xf32>
    %c5 = arith.constant 5 : index
    %c0_42 = arith.constant 0 : index
    %c0_43 = arith.constant 0 : index
    %47 = vector.load %arg3[%c5, %c0_42, %c0_43] : memref<9x36x128xf32, #tpu.memory_space<vmem>>, vector<1x36x128xf32>
    %48 = vector.shape_cast %47 : vector<1x36x128xf32> to vector<36x128xf32>
    %cst_44 = arith.constant dense<0.000000e+00> : vector<128x128xf32>
    %49 = tpu.matmul %46, %48, %cst_44 {dimension_numbers = #tpu.dot_dimension_numbers<[1], [0], [0], [1], [0, 0, 1, 1], [], []>} : vector<128x36xf32>, vector<36x128xf32>, vector<128x128xf32> -> vector<128x128xf32>
    %50 = arith.addf %43, %49 : vector<128x128xf32>
    %c0_45 = arith.constant 0 : index
    %c2_46 = arith.constant 2 : index
    %c0_47 = arith.constant 0 : index
    %c0_48 = arith.constant 0 : index
    %51 = vector.load %arg1[%c0_45, %c2_46, %c0_47, %c0_48] : memref<1x18x18x36xf32, #tpu.memory_space<vmem>>, vector<1x8x16x36xf32>
    %52 = vector.shape_cast %51 : vector<1x8x16x36xf32> to vector<8x16x36xf32>
    %53 = vector.shape_cast %52 : vector<8x16x36xf32> to vector<128x36xf32>
    %c6 = arith.constant 6 : index
    %c0_49 = arith.constant 0 : index
    %c0_50 = arith.constant 0 : index
    %54 = vector.load %arg3[%c6, %c0_49, %c0_50] : memref<9x36x128xf32, #tpu.memory_space<vmem>>, vector<1x36x128xf32>
    %55 = vector.shape_cast %54 : vector<1x36x128xf32> to vector<36x128xf32>
    %cst_51 = arith.constant dense<0.000000e+00> : vector<128x128xf32>
    %56 = tpu.matmul %53, %55, %cst_51 {dimension_numbers = #tpu.dot_dimension_numbers<[1], [0], [0], [1], [0, 0, 1, 1], [], []>} : vector<128x36xf32>, vector<36x128xf32>, vector<128x128xf32> -> vector<128x128xf32>
    %57 = arith.addf %50, %56 : vector<128x128xf32>
    %c0_52 = arith.constant 0 : index
    %c2_53 = arith.constant 2 : index
    %c1_54 = arith.constant 1 : index
    %c0_55 = arith.constant 0 : index
    %58 = vector.load %arg1[%c0_52, %c2_53, %c1_54, %c0_55] : memref<1x18x18x36xf32, #tpu.memory_space<vmem>>, vector<1x8x16x36xf32>
    %59 = vector.shape_cast %58 : vector<1x8x16x36xf32> to vector<8x16x36xf32>
    %60 = vector.shape_cast %59 : vector<8x16x36xf32> to vector<128x36xf32>
    %c7 = arith.constant 7 : index
    %c0_56 = arith.constant 0 : index
    %c0_57 = arith.constant 0 : index
    %61 = vector.load %arg3[%c7, %c0_56, %c0_57] : memref<9x36x128xf32, #tpu.memory_space<vmem>>, vector<1x36x128xf32>
    %62 = vector.shape_cast %61 : vector<1x36x128xf32> to vector<36x128xf32>
    %cst_58 = arith.constant dense<0.000000e+00> : vector<128x128xf32>
    %63 = tpu.matmul %60, %62, %cst_58 {dimension_numbers = #tpu.dot_dimension_numbers<[1], [0], [0], [1], [0, 0, 1, 1], [], []>} : vector<128x36xf32>, vector<36x128xf32>, vector<128x128xf32> -> vector<128x128xf32>
    %64 = arith.addf %57, %63 : vector<128x128xf32>
    %c0_59 = arith.constant 0 : index
    %c2_60 = arith.constant 2 : index
    %c2_61 = arith.constant 2 : index
    %c0_62 = arith.constant 0 : index
    %65 = vector.load %arg1[%c0_59, %c2_60, %c2_61, %c0_62] : memref<1x18x18x36xf32, #tpu.memory_space<vmem>>, vector<1x8x16x36xf32>
    %66 = vector.shape_cast %65 : vector<1x8x16x36xf32> to vector<8x16x36xf32>
    %67 = vector.shape_cast %66 : vector<8x16x36xf32> to vector<128x36xf32>
    %c8 = arith.constant 8 : index
    %c0_63 = arith.constant 0 : index
    %c0_64 = arith.constant 0 : index
    %68 = vector.load %arg3[%c8, %c0_63, %c0_64] : memref<9x36x128xf32, #tpu.memory_space<vmem>>, vector<1x36x128xf32>
    %69 = vector.shape_cast %68 : vector<1x36x128xf32> to vector<36x128xf32>
    %cst_65 = arith.constant dense<0.000000e+00> : vector<128x128xf32>
    %70 = tpu.matmul %67, %69, %cst_65 {dimension_numbers = #tpu.dot_dimension_numbers<[1], [0], [0], [1], [0, 0, 1, 1], [], []>} : vector<128x36xf32>, vector<36x128xf32>, vector<128x128xf32> -> vector<128x128xf32>
    %71 = arith.addf %64, %70 : vector<128x128xf32>
    %72 = vector.broadcast %5 : vector<1x128xf32> to vector<128x128xf32>
    %73 = arith.mulf %71, %72 : vector<128x128xf32>
    %cst_66 = arith.constant 0.000000e+00 : f32
    %74 = vector.broadcast %cst_66 : f32 to vector<128x128xf32>
    %75 = arith.subf %74, %73 : vector<128x128xf32>
    %76 = math.exp %75 : vector<128x128xf32>
    %cst_67 = arith.constant 1.000000e+00 : f32
    %77 = vector.broadcast %cst_67 : f32 to vector<128x128xf32>
    %78 = arith.addf %77, %76 : vector<128x128xf32>
    %cst_68 = arith.constant 1.000000e+00 : f32
    %79 = vector.broadcast %cst_68 : f32 to vector<128x128xf32>
    %80 = arith.divf %79, %78 : vector<128x128xf32>
    %81 = vector.extract_strided_slice %80 {offsets = [0, 0], sizes = [128, 32], strides = [1, 1]} : vector<128x128xf32> to vector<128x32xf32>
    %82 = vector.extract_strided_slice %80 {offsets = [0, 32], sizes = [128, 32], strides = [1, 1]} : vector<128x128xf32> to vector<128x32xf32>
    %83 = vector.extract_strided_slice %80 {offsets = [0, 64], sizes = [128, 32], strides = [1, 1]} : vector<128x128xf32> to vector<128x32xf32>
    %84 = vector.extract_strided_slice %80 {offsets = [0, 96], sizes = [128, 32], strides = [1, 1]} : vector<128x128xf32> to vector<128x32xf32>
    %cst_69 = arith.constant 2.000000e+00 : f32
    %85 = vector.broadcast %cst_69 : f32 to vector<128x32xf32>
    %86 = arith.mulf %85, %84 : vector<128x32xf32>
    %cst_70 = arith.constant 1.000000e+00 : f32
    %87 = vector.broadcast %cst_70 : f32 to vector<128x32xf32>
    %88 = arith.subf %86, %87 : vector<128x32xf32>
    %c0_71 = arith.constant 0 : index
    %c0_72 = arith.constant 0 : index
    %c0_73 = arith.constant 0 : index
    %c0_74 = arith.constant 0 : index
    %89 = vector.load %arg2[%c0_71, %c0_72, %c0_73, %c0_74] : memref<1x16x16x32xf32, #tpu.memory_space<vmem>>, vector<1x8x16x32xf32>
    %90 = vector.shape_cast %89 : vector<1x8x16x32xf32> to vector<8x16x32xf32>
    %91 = vector.shape_cast %90 : vector<8x16x32xf32> to vector<128x32xf32>
    %92 = arith.mulf %82, %91 : vector<128x32xf32>
    %93 = arith.mulf %81, %88 : vector<128x32xf32>
    %94 = arith.addf %92, %93 : vector<128x32xf32>
    %95 = math.tanh %94 : vector<128x32xf32>
    %96 = arith.mulf %83, %95 : vector<128x32xf32>
    %97 = vector.shape_cast %96 : vector<128x32xf32> to vector<8x16x32xf32>
    %c0_75 = arith.constant 0 : index
    %c0_76 = arith.constant 0 : index
    %c0_77 = arith.constant 0 : index
    %c0_78 = arith.constant 0 : index
    %98 = vector.load %arg5[%c0_75, %c0_76, %c0_77, %c0_78] : memref<1x16x16x32xf32, #tpu.memory_space<vmem>>, vector<1x8x16x32xf32>
    %99 = vector.shape_cast %98 : vector<1x8x16x32xf32> to vector<8x16x32xf32>
    %100 = vector.shape_cast %97 : vector<8x16x32xf32> to vector<1x8x16x32xf32>
    tpu.vector_store %arg5[%c0_75, %c0_76, %c0_77, %c0_78], %100 {strides = array<i32>} : memref<1x16x16x32xf32, #tpu.memory_space<vmem>>, vector<1x8x16x32xf32>,
    %101 = vector.shape_cast %94 : vector<128x32xf32> to vector<8x16x32xf32>
    %c0_79 = arith.constant 0 : index
    %c0_80 = arith.constant 0 : index
    %c0_81 = arith.constant 0 : index
    %c0_82 = arith.constant 0 : index
    %102 = vector.load %arg6[%c0_79, %c0_80, %c0_81, %c0_82] : memref<1x16x16x32xf32, #tpu.memory_space<vmem>>, vector<1x8x16x32xf32>
    %103 = vector.shape_cast %102 : vector<1x8x16x32xf32> to vector<8x16x32xf32>
    %104 = vector.shape_cast %101 : vector<8x16x32xf32> to vector<1x8x16x32xf32>
    tpu.vector_store %arg6[%c0_79, %c0_80, %c0_81, %c0_82], %104 {strides = array<i32>} : memref<1x16x16x32xf32, #tpu.memory_space<vmem>>, vector<1x8x16x32xf32>,
    %c0_83 = arith.constant 0 : index
    %c0_84 = arith.constant 0 : index
    %105 = vector.load %arg4[%c0_83, %c0_84] : memref<1x128xf32, #tpu.memory_space<vmem>>, vector<1x128xf32>
    %106 = vector.shape_cast %105 : vector<1x128xf32> to vector<1x128xf32>
    %107 = vector.broadcast %106 : vector<1x128xf32> to vector<128x128xf32>
    %c0_85 = arith.constant 0 : index
    %c8_86 = arith.constant 8 : index
    %c0_87 = arith.constant 0 : index
    %c0_88 = arith.constant 0 : index
    %108 = vector.load %arg1[%c0_85, %c8_86, %c0_87, %c0_88] : memref<1x18x18x36xf32, #tpu.memory_space<vmem>>, vector<1x8x16x36xf32>
    %109 = vector.shape_cast %108 : vector<1x8x16x36xf32> to vector<8x16x36xf32>
    %110 = vector.shape_cast %109 : vector<8x16x36xf32> to vector<128x36xf32>
    %c0_89 = arith.constant 0 : index
    %c0_90 = arith.constant 0 : index
    %c0_91 = arith.constant 0 : index
    %111 = vector.load %arg3[%c0_89, %c0_90, %c0_91] : memref<9x36x128xf32, #tpu.memory_space<vmem>>, vector<1x36x128xf32>
    %112 = vector.shape_cast %111 : vector<1x36x128xf32> to vector<36x128xf32>
    %cst_92 = arith.constant dense<0.000000e+00> : vector<128x128xf32>
    %113 = tpu.matmul %110, %112, %cst_92 {dimension_numbers = #tpu.dot_dimension_numbers<[1], [0], [0], [1], [0, 0, 1, 1], [], []>} : vector<128x36xf32>, vector<36x128xf32>, vector<128x128xf32> -> vector<128x128xf32>
    %114 = arith.addf %107, %113 : vector<128x128xf32>
    %c0_93 = arith.constant 0 : index
    %c8_94 = arith.constant 8 : index
    %c1_95 = arith.constant 1 : index
    %c0_96 = arith.constant 0 : index
    %115 = vector.load %arg1[%c0_93, %c8_94, %c1_95, %c0_96] : memref<1x18x18x36xf32, #tpu.memory_space<vmem>>, vector<1x8x16x36xf32>
    %116 = vector.shape_cast %115 : vector<1x8x16x36xf32> to vector<8x16x36xf32>
    %117 = vector.shape_cast %116 : vector<8x16x36xf32> to vector<128x36xf32>
    %c1_97 = arith.constant 1 : index
    %c0_98 = arith.constant 0 : index
    %c0_99 = arith.constant 0 : index
    %118 = vector.load %arg3[%c1_97, %c0_98, %c0_99] : memref<9x36x128xf32, #tpu.memory_space<vmem>>, vector<1x36x128xf32>
    %119 = vector.shape_cast %118 : vector<1x36x128xf32> to vector<36x128xf32>
    %cst_100 = arith.constant dense<0.000000e+00> : vector<128x128xf32>
    %120 = tpu.matmul %117, %119, %cst_100 {dimension_numbers = #tpu.dot_dimension_numbers<[1], [0], [0], [1], [0, 0, 1, 1], [], []>} : vector<128x36xf32>, vector<36x128xf32>, vector<128x128xf32> -> vector<128x128xf32>
    %121 = arith.addf %114, %120 : vector<128x128xf32>
    %c0_101 = arith.constant 0 : index
    %c8_102 = arith.constant 8 : index
    %c2_103 = arith.constant 2 : index
    %c0_104 = arith.constant 0 : index
    %122 = vector.load %arg1[%c0_101, %c8_102, %c2_103, %c0_104] : memref<1x18x18x36xf32, #tpu.memory_space<vmem>>, vector<1x8x16x36xf32>
    %123 = vector.shape_cast %122 : vector<1x8x16x36xf32> to vector<8x16x36xf32>
    %124 = vector.shape_cast %123 : vector<8x16x36xf32> to vector<128x36xf32>
    %c2_105 = arith.constant 2 : index
    %c0_106 = arith.constant 0 : index
    %c0_107 = arith.constant 0 : index
    %125 = vector.load %arg3[%c2_105, %c0_106, %c0_107] : memref<9x36x128xf32, #tpu.memory_space<vmem>>, vector<1x36x128xf32>
    %126 = vector.shape_cast %125 : vector<1x36x128xf32> to vector<36x128xf32>
    %cst_108 = arith.constant dense<0.000000e+00> : vector<128x128xf32>
    %127 = tpu.matmul %124, %126, %cst_108 {dimension_numbers = #tpu.dot_dimension_numbers<[1], [0], [0], [1], [0, 0, 1, 1], [], []>} : vector<128x36xf32>, vector<36x128xf32>, vector<128x128xf32> -> vector<128x128xf32>
    %128 = arith.addf %121, %127 : vector<128x128xf32>
    %c0_109 = arith.constant 0 : index
    %c9 = arith.constant 9 : index
    %c0_110 = arith.constant 0 : index
    %c0_111 = arith.constant 0 : index
    %129 = vector.load %arg1[%c0_109, %c9, %c0_110, %c0_111] : memref<1x18x18x36xf32, #tpu.memory_space<vmem>>, vector<1x8x16x36xf32>
    %130 = vector.shape_cast %129 : vector<1x8x16x36xf32> to vector<8x16x36xf32>
    %131 = vector.shape_cast %130 : vector<8x16x36xf32> to vector<128x36xf32>
    %c3_112 = arith.constant 3 : index
    %c0_113 = arith.constant 0 : index
    %c0_114 = arith.constant 0 : index
    %132 = vector.load %arg3[%c3_112, %c0_113, %c0_114] : memref<9x36x128xf32, #tpu.memory_space<vmem>>, vector<1x36x128xf32>
    %133 = vector.shape_cast %132 : vector<1x36x128xf32> to vector<36x128xf32>
    %cst_115 = arith.constant dense<0.000000e+00> : vector<128x128xf32>
    %134 = tpu.matmul %131, %133, %cst_115 {dimension_numbers = #tpu.dot_dimension_numbers<[1], [0], [0], [1], [0, 0, 1, 1], [], []>} : vector<128x36xf32>, vector<36x128xf32>, vector<128x128xf32> -> vector<128x128xf32>
    %135 = arith.addf %128, %134 : vector<128x128xf32>
    %c0_116 = arith.constant 0 : index
    %c9_117 = arith.constant 9 : index
    %c1_118 = arith.constant 1 : index
    %c0_119 = arith.constant 0 : index
    %136 = vector.load %arg1[%c0_116, %c9_117, %c1_118, %c0_119] : memref<1x18x18x36xf32, #tpu.memory_space<vmem>>, vector<1x8x16x36xf32>
    %137 = vector.shape_cast %136 : vector<1x8x16x36xf32> to vector<8x16x36xf32>
    %138 = vector.shape_cast %137 : vector<8x16x36xf32> to vector<128x36xf32>
    %c4_120 = arith.constant 4 : index
    %c0_121 = arith.constant 0 : index
    %c0_122 = arith.constant 0 : index
    %139 = vector.load %arg3[%c4_120, %c0_121, %c0_122] : memref<9x36x128xf32, #tpu.memory_space<vmem>>, vector<1x36x128xf32>
    %140 = vector.shape_cast %139 : vector<1x36x128xf32> to vector<36x128xf32>
    %cst_123 = arith.constant dense<0.000000e+00> : vector<128x128xf32>
    %141 = tpu.matmul %138, %140, %cst_123 {dimension_numbers = #tpu.dot_dimension_numbers<[1], [0], [0], [1], [0, 0, 1, 1], [], []>} : vector<128x36xf32>, vector<36x128xf32>, vector<128x128xf32> -> vector<128x128xf32>
    %142 = arith.addf %135, %141 : vector<128x128xf32>
    %c0_124 = arith.constant 0 : index
    %c9_125 = arith.constant 9 : index
    %c2_126 = arith.constant 2 : index
    %c0_127 = arith.constant 0 : index
    %143 = vector.load %arg1[%c0_124, %c9_125, %c2_126, %c0_127] : memref<1x18x18x36xf32, #tpu.memory_space<vmem>>, vector<1x8x16x36xf32>
    %144 = vector.shape_cast %143 : vector<1x8x16x36xf32> to vector<8x16x36xf32>
    %145 = vector.shape_cast %144 : vector<8x16x36xf32> to vector<128x36xf32>
    %c5_128 = arith.constant 5 : index
    %c0_129 = arith.constant 0 : index
    %c0_130 = arith.constant 0 : index
    %146 = vector.load %arg3[%c5_128, %c0_129, %c0_130] : memref<9x36x128xf32, #tpu.memory_space<vmem>>, vector<1x36x128xf32>
    %147 = vector.shape_cast %146 : vector<1x36x128xf32> to vector<36x128xf32>
    %cst_131 = arith.constant dense<0.000000e+00> : vector<128x128xf32>
    %148 = tpu.matmul %145, %147, %cst_131 {dimension_numbers = #tpu.dot_dimension_numbers<[1], [0], [0], [1], [0, 0, 1, 1], [], []>} : vector<128x36xf32>, vector<36x128xf32>, vector<128x128xf32> -> vector<128x128xf32>
    %149 = arith.addf %142, %148 : vector<128x128xf32>
    %c0_132 = arith.constant 0 : index
    %c10 = arith.constant 10 : index
    %c0_133 = arith.constant 0 : index
    %c0_134 = arith.constant 0 : index
    %150 = vector.load %arg1[%c0_132, %c10, %c0_133, %c0_134] : memref<1x18x18x36xf32, #tpu.memory_space<vmem>>, vector<1x8x16x36xf32>
    %151 = vector.shape_cast %150 : vector<1x8x16x36xf32> to vector<8x16x36xf32>
    %152 = vector.shape_cast %151 : vector<8x16x36xf32> to vector<128x36xf32>
    %c6_135 = arith.constant 6 : index
    %c0_136 = arith.constant 0 : index
    %c0_137 = arith.constant 0 : index
    %153 = vector.load %arg3[%c6_135, %c0_136, %c0_137] : memref<9x36x128xf32, #tpu.memory_space<vmem>>, vector<1x36x128xf32>
    %154 = vector.shape_cast %153 : vector<1x36x128xf32> to vector<36x128xf32>
    %cst_138 = arith.constant dense<0.000000e+00> : vector<128x128xf32>
    %155 = tpu.matmul %152, %154, %cst_138 {dimension_numbers = #tpu.dot_dimension_numbers<[1], [0], [0], [1], [0, 0, 1, 1], [], []>} : vector<128x36xf32>, vector<36x128xf32>, vector<128x128xf32> -> vector<128x128xf32>
    %156 = arith.addf %149, %155 : vector<128x128xf32>
    %c0_139 = arith.constant 0 : index
    %c10_140 = arith.constant 10 : index
    %c1_141 = arith.constant 1 : index
    %c0_142 = arith.constant 0 : index
    %157 = vector.load %arg1[%c0_139, %c10_140, %c1_141, %c0_142] : memref<1x18x18x36xf32, #tpu.memory_space<vmem>>, vector<1x8x16x36xf32>
    %158 = vector.shape_cast %157 : vector<1x8x16x36xf32> to vector<8x16x36xf32>
    %159 = vector.shape_cast %158 : vector<8x16x36xf32> to vector<128x36xf32>
    %c7_143 = arith.constant 7 : index
    %c0_144 = arith.constant 0 : index
    %c0_145 = arith.constant 0 : index
    %160 = vector.load %arg3[%c7_143, %c0_144, %c0_145] : memref<9x36x128xf32, #tpu.memory_space<vmem>>, vector<1x36x128xf32>
    %161 = vector.shape_cast %160 : vector<1x36x128xf32> to vector<36x128xf32>
    %cst_146 = arith.constant dense<0.000000e+00> : vector<128x128xf32>
    %162 = tpu.matmul %159, %161, %cst_146 {dimension_numbers = #tpu.dot_dimension_numbers<[1], [0], [0], [1], [0, 0, 1, 1], [], []>} : vector<128x36xf32>, vector<36x128xf32>, vector<128x128xf32> -> vector<128x128xf32>
    %163 = arith.addf %156, %162 : vector<128x128xf32>
    %c0_147 = arith.constant 0 : index
    %c10_148 = arith.constant 10 : index
    %c2_149 = arith.constant 2 : index
    %c0_150 = arith.constant 0 : index
    %164 = vector.load %arg1[%c0_147, %c10_148, %c2_149, %c0_150] : memref<1x18x18x36xf32, #tpu.memory_space<vmem>>, vector<1x8x16x36xf32>
    %165 = vector.shape_cast %164 : vector<1x8x16x36xf32> to vector<8x16x36xf32>
    %166 = vector.shape_cast %165 : vector<8x16x36xf32> to vector<128x36xf32>
    %c8_151 = arith.constant 8 : index
    %c0_152 = arith.constant 0 : index
    %c0_153 = arith.constant 0 : index
    %167 = vector.load %arg3[%c8_151, %c0_152, %c0_153] : memref<9x36x128xf32, #tpu.memory_space<vmem>>, vector<1x36x128xf32>
    %168 = vector.shape_cast %167 : vector<1x36x128xf32> to vector<36x128xf32>
    %cst_154 = arith.constant dense<0.000000e+00> : vector<128x128xf32>
    %169 = tpu.matmul %166, %168, %cst_154 {dimension_numbers = #tpu.dot_dimension_numbers<[1], [0], [0], [1], [0, 0, 1, 1], [], []>} : vector<128x36xf32>, vector<36x128xf32>, vector<128x128xf32> -> vector<128x128xf32>
    %170 = arith.addf %163, %169 : vector<128x128xf32>
    %171 = vector.broadcast %5 : vector<1x128xf32> to vector<128x128xf32>
    %172 = arith.mulf %170, %171 : vector<128x128xf32>
    %cst_155 = arith.constant 0.000000e+00 : f32
    %173 = vector.broadcast %cst_155 : f32 to vector<128x128xf32>
    %174 = arith.subf %173, %172 : vector<128x128xf32>
    %175 = math.exp %174 : vector<128x128xf32>
    %cst_156 = arith.constant 1.000000e+00 : f32
    %176 = vector.broadcast %cst_156 : f32 to vector<128x128xf32>
    %177 = arith.addf %176, %175 : vector<128x128xf32>
    %cst_157 = arith.constant 1.000000e+00 : f32
    %178 = vector.broadcast %cst_157 : f32 to vector<128x128xf32>
    %179 = arith.divf %178, %177 : vector<128x128xf32>
    %180 = vector.extract_strided_slice %179 {offsets = [0, 0], sizes = [128, 32], strides = [1, 1]} : vector<128x128xf32> to vector<128x32xf32>
    %181 = vector.extract_strided_slice %179 {offsets = [0, 32], sizes = [128, 32], strides = [1, 1]} : vector<128x128xf32> to vector<128x32xf32>
    %182 = vector.extract_strided_slice %179 {offsets = [0, 64], sizes = [128, 32], strides = [1, 1]} : vector<128x128xf32> to vector<128x32xf32>
    %183 = vector.extract_strided_slice %179 {offsets = [0, 96], sizes = [128, 32], strides = [1, 1]} : vector<128x128xf32> to vector<128x32xf32>
    %cst_158 = arith.constant 2.000000e+00 : f32
    %184 = vector.broadcast %cst_158 : f32 to vector<128x32xf32>
    %185 = arith.mulf %184, %183 : vector<128x32xf32>
    %cst_159 = arith.constant 1.000000e+00 : f32
    %186 = vector.broadcast %cst_159 : f32 to vector<128x32xf32>
    %187 = arith.subf %185, %186 : vector<128x32xf32>
    %c0_160 = arith.constant 0 : index
    %c8_161 = arith.constant 8 : index
    %c0_162 = arith.constant 0 : index
    %c0_163 = arith.constant 0 : index
    %188 = vector.load %arg2[%c0_160, %c8_161, %c0_162, %c0_163] : memref<1x16x16x32xf32, #tpu.memory_space<vmem>>, vector<1x8x16x32xf32>
    %189 = vector.shape_cast %188 : vector<1x8x16x32xf32> to vector<8x16x32xf32>
    %190 = vector.shape_cast %189 : vector<8x16x32xf32> to vector<128x32xf32>
    %191 = arith.mulf %181, %190 : vector<128x32xf32>
    %192 = arith.mulf %180, %187 : vector<128x32xf32>
    %193 = arith.addf %191, %192 : vector<128x32xf32>
    %194 = math.tanh %193 : vector<128x32xf32>
    %195 = arith.mulf %182, %194 : vector<128x32xf32>
    %196 = vector.shape_cast %195 : vector<128x32xf32> to vector<8x16x32xf32>
    %c0_164 = arith.constant 0 : index
    %c8_165 = arith.constant 8 : index
    %c0_166 = arith.constant 0 : index
    %c0_167 = arith.constant 0 : index
    %197 = vector.load %arg5[%c0_164, %c8_165, %c0_166, %c0_167] : memref<1x16x16x32xf32, #tpu.memory_space<vmem>>, vector<1x8x16x32xf32>
    %198 = vector.shape_cast %197 : vector<1x8x16x32xf32> to vector<8x16x32xf32>
    %199 = vector.shape_cast %196 : vector<8x16x32xf32> to vector<1x8x16x32xf32>
    tpu.vector_store %arg5[%c0_164, %c8_165, %c0_166, %c0_167], %199 {strides = array<i32>} : memref<1x16x16x32xf32, #tpu.memory_space<vmem>>, vector<1x8x16x32xf32>,
    %200 = vector.shape_cast %193 : vector<128x32xf32> to vector<8x16x32xf32>
    %c0_168 = arith.constant 0 : index
    %c8_169 = arith.constant 8 : index
    %c0_170 = arith.constant 0 : index
    %c0_171 = arith.constant 0 : index
    %201 = vector.load %arg6[%c0_168, %c8_169, %c0_170, %c0_171] : memref<1x16x16x32xf32, #tpu.memory_space<vmem>>, vector<1x8x16x32xf32>
    %202 = vector.shape_cast %201 : vector<1x8x16x32xf32> to vector<8x16x32xf32>
    %203 = vector.shape_cast %200 : vector<8x16x32xf32> to vector<1x8x16x32xf32>
    tpu.vector_store %arg6[%c0_168, %c8_169, %c0_170, %c0_171], %203 {strides = array<i32>} : memref<1x16x16x32xf32, #tpu.memory_space<vmem>>, vector<1x8x16x32xf32>,
    return
  }
  func.func @transform_0(%arg0: i32) -> (i32, i32, i32, i32) {
    %c0_i32 = arith.constant 0 : i32
    %c0_i32_0 = arith.constant 0 : i32
    %c0_i32_1 = arith.constant 0 : i32
    %c0_i32_2 = arith.constant 0 : i32
    return %arg0, %c0_i32, %c0_i32_0, %c0_i32_1 : i32, i32, i32, i32
  }
  func.func @transform_1(%arg0: i32) -> (i32, i32, i32, i32) {
    %c0_i32 = arith.constant 0 : i32
    %c0_i32_0 = arith.constant 0 : i32
    %c0_i32_1 = arith.constant 0 : i32
    %c0_i32_2 = arith.constant 0 : i32
    return %arg0, %c0_i32, %c0_i32_0, %c0_i32_1 : i32, i32, i32, i32
  }
  func.func @transform_2(%arg0: i32) -> (i32, i32, i32) {
    %c0_i32 = arith.constant 0 : i32
    %c0_i32_0 = arith.constant 0 : i32
    %c0_i32_1 = arith.constant 0 : i32
    %c0_i32_2 = arith.constant 0 : i32
    return %c0_i32, %c0_i32_0, %c0_i32_1 : i32, i32, i32
  }
  func.func @transform_3(%arg0: i32) -> (i32, i32) {
    %c0_i32 = arith.constant 0 : i32
    %c0_i32_0 = arith.constant 0 : i32
    %c0_i32_1 = arith.constant 0 : i32
    return %c0_i32, %c0_i32_0 : i32, i32
  }
  func.func @transform_4(%arg0: i32) -> (i32, i32, i32, i32) {
    %c0_i32 = arith.constant 0 : i32
    %c0_i32_0 = arith.constant 0 : i32
    %c0_i32_1 = arith.constant 0 : i32
    %c0_i32_2 = arith.constant 0 : i32
    return %arg0, %c0_i32, %c0_i32_0, %c0_i32_1 : i32, i32, i32, i32
  }
  func.func @transform_5(%arg0: i32) -> (i32, i32, i32, i32) {
    %c0_i32 = arith.constant 0 : i32
    %c0_i32_0 = arith.constant 0 : i32
    %c0_i32_1 = arith.constant 0 : i32
    %c0_i32_2 = arith.constant 0 : i32
    return %arg0, %c0_i32, %c0_i32_0, %c0_i32_1 : i32, i32, i32, i32
  }
}

</mosaic_0001>

<llo_original>
// kernel: convlstm_cell_forward.1
$region0: #{convlstm_cell_forward.1}
  #allocation0 [shape = 'u32[]', space=smem, size = 0x4, offset = 0x4, fixed_abs, tag = 'smem constant byte address 0x4 - core index']
  #allocation1 [shape = 'u32[72,128]{1,0:T(1,128)}', space=vmem, size = 0x9000, scoped, tag = 'internal scratch']
  %s0 = inlined_call_operand.vmem [shape: f32[2,18,18,36], index: 0, kind: input, shape index: {}]
  %s1 = inlined_call_operand.vmem [shape: f32[2,16,16,32], index: 1, kind: input, shape index: {}]
  %s2 = inlined_call_operand.vmem [shape: f32[9,36,128], index: 2, kind: input, shape index: {}]
  %s3 = inlined_call_operand.vmem [shape: f32[1,128], index: 3, kind: input, shape index: {}]
  %s4 = inlined_call_operand.hbm [shape: f32[2,16,16,32], index: 4, kind: output, shape index: {0}]
  %s5 = inlined_call_operand.hbm [shape: f32[2,16,16,32], index: 5, kind: output, shape index: {1}]
  %6 = xla_tuple %s4, %s5
  %s7 = sld [smem:[#allocation0]]
  $region57: #{convlstm_cell_forward.1} parent=0
    _
  %s9 = ssub.s32 1, %s7
  %s10 = scalar_select 0, %s9, %s7
  $region1: #{convlstm_cell_forward.1} parent=0
    #allocation2 [shape = 'u8[262144]{0}', space=vmem, size = 0x40000, scoped, tag = 'output window, operand 0']
    #allocation3 [shape = 's32[2]{0}', space=sflag, size = 0x8, scoped, tag = 'scoped memory for convlstm_cell_forward.1']
    #allocation4 [shape = 'u8[262144]{0}', space=vmem, size = 0x40000, scoped, tag = 'output window, operand 1']
    #allocation5 [shape = 's32[2]{0}', space=sflag, size = 0x8, scoped, tag = 'scoped memory for convlstm_cell_forward.1']
    %11 = vsyncpa [#allocation3], 0
    %s12 = scalar_lea.sflag [#allocation3], 1
    %13 = vsyncpa %s12, 0
    %14 = vsyncpa [#allocation5], 0
    %s15 = scalar_lea.sflag [#allocation5], 1
    %16 = vsyncpa %s15, 0
    loop: start=0, step=1, limit=4
    $region2: #{convlstm_cell_forward.1} parent=1 // loop_pre_header
      _
    $region3: #{convlstm_cell_forward.1} parent=1 // loop_header
      %s18 = sphi 0, %s22
      %p19 = scmp.ge.s32.totalorder %s18, 4
      %s28 = sphi 0, %s30
      %s31 = sphi 0, %s28
      %s32 = sphi 0, %s31
      %s48 = sphi 0, %s32
      %s54 = sphi 0, %s56
      %s57 = sphi 0, %s54
      %s58 = sphi 0, %s57
      %s74 = sphi 0, %s58
      %s78 = sphi 0, %s78
      %s80 = sphi 0, %s78
      %s81 = sphi 0, %s80
      %s95 = sphi 0, %s81
      %s99 = sphi 0, %s99
      %s101 = sphi 0, %s99
      %s102 = sphi 0, %s101
      %s116 = sphi 0, %s102
      %s122 = sphi 0, %s124
      %s125 = sphi 0, %s122
      %s126 = sphi 0, %s125
      %s142 = sphi 0, %s126
      %s148 = sphi 0, %s150
      %s151 = sphi 0, %s148
      %s152 = sphi 0, %s151
      %s168 = sphi 0, %s152
    $region4: #{convlstm_cell_forward.1} parent=1 // loop_header_branch
      %21 = sbr.rel (%p19) target = $region8
    $region5: #{convlstm_cell_forward.1} parent=1 // loop_body
      %s23 = ssub.s32 %s18, 1
      %s24 = ssub.s32 %s18, 2
      %s25 = sadd.s32 %s18, 1
      %s26 = ssub.s32 %s18, %s25
      %p27 = scmp.eq.s32.totalorder %s26, 0
      %s29 = sadd.s32 %s28, 1
      %s30 = scalar_select %p27, %s28, %s29
      %p33 = pneg %p27
      %p34 = scmp.eq.s32.totalorder %s18, 1
      %p35 = por %p33, %p34
      %p36 = scmp.ne.s32.totalorder %s28, %s31
      %p37 = scmp.eq.s32.totalorder %s18, 0
      %p38 = por %p36, %p37
      %p39 = scmp.ne.s32.totalorder %s28, %s31
      %p40 = scmp.eq.s32.totalorder %s23, 1
      %p41 = por %p39, %p40
      %p42 = scmp.ne.s32.totalorder %s31, %s32
      %p43 = scmp.eq.s32.totalorder %s23, 0
      %p44 = por %p42, %p43
      %p45 = scmp.ne.s32.totalorder %s31, %s32
      %p46 = scmp.eq.s32.totalorder %s24, 1
      %p47 = por %p45, %p46
      %p49 = scmp.ne.s32.totalorder %s32, %s48
      %p50 = scmp.eq.s32.totalorder %s24, 0
      %p51 = por %p49, %p50
      %s52 = ssub.s32 %s18, %s25
      %p53 = scmp.eq.s32.totalorder %s52, 0
      %s55 = sadd.s32 %s54, 1
      %s56 = scalar_select %p53, %s54, %s55
      %p59 = pneg %p53
      %p60 = scmp.eq.s32.totalorder %s18, 1
      %p61 = por %p59, %p60
      %p62 = scmp.ne.s32.totalorder %s54, %s57
      %p63 = scmp.eq.s32.totalorder %s18, 0
      %p64 = por %p62, %p63
      %p65 = scmp.ne.s32.totalorder %s54, %s57
      %p66 = scmp.eq.s32.totalorder %s23, 1
      %p67 = por %p65, %p66
      %p68 = scmp.ne.s32.totalorder %s57, %s58
      %p69 = scmp.eq.s32.totalorder %s23, 0
      %p70 = por %p68, %p69
      %p71 = scmp.ne.s32.totalorder %s57, %s58
      %p72 = scmp.eq.s32.totalorder %s24, 1
      %p73 = por %p71, %p72
      %p75 = scmp.ne.s32.totalorder %s58, %s74
      %p76 = scmp.eq.s32.totalorder %s24, 0
      %p77 = por %p75, %p76
      %s79 = sadd.s32 %s78, 1
      %p82 = scmp.eq.s32.totalorder %s18, 1
      %p83 = scmp.ne.s32.totalorder %s78, %s80
      %p84 = scmp.eq.s32.totalorder %s18, 0
      %p85 = por %p83, %p84
      %p86 = scmp.ne.s32.totalorder %s78, %s80
      %p87 = scmp.eq.s32.totalorder %s23, 1
      %p88 = por %p86, %p87
      %p89 = scmp.ne.s32.totalorder %s80, %s81
      %p90 = scmp.eq.s32.totalorder %s23, 0
      %p91 = por %p89, %p90
      %p92 = scmp.ne.s32.totalorder %s80, %s81
      %p93 = scmp.eq.s32.totalorder %s24, 1
      %p94 = por %p92, %p93
      %p96 = scmp.ne.s32.totalorder %s81, %s95
      %p97 = scmp.eq.s32.totalorder %s24, 0
      %p98 = por %p96, %p97
      %s100 = sadd.s32 %s99, 1
      %p103 = scmp.eq.s32.totalorder %s18, 1
      %p104 = scmp.ne.s32.totalorder %s99, %s101
      %p105 = scmp.eq.s32.totalorder %s18, 0
      %p106 = por %p104, %p105
      %p107 = scmp.ne.s32.totalorder %s99, %s101
      %p108 = scmp.eq.s32.totalorder %s23, 1
      %p109 = por %p107, %p108
      %p110 = scmp.ne.s32.totalorder %s101, %s102
      %p111 = scmp.eq.s32.totalorder %s23, 0
      %p112 = por %p110, %p111
      %p113 = scmp.ne.s32.totalorder %s101, %s102
      %p114 = scmp.eq.s32.totalorder %s24, 1
      %p115 = por %p113, %p114
      %p117 = scmp.ne.s32.totalorder %s102, %s116
      %p118 = scmp.eq.s32.totalorder %s24, 0
      %p119 = por %p117, %p118
      %s120 = ssub.s32 %s18, %s25
      %p121 = scmp.eq.s32.totalorder %s120, 0
      %s123 = sadd.s32 %s122, 1
      %s124 = scalar_select %p121, %s122, %s123
      %p127 = pneg %p121
      %p128 = scmp.eq.s32.totalorder %s18, 1
      %p129 = por %p127, %p128
      %p130 = scmp.ne.s32.totalorder %s122, %s125
      %p131 = scmp.eq.s32.totalorder %s18, 0
      %p132 = por %p130, %p131
      %p133 = scmp.ne.s32.totalorder %s122, %s125
      %p134 = scmp.eq.s32.totalorder %s23, 1
      %p135 = por %p133, %p134
      %p136 = scmp.ne.s32.totalorder %s125, %s126
      %p137 = scmp.eq.s32.totalorder %s23, 0
      %p138 = por %p136, %p137
      %p139 = scmp.ne.s32.totalorder %s125, %s126
      %p140 = scmp.eq.s32.totalorder %s24, 1
      %p141 = por %p139, %p140
      %p143 = scmp.ne.s32.totalorder %s126, %s142
      %p144 = scmp.eq.s32.totalorder %s24, 0
      %p145 = por %p143, %p144
      %s146 = ssub.s32 %s18, %s25
      %p147 = scmp.eq.s32.totalorder %s146, 0
      %s149 = sadd.s32 %s148, 1
      %s150 = scalar_select %p147, %s148, %s149
      %p153 = pneg %p147
      %p154 = scmp.eq.s32.totalorder %s18, 1
      %p155 = por %p153, %p154
      %p156 = scmp.ne.s32.totalorder %s148, %s151
      %p157 = scmp.eq.s32.totalorder %s18, 0
      %p158 = por %p156, %p157
      %p159 = scmp.ne.s32.totalorder %s148, %s151
      %p160 = scmp.eq.s32.totalorder %s23, 1
      %p161 = por %p159, %p160
      %p162 = scmp.ne.s32.totalorder %s151, %s152
      %p163 = scmp.eq.s32.totalorder %s23, 0
      %p164 = por %p162, %p163
      %p165 = scmp.ne.s32.totalorder %s151, %s152
      %p166 = scmp.eq.s32.totalorder %s24, 1
      %p167 = por %p165, %p166
      %p169 = scmp.ne.s32.totalorder %s152, %s168
      %p170 = scmp.eq.s32.totalorder %s24, 0
      %p171 = por %p169, %p170
      %p172 = scmp.le.s32.totalorder 1, %s18
      %p173 = scmp.lt.s32.totalorder %s18, 3
      %p174 = pnand %p172, %p173
      %p175 = pneg %p174
      // Predicated region
      $region9: #{convlstm_cell_forward.1} parent=5 // pred_check
        _
      $region10: #{convlstm_cell_forward.1} parent=5 // pred_check_branch
        %177 = sbr.rel (%p174) target = $region12
      $region11: #{convlstm_cell_forward.1} parent=5 // pred_region
        %s178 = ssub.s32 %s18, 1
        // Predicated region
        $region13: #{convlstm_cell_forward.1} parent=11 // pred_check
          %p179 = pneg %p91
        $region14: #{convlstm_cell_forward.1} parent=11 // pred_check_branch
          %181 = sbr.rel (%p179) target = $region16
        $region15: #{convlstm_cell_forward.1} parent=11 // pred_region
          _
        $region16: #{convlstm_cell_forward.1} parent=11 // pred_fallthru
          _
        // Predicated region
        $region17: #{convlstm_cell_forward.1} parent=11 // pred_check
          %p182 = pneg %p112
        $region18: #{convlstm_cell_forward.1} parent=11 // pred_check_branch
          %184 = sbr.rel (%p182) target = $region20
        $region19: #{convlstm_cell_forward.1} parent=11 // pred_region
          _
        $region20: #{convlstm_cell_forward.1} parent=11 // pred_fallthru
          _
      $region12: #{convlstm_cell_forward.1} parent=5 // pred_fallthru
        _
      %p185 = scmp.lt.s32.totalorder %s18, 2
      // Predicated region
      $region21: #{convlstm_cell_forward.1} parent=5 // pred_check
        %p186 = pneg %p185
      $region22: #{convlstm_cell_forward.1} parent=5 // pred_check_branch
        %188 = sbr.rel (%p186) target = $region24
      $region23: #{convlstm_cell_forward.1} parent=5 // pred_region
        // Predicated region
        $region25: #{convlstm_cell_forward.1} parent=23 // pred_check
          %p189 = pneg %p38
        $region26: #{convlstm_cell_forward.1} parent=23 // pred_check_branch
          %191 = sbr.rel (%p189) target = $region28
        $region27: #{convlstm_cell_forward.1} parent=23 // pred_region
          %p192 = scmp.lt.s32.totalorder %s18, 1
          %s193 = scalar_select %p192, %s18, 1
          %s194 = smul.addr %s193, 54
          %s195 = smul.addr %s194, 8
          %s196 = scalar_lea.vmem %s0, %s195
        $region28: #{convlstm_cell_forward.1} parent=23 // pred_fallthru
          _
        // Predicated region
        $region29: #{convlstm_cell_forward.1} parent=23 // pred_check
          %p197 = pneg %p64
        $region30: #{convlstm_cell_forward.1} parent=23 // pred_check_branch
          %199 = sbr.rel (%p197) target = $region32
        $region31: #{convlstm_cell_forward.1} parent=23 // pred_region
          %p200 = scmp.lt.s32.totalorder %s18, 1
          %s201 = scalar_select %p200, %s18, 1
          %s202 = smul.addr %s201, 32
          %s203 = smul.addr %s202, 8
          %s204 = scalar_lea.vmem %s1, %s203
        $region32: #{convlstm_cell_forward.1} parent=23 // pred_fallthru
          _
      $region24: #{convlstm_cell_forward.1} parent=5 // pred_fallthru
        _
      %p205 = scmp.le.s32.totalorder 1, %s18
      %p206 = scmp.lt.s32.totalorder %s18, 3
      %p207 = pnand %p205, %p206
      %p208 = pneg %p207
      // Predicated region
      $region33: #{convlstm_cell_forward.1} parent=5 // pred_check
        _
      $region34: #{convlstm_cell_forward.1} parent=5 // pred_check_branch
        %210 = sbr.rel (%p207) target = $region36
      $region35: #{convlstm_cell_forward.1} parent=5 // pred_region
        %s211 = ssub.s32 %s18, 1
        %p212 = scmp.lt.s32.totalorder %s23, 1
        %s213 = scalar_select %p212, %s23, 1
        %s214 = smul.addr %s213, 54
        %s215 = smul.addr %s214, 8
        %s216 = scalar_lea.vmem %s0, %s215
        %p217 = pneg %p44
        %p218 = pneg %p41
        %p219 = scmp.lt.s32.totalorder %s23, 1
        %s220 = scalar_select %p219, %s23, 1
        %s221 = smul.addr %s220, 32
        %s222 = smul.addr %s221, 8
        %s223 = scalar_lea.vmem %s1, %s222
        %p224 = pneg %p70
        %p225 = pneg %p67
        %p226 = pneg %p91
        %p227 = pneg %p88
        %p228 = pneg %p112
        %p229 = pneg %p109
        %p230 = pneg %p138
        %p231 = pneg %p135
        %s232 = sand.u32 %s125, 1
        %s233 = scalar_lea.sflag [#allocation3], %s232
        %s234 = sand.u32 %s125, 1
        %s235 = smul.addr %s234, 256
        %s236 = scalar_lea.vmem [#allocation2], %s235
        %p237 = pneg %p164
        %p238 = pneg %p161
        %s239 = sand.u32 %s151, 1
        %s240 = scalar_lea.sflag [#allocation5], %s239
        %s241 = sand.u32 %s151, 1
        %s242 = smul.addr %s241, 256
        %s243 = scalar_lea.vmem [#allocation4], %s242
        %p244 = scmp.lt.s32.totalorder %s23, 1
        %s245 = scalar_select %p244, %s23, 1
        %s246 = smul.addr %s245, 54
        %s247 = smul.addr %s246, 8
        %s248 = scalar_lea.vmem %s0, %s247
        %p249 = scmp.lt.s32.totalorder %s23, 1
        %s250 = scalar_select %p249, %s23, 1
        %s251 = smul.addr %s250, 32
        %s252 = smul.addr %s251, 8
        %s253 = scalar_lea.vmem %s1, %s252
        %v254 = vlaneseq
        %v255 = vand.u32 %v254, 127
        %vm256 = vcmp.lt.s32.totalorder %v255, 96
        %v257 = vsel %vm256, 1.0, 2.0
        %v258 = vld [vmem:[%s3] sm:$0x1]
        %v260 = vperm.slane %v258, 0
        %v262 = vld [vmem:[%s248] sm:$0xff]
        %v263 = vld [vmem:[%s248 + $0x8] sm:$0xff]
        %v264 = vld [vmem:[%s248 + $0x18] sm:$0xff]
        %v265 = vld [vmem:[%s248 + $0x20] sm:$0xff]
        %v266 = vld [vmem:[%s248 + $0x30] sm:$0xff]
        %v267 = vld [vmem:[%s248 + $0x38] sm:$0xff]
        %v268 = vld [vmem:[%s248 + $0x48] sm:$0xff]
        %v269 = vld [vmem:[%s248 + $0x50] sm:$0xff]
        %v270 = vld [vmem:[%s248 + $0x60] sm:$0xff]
        %v271 = vld [vmem:[%s248 + $0x68] sm:$0xff]
        %v272 = vld [vmem:[%s248 + $0x78] sm:$0xff]
        %v273 = vld [vmem:[%s248 + $0x80] sm:$0xff]
        %v274 = vld [vmem:[%s248 + $0x90] sm:$0xff]
        %v275 = vld [vmem:[%s248 + $0x98] sm:$0xff]
        %v276 = vld [vmem:[%s248 + $0xa8] sm:$0xff]
        %v277 = vld [vmem:[%s248 + $0xb0] sm:$0xff]
        %v278 = vld [vmem:[%s2] sm:$0xff]
        %v279 = vld [vmem:[%s2 + $0x8] sm:$0xff]
        %v280 = vld [vmem:[%s2 + $0x10] sm:$0xff]
        %v281 = vld [vmem:[%s2 + $0x18] sm:$0xff]
        %v282 = vld [vmem:[%s2 + $0x20] sm:$0xf]
        %vm283 = vcmask 293888
        %v285 = vsel %vm283, %v262, 0
        %v288 = vsel %vm283, %v263, 0
        %v291 = vsel %vm283, %v264, 0
        %v294 = vsel %vm283, %v265, 0
        %v297 = vsel %vm283, %v266, 0
        %v300 = vsel %vm283, %v267, 0
        %v303 = vsel %vm283, %v268, 0
        %v306 = vsel %vm283, %v269, 0
        %v309 = vsel %vm283, %v270, 0
        %v312 = vsel %vm283, %v271, 0
        %v315 = vsel %vm283, %v272, 0
        %v318 = vsel %vm283, %v273, 0
        %v321 = vsel %vm283, %v274, 0
        %v324 = vsel %vm283, %v275, 0
        %v327 = vsel %vm283, %v276, 0
        %v330 = vsel %vm283, %v277, 0
        %vm332 = vcmask 1043456
        %v334 = vsel %vm332, %v282, 0
        %336 = vmatpush.msra.mxu0 0.0
        %337 = vmatpush.msra.mxu0 0.0
        %338 = vmatpush.msra.mxu0 0.0
        %339 = vmatpush.msra.mxu0 0.0
        %340 = vmatpush.msra.mxu0 0.0
        %341 = vmatpush.msra.mxu0 0.0
        %342 = vmatpush.msra.mxu0 0.0
        %343 = vmatpush.msra.mxu0 0.0
        %344 = vmatpush.msra.mxu0 0.0
        %345 = vmatpush.msra.mxu0 0.0
        %346 = vmatpush.msra.mxu0 0.0
        %347 = vmatpush.msra.mxu0 %v334
        %348 = vmatpush.msra.mxu0 %v281
        %349 = vmatpush.msra.mxu0 %v280
        %350 = vmatpush.msra.mxu0 %v279
        %351 = vmatpush.msra.mxu0 %v278
        %352 = vmatmul.f32.gmra.mxu0 %v285
        %v353 = vpop.f32.mrf.mxu0
        %v354 = vadd.f32 0.0, %v353
        %355 = vmatmul.f32.gmra.mxu0 %v288
        %v356 = vpop.f32.mrf.mxu0
        %v357 = vadd.f32 0.0, %v356
        %358 = vmatmul.f32.gmra.mxu0 %v291
        %v359 = vpop.f32.mrf.mxu0
        %v360 = vadd.f32 0.0, %v359
        %361 = vmatmul.f32.gmra.mxu0 %v294
        %v362 = vpop.f32.mrf.mxu0
        %v363 = vadd.f32 0.0, %v362
        %364 = vmatmul.f32.gmra.mxu0 %v297
        %v365 = vpop.f32.mrf.mxu0
        %v366 = vadd.f32 0.0, %v365
        %367 = vmatmul.f32.gmra.mxu0 %v300
        %v368 = vpop.f32.mrf.mxu0
        %v369 = vadd.f32 0.0, %v368
        %370 = vmatmul.f32.gmra.mxu0 %v303
        %v371 = vpop.f32.mrf.mxu0
        %v372 = vadd.f32 0.0, %v371
        %373 = vmatmul.f32.gmra.mxu0 %v306
        %v374 = vpop.f32.mrf.mxu0
        %v375 = vadd.f32 0.0, %v374
        %376 = vmatmul.f32.gmra.mxu0 %v309
        %v377 = vpop.f32.mrf.mxu0
        %v378 = vadd.f32 0.0, %v377
        %379 = vmatmul.f32.gmra.mxu0 %v312
        %v380 = vpop.f32.mrf.mxu0
        %v381 = vadd.f32 0.0, %v380
        %382 = vmatmul.f32.gmra.mxu0 %v315
        %v383 = vpop.f32.mrf.mxu0
        %v384 = vadd.f32 0.0, %v383
        %385 = vmatmul.f32.gmra.mxu0 %v318
        %v386 = vpop.f32.mrf.mxu0
        %v387 = vadd.f32 0.0, %v386
        %388 = vmatmul.f32.gmra.mxu0 %v321
        %v389 = vpop.f32.mrf.mxu0
        %v390 = vadd.f32 0.0, %v389
        %391 = vmatmul.f32.gmra.mxu0 %v324
        %v392 = vpop.f32.mrf.mxu0
        %v393 = vadd.f32 0.0, %v392
        %394 = vmatmul.f32.gmra.mxu0 %v327
        %v395 = vpop.f32.mrf.mxu0
        %v396 = vadd.f32 0.0, %v395
        %397 = vmatmul.f32.gmra.mxu0 %v330
        %v398 = vpop.f32.mrf.mxu0
        %v399 = vadd.f32 0.0, %v398
        %400 = vdwg.mxu0
        %v401 = vadd.f32 %v260, %v354
        %v402 = vadd.f32 %v260, %v357
        %v403 = vadd.f32 %v260, %v360
        %v404 = vadd.f32 %v260, %v363
        %v405 = vadd.f32 %v260, %v366
        %v406 = vadd.f32 %v260, %v369
        %v407 = vadd.f32 %v260, %v372
        %v408 = vadd.f32 %v260, %v375
        %v409 = vadd.f32 %v260, %v378
        %v410 = vadd.f32 %v260, %v381
        %v411 = vadd.f32 %v260, %v384
        %v412 = vadd.f32 %v260, %v387
        %v413 = vadd.f32 %v260, %v390
        %v414 = vadd.f32 %v260, %v393
        %v415 = vadd.f32 %v260, %v396
        %v416 = vadd.f32 %v260, %v399
        %v417 = vld [vmem:[%s248 + $0x1] sm:$0xff]
        %v418 = vld [vmem:[%s248 + $0x9] sm:$0xff]
        %v419 = vld [vmem:[%s248 + $0x19] sm:$0xff]
        %v420 = vld [vmem:[%s248 + $0x21] sm:$0xff]
        %v421 = vld [vmem:[%s248 + $0x31] sm:$0xff]
        %v422 = vld [vmem:[%s248 + $0x39] sm:$0xff]
        %v423 = vld [vmem:[%s248 + $0x49] sm:$0xff]
        %v424 = vld [vmem:[%s248 + $0x51] sm:$0xff]
        %v425 = vld [vmem:[%s248 + $0x61] sm:$0xff]
        %v426 = vld [vmem:[%s248 + $0x69] sm:$0xff]
        %v427 = vld [vmem:[%s248 + $0x79] sm:$0xff]
        %v428 = vld [vmem:[%s248 + $0x81] sm:$0xff]
        %v429 = vld [vmem:[%s248 + $0x91] sm:$0xff]
        %v430 = vld [vmem:[%s248 + $0x99] sm:$0xff]
        %v431 = vld [vmem:[%s248 + $0xa9] sm:$0xff]
        %v432 = vld [vmem:[%s248 + $0xb1] sm:$0xff]
        %s433 = scalar_lea.vmem %s2, 40
        %v434 = vld [vmem:[%s433] sm:$0xff]
        %v435 = vld [vmem:[%s433 + $0x8] sm:$0xff]
        %v436 = vld [vmem:[%s433 + $0x10] sm:$0xff]
        %v437 = vld [vmem:[%s433 + $0x18] sm:$0xff]
        %v438 = vld [vmem:[%s433 + $0x20] sm:$0xf]
        %v440 = vsel %vm283, %v417, 0
        %v443 = vsel %vm283, %v418, 0
        %v446 = vsel %vm283, %v419, 0
        %v449 = vsel %vm283, %v420, 0
        %v452 = vsel %vm283, %v421, 0
        %v455 = vsel %vm283, %v422, 0
        %v458 = vsel %vm283, %v423, 0
        %v461 = vsel %vm283, %v424, 0
        %v464 = vsel %vm283, %v425, 0
        %v467 = vsel %vm283, %v426, 0
        %v470 = vsel %vm283, %v427, 0
        %v473 = vsel %vm283, %v428, 0
        %v476 = vsel %vm283, %v429, 0
        %v479 = vsel %vm283, %v430, 0
        %v482 = vsel %vm283, %v431, 0
        %v485 = vsel %vm283, %v432, 0
        %v488 = vsel %vm332, %v438, 0
        %490 = vmatpush.msra.mxu0 0.0
        %491 = vmatpush.msra.mxu0 0.0
        %492 = vmatpush.msra.mxu0 0.0
        %493 = vmatpush.msra.mxu0 0.0
        %494 = vmatpush.msra.mxu0 0.0
        %495 = vmatpush.msra.mxu0 0.0
        %496 = vmatpush.msra.mxu0 0.0
        %497 = vmatpush.msra.mxu0 0.0
        %498 = vmatpush.msra.mxu0 0.0
        %499 = vmatpush.msra.mxu0 0.0
        %500 = vmatpush.msra.mxu0 0.0
        %501 = vmatpush.msra.mxu0 %v488
        %502 = vmatpush.msra.mxu0 %v437
        %503 = vmatpush.msra.mxu0 %v436
        %504 = vmatpush.msra.mxu0 %v435
        %505 = vmatpush.msra.mxu0 %v434
        %506 = vmatmul.f32.gmra.mxu0 %v440
        %v507 = vpop.f32.mrf.mxu0
        %v508 = vadd.f32 0.0, %v507
        %509 = vmatmul.f32.gmra.mxu0 %v443
        %v510 = vpop.f32.mrf.mxu0
        %v511 = vadd.f32 0.0, %v510
        %512 = vmatmul.f32.gmra.mxu0 %v446
        %v513 = vpop.f32.mrf.mxu0
        %v514 = vadd.f32 0.0, %v513
        %515 = vmatmul.f32.gmra.mxu0 %v449
        %v516 = vpop.f32.mrf.mxu0
        %v517 = vadd.f32 0.0, %v516
        %518 = vmatmul.f32.gmra.mxu0 %v452
        %v519 = vpop.f32.mrf.mxu0
        %v520 = vadd.f32 0.0, %v519
        %521 = vmatmul.f32.gmra.mxu0 %v455
        %v522 = vpop.f32.mrf.mxu0
        %v523 = vadd.f32 0.0, %v522
        %524 = vmatmul.f32.gmra.mxu0 %v458
        %v525 = vpop.f32.mrf.mxu0
        %v526 = vadd.f32 0.0, %v525
        %527 = vmatmul.f32.gmra.mxu0 %v461
        %v528 = vpop.f32.mrf.mxu0
        %v529 = vadd.f32 0.0, %v528
        %530 = vmatmul.f32.gmra.mxu0 %v464
        %v531 = vpop.f32.mrf.mxu0
        %v532 = vadd.f32 0.0, %v531
        %533 = vmatmul.f32.gmra.mxu0 %v467
        %v534 = vpop.f32.mrf.mxu0
        %v535 = vadd.f32 0.0, %v534
        %536 = vmatmul.f32.gmra.mxu0 %v470
        %v537 = vpop.f32.mrf.mxu0
        %v538 = vadd.f32 0.0, %v537
        %539 = vmatmul.f32.gmra.mxu0 %v473
        %v540 = vpop.f32.mrf.mxu0
        %v541 = vadd.f32 0.0, %v540
        %542 = vmatmul.f32.gmra.mxu0 %v476
        %v543 = vpop.f32.mrf.mxu0
        %v544 = vadd.f32 0.0, %v543
        %545 = vmatmul.f32.gmra.mxu0 %v479
        %v546 = vpop.f32.mrf.mxu0
        %v547 = vadd.f32 0.0, %v546
        %548 = vmatmul.f32.gmra.mxu0 %v482
        %v549 = vpop.f32.mrf.mxu0
        %v550 = vadd.f32 0.0, %v549
        %551 = vmatmul.f32.gmra.mxu0 %v485
        %v552 = vpop.f32.mrf.mxu0
        %v553 = vadd.f32 0.0, %v552
        %554 = vdwg.mxu0
        %v555 = vadd.f32 %v401, %v508
        %v556 = vadd.f32 %v402, %v511
        %v557 = vadd.f32 %v403, %v514
        %v558 = vadd.f32 %v404, %v517
        %v559 = vadd.f32 %v405, %v520
        %v560 = vadd.f32 %v406, %v523
        %v561 = vadd.f32 %v407, %v526
        %v562 = vadd.f32 %v408, %v529
        %v563 = vadd.f32 %v409, %v532
        %v564 = vadd.f32 %v410, %v535
        %v565 = vadd.f32 %v411, %v538
        %v566 = vadd.f32 %v412, %v541
        %v567 = vadd.f32 %v413, %v544
        %v568 = vadd.f32 %v414, %v547
        %v569 = vadd.f32 %v415, %v550
        %v570 = vadd.f32 %v416, %v553
        %v571 = vld [vmem:[%s248 + $0x2] sm:$0xff]
        %v572 = vld [vmem:[%s248 + $0xa] sm:$0xff]
        %v573 = vld [vmem:[%s248 + $0x1a] sm:$0xff]
        %v574 = vld [vmem:[%s248 + $0x22] sm:$0xff]
        %v575 = vld [vmem:[%s248 + $0x32] sm:$0xff]
        %v576 = vld [vmem:[%s248 + $0x3a] sm:$0xff]
        %v577 = vld [vmem:[%s248 + $0x4a] sm:$0xff]
        %v578 = vld [vmem:[%s248 + $0x52] sm:$0xff]
        %v579 = vld [vmem:[%s248 + $0x62] sm:$0xff]
        %v580 = vld [vmem:[%s248 + $0x6a] sm:$0xff]
        %v581 = vld [vmem:[%s248 + $0x7a] sm:$0xff]
        %v582 = vld [vmem:[%s248 + $0x82] sm:$0xff]
        %v583 = vld [vmem:[%s248 + $0x92] sm:$0xff]
        %v584 = vld [vmem:[%s248 + $0x9a] sm:$0xff]
        %v585 = vld [vmem:[%s248 + $0xaa] sm:$0xff]
        %v586 = vld [vmem:[%s248 + $0xb2] sm:$0xff]
        %s587 = scalar_lea.vmem %s2, 80
        %v588 = vld [vmem:[%s587] sm:$0xff]
        %v589 = vld [vmem:[%s587 + $0x8] sm:$0xff]
        %v590 = vld [vmem:[%s587 + $0x10] sm:$0xff]
        %v591 = vld [vmem:[%s587 + $0x18] sm:$0xff]
        %v592 = vld [vmem:[%s587 + $0x20] sm:$0xf]
        %v594 = vsel %vm283, %v571, 0
        %v597 = vsel %vm283, %v572, 0
        %v600 = vsel %vm283, %v573, 0
        %v603 = vsel %vm283, %v574, 0
        %v606 = vsel %vm283, %v575, 0
        %v609 = vsel %vm283, %v576, 0
        %v612 = vsel %vm283, %v577, 0
        %v615 = vsel %vm283, %v578, 0
        %v618 = vsel %vm283, %v579, 0
        %v621 = vsel %vm283, %v580, 0
        %v624 = vsel %vm283, %v581, 0
        %v627 = vsel %vm283, %v582, 0
        %v630 = vsel %vm283, %v583, 0
        %v633 = vsel %vm283, %v584, 0
        %v636 = vsel %vm283, %v585, 0
        %v639 = vsel %vm283, %v586, 0
        %v642 = vsel %vm332, %v592, 0
        %644 = vmatpush.msra.mxu0 0.0
        %645 = vmatpush.msra.mxu0 0.0
        %646 = vmatpush.msra.mxu0 0.0
        %647 = vmatpush.msra.mxu0 0.0
        %648 = vmatpush.msra.mxu0 0.0
        %649 = vmatpush.msra.mxu0 0.0
        %650 = vmatpush.msra.mxu0 0.0
        %651 = vmatpush.msra.mxu0 0.0
        %652 = vmatpush.msra.mxu0 0.0
        %653 = vmatpush.msra.mxu0 0.0
        %654 = vmatpush.msra.mxu0 0.0
        %655 = vmatpush.msra.mxu0 %v642
        %656 = vmatpush.msra.mxu0 %v591
        %657 = vmatpush.msra.mxu0 %v590
        %658 = vmatpush.msra.mxu0 %v589
        %659 = vmatpush.msra.mxu0 %v588
        %660 = vmatmul.f32.gmra.mxu0 %v594
        %v661 = vpop.f32.mrf.mxu0
        %v662 = vadd.f32 0.0, %v661
        %663 = vmatmul.f32.gmra.mxu0 %v597
        %v664 = vpop.f32.mrf.mxu0
        %v665 = vadd.f32 0.0, %v664
        %666 = vmatmul.f32.gmra.mxu0 %v600
        %v667 = vpop.f32.mrf.mxu0
        %v668 = vadd.f32 0.0, %v667
        %669 = vmatmul.f32.gmra.mxu0 %v603
        %v670 = vpop.f32.mrf.mxu0
        %v671 = vadd.f32 0.0, %v670
        %672 = vmatmul.f32.gmra.mxu0 %v606
        %v673 = vpop.f32.mrf.mxu0
        %v674 = vadd.f32 0.0, %v673
        %675 = vmatmul.f32.gmra.mxu0 %v609
        %v676 = vpop.f32.mrf.mxu0
        %v677 = vadd.f32 0.0, %v676
        %678 = vmatmul.f32.gmra.mxu0 %v612
        %v679 = vpop.f32.mrf.mxu0
        %v680 = vadd.f32 0.0, %v679
        %681 = vmatmul.f32.gmra.mxu0 %v615
        %v682 = vpop.f32.mrf.mxu0
        %v683 = vadd.f32 0.0, %v682
        %684 = vmatmul.f32.gmra.mxu0 %v618
        %v685 = vpop.f32.mrf.mxu0
        %v686 = vadd.f32 0.0, %v685
        %687 = vmatmul.f32.gmra.mxu0 %v621
        %v688 = vpop.f32.mrf.mxu0
        %v689 = vadd.f32 0.0, %v688
        %690 = vmatmul.f32.gmra.mxu0 %v624
        %v691 = vpop.f32.mrf.mxu0
        %v692 = vadd.f32 0.0, %v691
        %693 = vmatmul.f32.gmra.mxu0 %v627
        %v694 = vpop.f32.mrf.mxu0
        %v695 = vadd.f32 0.0, %v694
        %696 = vmatmul.f32.gmra.mxu0 %v630
        %v697 = vpop.f32.mrf.mxu0
        %v698 = vadd.f32 0.0, %v697
        %699 = vmatmul.f32.gmra.mxu0 %v633
        %v700 = vpop.f32.mrf.mxu0
        %v701 = vadd.f32 0.0, %v700
        %702 = vmatmul.f32.gmra.mxu0 %v636
        %v703 = vpop.f32.mrf.mxu0
        %v704 = vadd.f32 0.0, %v703
        %705 = vmatmul.f32.gmra.mxu0 %v639
        %v706 = vpop.f32.mrf.mxu0
        %v707 = vadd.f32 0.0, %v706
        %708 = vdwg.mxu0
        %v709 = vadd.f32 %v555, %v662
        %v710 = vadd.f32 %v556, %v665
        %v711 = vadd.f32 %v557, %v668
        %v712 = vadd.f32 %v558, %v671
        %v713 = vadd.f32 %v559, %v674
        %v714 = vadd.f32 %v560, %v677
        %v715 = vadd.f32 %v561, %v680
        %v716 = vadd.f32 %v562, %v683
        %v717 = vadd.f32 %v563, %v686
        %v718 = vadd.f32 %v564, %v689
        %v719 = vadd.f32 %v565, %v692
        %v720 = vadd.f32 %v566, %v695
        %v721 = vadd.f32 %v567, %v698
        %v722 = vadd.f32 %v568, %v701
        %v723 = vadd.f32 %v569, %v704
        %v724 = vadd.f32 %v570, %v707
        %s725 = scalar_lea.vmem %s248, 24
        %v726 = vld [vmem:[%s725] sm:$0xff]
        %v727 = vld [vmem:[%s725 + $0x8] sm:$0xff]
        %v728 = vld [vmem:[%s725 + $0x18] sm:$0xff]
        %v729 = vld [vmem:[%s725 + $0x20] sm:$0xff]
        %v730 = vld [vmem:[%s725 + $0x30] sm:$0xff]
        %v731 = vld [vmem:[%s725 + $0x38] sm:$0xff]
        %v732 = vld [vmem:[%s725 + $0x48] sm:$0xff]
        %v733 = vld [vmem:[%s725 + $0x50] sm:$0xff]
        %v734 = vld [vmem:[%s725 + $0x60] sm:$0xff]
        %v735 = vld [vmem:[%s725 + $0x68] sm:$0xff]
        %v736 = vld [vmem:[%s725 + $0x78] sm:$0xff]
        %v737 = vld [vmem:[%s725 + $0x80] sm:$0xff]
        %v738 = vld [vmem:[%s725 + $0x90] sm:$0xff]
        %v739 = vld [vmem:[%s725 + $0x98] sm:$0xff]
        %v740 = vld [vmem:[%s725 + $0xa8] sm:$0xff]
        %v741 = vld [vmem:[%s725 + $0xb0] sm:$0xff]
        %s742 = scalar_lea.vmem %s2, 120
        %v743 = vld [vmem:[%s742] sm:$0xff]
        %v744 = vld [vmem:[%s742 + $0x8] sm:$0xff]
        %v745 = vld [vmem:[%s742 + $0x10] sm:$0xff]
        %v746 = vld [vmem:[%s742 + $0x18] sm:$0xff]
        %v747 = vld [vmem:[%s742 + $0x20] sm:$0xf]
        %v749 = vsel %vm283, %v726, 0
        %v752 = vsel %vm283, %v727, 0
        %v755 = vsel %vm283, %v728, 0
        %v758 = vsel %vm283, %v729, 0
        %v761 = vsel %vm283, %v730, 0
        %v764 = vsel %vm283, %v731, 0
        %v767 = vsel %vm283, %v732, 0
        %v770 = vsel %vm283, %v733, 0
        %v773 = vsel %vm283, %v734, 0
        %v776 = vsel %vm283, %v735, 0
        %v779 = vsel %vm283, %v736, 0
        %v782 = vsel %vm283, %v737, 0
        %v785 = vsel %vm283, %v738, 0
        %v788 = vsel %vm283, %v739, 0
        %v791 = vsel %vm283, %v740, 0
        %v794 = vsel %vm283, %v741, 0
        %v797 = vsel %vm332, %v747, 0
        %799 = vmatpush.msra.mxu0 0.0
        %800 = vmatpush.msra.mxu0 0.0
        %801 = vmatpush.msra.mxu0 0.0
        %802 = vmatpush.msra.mxu0 0.0
        %803 = vmatpush.msra.mxu0 0.0
        %804 = vmatpush.msra.mxu0 0.0
        %805 = vmatpush.msra.mxu0 0.0
        %806 = vmatpush.msra.mxu0 0.0
        %807 = vmatpush.msra.mxu0 0.0
        %808 = vmatpush.msra.mxu0 0.0
        %809 = vmatpush.msra.mxu0 0.0
        %810 = vmatpush.msra.mxu0 %v797
        %811 = vmatpush.msra.mxu0 %v746
        %812 = vmatpush.msra.mxu0 %v745
        %813 = vmatpush.msra.mxu0 %v744
        %814 = vmatpush.msra.mxu0 %v743
        %815 = vmatmul.f32.gmra.mxu0 %v749
        %v816 = vpop.f32.mrf.mxu0
        %v817 = vadd.f32 0.0, %v816
        %818 = vmatmul.f32.gmra.mxu0 %v752
        %v819 = vpop.f32.mrf.mxu0
        %v820 = vadd.f32 0.0, %v819
        %821 = vmatmul.f32.gmra.mxu0 %v755
        %v822 = vpop.f32.mrf.mxu0
        %v823 = vadd.f32 0.0, %v822
        %824 = vmatmul.f32.gmra.mxu0 %v758
        %v825 = vpop.f32.mrf.mxu0
        %v826 = vadd.f32 0.0, %v825
        %827 = vmatmul.f32.gmra.mxu0 %v761
        %v828 = vpop.f32.mrf.mxu0
        %v829 = vadd.f32 0.0, %v828
        %830 = vmatmul.f32.gmra.mxu0 %v764
        %v831 = vpop.f32.mrf.mxu0
        %v832 = vadd.f32 0.0, %v831
        %833 = vmatmul.f32.gmra.mxu0 %v767
        %v834 = vpop.f32.mrf.mxu0
        %v835 = vadd.f32 0.0, %v834
        %836 = vmatmul.f32.gmra.mxu0 %v770
        %v837 = vpop.f32.mrf.mxu0
        %v838 = vadd.f32 0.0, %v837
        %839 = vmatmul.f32.gmra.mxu0 %v773
        %v840 = vpop.f32.mrf.mxu0
        %v841 = vadd.f32 0.0, %v840
        %842 = vmatmul.f32.gmra.mxu0 %v776
        %v843 = vpop.f32.mrf.mxu0
        %v844 = vadd.f32 0.0, %v843
        %845 = vmatmul.f32.gmra.mxu0 %v779
        %v846 = vpop.f32.mrf.mxu0
        %v847 = vadd.f32 0.0, %v846
        %848 = vmatmul.f32.gmra.mxu0 %v782
        %v849 = vpop.f32.mrf.mxu0
        %v850 = vadd.f32 0.0, %v849
        %851 = vmatmul.f32.gmra.mxu0 %v785
        %v852 = vpop.f32.mrf.mxu0
        %v853 = vadd.f32 0.0, %v852
        %854 = vmatmul.f32.gmra.mxu0 %v788
        %v855 = vpop.f32.mrf.mxu0
        %v856 = vadd.f32 0.0, %v855
        %857 = vmatmul.f32.gmra.mxu0 %v791
        %v858 = vpop.f32.mrf.mxu0
        %v859 = vadd.f32 0.0, %v858
        %860 = vmatmul.f32.gmra.mxu0 %v794
        %v861 = vpop.f32.mrf.mxu0
        %v862 = vadd.f32 0.0, %v861
        %863 = vdwg.mxu0
        %v864 = vadd.f32 %v709, %v817
        %v865 = vadd.f32 %v710, %v820
        %v866 = vadd.f32 %v711, %v823
        %v867 = vadd.f32 %v712, %v826
        %v868 = vadd.f32 %v713, %v829
        %v869 = vadd.f32 %v714, %v832
        %v870 = vadd.f32 %v715, %v835
        %v871 = vadd.f32 %v716, %v838
        %v872 = vadd.f32 %v717, %v841
        %v873 = vadd.f32 %v718, %v844
        %v874 = vadd.f32 %v719, %v847
        %v875 = vadd.f32 %v720, %v850
        %v876 = vadd.f32 %v721, %v853
        %v877 = vadd.f32 %v722, %v856
        %v878 = vadd.f32 %v723, %v859
        %v879 = vadd.f32 %v724, %v862
        %v880 = vld [vmem:[%s725 + $0x1] sm:$0xff]
        %v881 = vld [vmem:[%s725 + $0x9] sm:$0xff]
        %v882 = vld [vmem:[%s725 + $0x19] sm:$0xff]
        %v883 = vld [vmem:[%s725 + $0x21] sm:$0xff]
        %v884 = vld [vmem:[%s725 + $0x31] sm:$0xff]
        %v885 = vld [vmem:[%s725 + $0x39] sm:$0xff]
        %v886 = vld [vmem:[%s725 + $0x49] sm:$0xff]
        %v887 = vld [vmem:[%s725 + $0x51] sm:$0xff]
        %v888 = vld [vmem:[%s725 + $0x61] sm:$0xff]
        %v889 = vld [vmem:[%s725 + $0x69] sm:$0xff]
        %v890 = vld [vmem:[%s725 + $0x79] sm:$0xff]
        %v891 = vld [vmem:[%s725 + $0x81] sm:$0xff]
        %v892 = vld [vmem:[%s725 + $0x91] sm:$0xff]
        %v893 = vld [vmem:[%s725 + $0x99] sm:$0xff]
        %v894 = vld [vmem:[%s725 + $0xa9] sm:$0xff]
        %v895 = vld [vmem:[%s725 + $0xb1] sm:$0xff]
        %s896 = scalar_lea.vmem %s2, 160
        %v897 = vld [vmem:[%s896] sm:$0xff]
        %v898 = vld [vmem:[%s896 + $0x8] sm:$0xff]
        %v899 = vld [vmem:[%s896 + $0x10] sm:$0xff]
        %v900 = vld [vmem:[%s896 + $0x18] sm:$0xff]
        %v901 = vld [vmem:[%s896 + $0x20] sm:$0xf]
        %v903 = vsel %vm283, %v880, 0
        %v906 = vsel %vm283, %v881, 0
        %v909 = vsel %vm283, %v882, 0
        %v912 = vsel %vm283, %v883, 0
        %v915 = vsel %vm283, %v884, 0
        %v918 = vsel %vm283, %v885, 0
        %v921 = vsel %vm283, %v886, 0
        %v924 = vsel %vm283, %v887, 0
        %v927 = vsel %vm283, %v888, 0
        %v930 = vsel %vm283, %v889, 0
        %v933 = vsel %vm283, %v890, 0
        %v936 = vsel %vm283, %v891, 0
        %v939 = vsel %vm283, %v892, 0
        %v942 = vsel %vm283, %v893, 0
        %v945 = vsel %vm283, %v894, 0
        %v948 = vsel %vm283, %v895, 0
        %v951 = vsel %vm332, %v901, 0
        %953 = vmatpush.msra.mxu0 0.0
        %954 = vmatpush.msra.mxu0 0.0
        %955 = vmatpush.msra.mxu0 0.0
        %956 = vmatpush.msra.mxu0 0.0
        %957 = vmatpush.msra.mxu0 0.0
        %958 = vmatpush.msra.mxu0 0.0
        %959 = vmatpush.msra.mxu0 0.0
        %960 = vmatpush.msra.mxu0 0.0
        %961 = vmatpush.msra.mxu0 0.0
        %962 = vmatpush.msra.mxu0 0.0
        %963 = vmatpush.msra.mxu0 0.0
        %964 = vmatpush.msra.mxu0 %v951
        %965 = vmatpush.msra.mxu0 %v900
        %966 = vmatpush.msra.mxu0 %v899
        %967 = vmatpush.msra.mxu0 %v898
        %968 = vmatpush.msra.mxu0 %v897
        %969 = vmatmul.f32.gmra.mxu0 %v903
        %v970 = vpop.f32.mrf.mxu0
        %v971 = vadd.f32 0.0, %v970
        %972 = vmatmul.f32.gmra.mxu0 %v906
        %v973 = vpop.f32.mrf.mxu0
        %v974 = vadd.f32 0.0, %v973
        %975 = vmatmul.f32.gmra.mxu0 %v909
        %v976 = vpop.f32.mrf.mxu0
        %v977 = vadd.f32 0.0, %v976
        %978 = vmatmul.f32.gmra.mxu0 %v912
        %v979 = vpop.f32.mrf.mxu0
        %v980 = vadd.f32 0.0, %v979
        %981 = vmatmul.f32.gmra.mxu0 %v915
        %v982 = vpop.f32.mrf.mxu0
        %v983 = vadd.f32 0.0, %v982
        %984 = vmatmul.f32.gmra.mxu0 %v918
        %v985 = vpop.f32.mrf.mxu0
        %v986 = vadd.f32 0.0, %v985
        %987 = vmatmul.f32.gmra.mxu0 %v921
        %v988 = vpop.f32.mrf.mxu0
        %v989 = vadd.f32 0.0, %v988
        %990 = vmatmul.f32.gmra.mxu0 %v924
        %v991 = vpop.f32.mrf.mxu0
        %v992 = vadd.f32 0.0, %v991
        %993 = vmatmul.f32.gmra.mxu0 %v927
        %v994 = vpop.f32.mrf.mxu0
        %v995 = vadd.f32 0.0, %v994
        %996 = vmatmul.f32.gmra.mxu0 %v930
        %v997 = vpop.f32.mrf.mxu0
        %v998 = vadd.f32 0.0, %v997
        %999 = vmatmul.f32.gmra.mxu0 %v933
        %v1000 = vpop.f32.mrf.mxu0
        %v1001 = vadd.f32 0.0, %v1000
        %1002 = vmatmul.f32.gmra.mxu0 %v936
        %v1003 = vpop.f32.mrf.mxu0
        %v1004 = vadd.f32 0.0, %v1003
        %1005 = vmatmul.f32.gmra.mxu0 %v939
        %v1006 = vpop.f32.mrf.mxu0
        %v1007 = vadd.f32 0.0, %v1006
        %1008 = vmatmul.f32.gmra.mxu0 %v942
        %v1009 = vpop.f32.mrf.mxu0
        %v1010 = vadd.f32 0.0, %v1009
        %1011 = vmatmul.f32.gmra.mxu0 %v945
        %v1012 = vpop.f32.mrf.mxu0
        %v1013 = vadd.f32 0.0, %v1012
        %1014 = vmatmul.f32.gmra.mxu0 %v948
        %v1015 = vpop.f32.mrf.mxu0
        %v1016 = vadd.f32 0.0, %v1015
        %1017 = vdwg.mxu0
        %v1018 = vadd.f32 %v864, %v971
        %v1019 = vadd.f32 %v865, %v974
        %v1020 = vadd.f32 %v866, %v977
        %v1021 = vadd.f32 %v867, %v980
        %v1022 = vadd.f32 %v868, %v983
        %v1023 = vadd.f32 %v869, %v986
        %v1024 = vadd.f32 %v870, %v989
        %v1025 = vadd.f32 %v871, %v992
        %v1026 = vadd.f32 %v872, %v995
        %v1027 = vadd.f32 %v873, %v998
        %v1028 = vadd.f32 %v874, %v1001
        %v1029 = vadd.f32 %v875, %v1004
        %v1030 = vadd.f32 %v876, %v1007
        %v1031 = vadd.f32 %v877, %v1010
        %v1032 = vadd.f32 %v878, %v1013
        %v1033 = vadd.f32 %v879, %v1016
        %v1034 = vld [vmem:[%s725 + $0x2] sm:$0xff]
        %v1035 = vld [vmem:[%s725 + $0xa] sm:$0xff]
        %v1036 = vld [vmem:[%s725 + $0x1a] sm:$0xff]
        %v1037 = vld [vmem:[%s725 + $0x22] sm:$0xff]
        %v1038 = vld [vmem:[%s725 + $0x32] sm:$0xff]
        %v1039 = vld [vmem:[%s725 + $0x3a] sm:$0xff]
        %v1040 = vld [vmem:[%s725 + $0x4a] sm:$0xff]
        %v1041 = vld [vmem:[%s725 + $0x52] sm:$0xff]
        %v1042 = vld [vmem:[%s725 + $0x62] sm:$0xff]
        %v1043 = vld [vmem:[%s725 + $0x6a] sm:$0xff]
        %v1044 = vld [vmem:[%s725 + $0x7a] sm:$0xff]
        %v1045 = vld [vmem:[%s725 + $0x82] sm:$0xff]
        %v1046 = vld [vmem:[%s725 + $0x92] sm:$0xff]
        %v1047 = vld [vmem:[%s725 + $0x9a] sm:$0xff]
        %v1048 = vld [vmem:[%s725 + $0xaa] sm:$0xff]
        %v1049 = vld [vmem:[%s725 + $0xb2] sm:$0xff]
        %s1050 = scalar_lea.vmem %s2, 200
        %v1051 = vld [vmem:[%s1050] sm:$0xff]
        %v1052 = vld [vmem:[%s1050 + $0x8] sm:$0xff]
        %v1053 = vld [vmem:[%s1050 + $0x10] sm:$0xff]
        %v1054 = vld [vmem:[%s1050 + $0x18] sm:$0xff]
        %v1055 = vld [vmem:[%s1050 + $0x20] sm:$0xf]
        %v1057 = vsel %vm283, %v1034, 0
        %v1060 = vsel %vm283, %v1035, 0
        %v1063 = vsel %vm283, %v1036, 0
        %v1066 = vsel %vm283, %v1037, 0
        %v1069 = vsel %vm283, %v1038, 0
        %v1072 = vsel %vm283, %v1039, 0
        %v1075 = vsel %vm283, %v1040, 0
        %v1078 = vsel %vm283, %v1041, 0
        %v1081 = vsel %vm283, %v1042, 0
        %v1084 = vsel %vm283, %v1043, 0
        %v1087 = vsel %vm283, %v1044, 0
        %v1090 = vsel %vm283, %v1045, 0
        %v1093 = vsel %vm283, %v1046, 0
        %v1096 = vsel %vm283, %v1047, 0
        %v1099 = vsel %vm283, %v1048, 0
        %v1102 = vsel %vm283, %v1049, 0
        %v1105 = vsel %vm332, %v1055, 0
        %1107 = vmatpush.msra.mxu0 0.0
        %1108 = vmatpush.msra.mxu0 0.0
        %1109 = vmatpush.msra.mxu0 0.0
        %1110 = vmatpush.msra.mxu0 0.0
        %1111 = vmatpush.msra.mxu0 0.0
        %1112 = vmatpush.msra.mxu0 0.0
        %1113 = vmatpush.msra.mxu0 0.0
        %1114 = vmatpush.msra.mxu0 0.0
        %1115 = vmatpush.msra.mxu0 0.0
        %1116 = vmatpush.msra.mxu0 0.0
        %1117 = vmatpush.msra.mxu0 0.0
        %1118 = vmatpush.msra.mxu0 %v1105
        %1119 = vmatpush.msra.mxu0 %v1054
        %1120 = vmatpush.msra.mxu0 %v1053
        %1121 = vmatpush.msra.mxu0 %v1052
        %1122 = vmatpush.msra.mxu0 %v1051
        %1123 = vmatmul.f32.gmra.mxu0 %v1057
        %v1124 = vpop.f32.mrf.mxu0
        %v1125 = vadd.f32 0.0, %v1124
        %1126 = vmatmul.f32.gmra.mxu0 %v1060
        %v1127 = vpop.f32.mrf.mxu0
        %v1128 = vadd.f32 0.0, %v1127
        %1129 = vmatmul.f32.gmra.mxu0 %v1063
        %v1130 = vpop.f32.mrf.mxu0
        %v1131 = vadd.f32 0.0, %v1130
        %1132 = vmatmul.f32.gmra.mxu0 %v1066
        %v1133 = vpop.f32.mrf.mxu0
        %v1134 = vadd.f32 0.0, %v1133
        %1135 = vmatmul.f32.gmra.mxu0 %v1069
        %v1136 = vpop.f32.mrf.mxu0
        %v1137 = vadd.f32 0.0, %v1136
        %1138 = vmatmul.f32.gmra.mxu0 %v1072
        %v1139 = vpop.f32.mrf.mxu0
        %v1140 = vadd.f32 0.0, %v1139
        %1141 = vmatmul.f32.gmra.mxu0 %v1075
        %v1142 = vpop.f32.mrf.mxu0
        %v1143 = vadd.f32 0.0, %v1142
        %1144 = vmatmul.f32.gmra.mxu0 %v1078
        %v1145 = vpop.f32.mrf.mxu0
        %v1146 = vadd.f32 0.0, %v1145
        %1147 = vmatmul.f32.gmra.mxu0 %v1081
        %v1148 = vpop.f32.mrf.mxu0
        %v1149 = vadd.f32 0.0, %v1148
        %1150 = vmatmul.f32.gmra.mxu0 %v1084
        %v1151 = vpop.f32.mrf.mxu0
        %v1152 = vadd.f32 0.0, %v1151
        %1153 = vmatmul.f32.gmra.mxu0 %v1087
        %v1154 = vpop.f32.mrf.mxu0
        %v1155 = vadd.f32 0.0, %v1154
        %1156 = vmatmul.f32.gmra.mxu0 %v1090
        %v1157 = vpop.f32.mrf.mxu0
        %v1158 = vadd.f32 0.0, %v1157
        %1159 = vmatmul.f32.gmra.mxu0 %v1093
        %v1160 = vpop.f32.mrf.mxu0
        %v1161 = vadd.f32 0.0, %v1160
        %1162 = vmatmul.f32.gmra.mxu0 %v1096
        %v1163 = vpop.f32.mrf.mxu0
        %v1164 = vadd.f32 0.0, %v1163
        %1165 = vmatmul.f32.gmra.mxu0 %v1099
        %v1166 = vpop.f32.mrf.mxu0
        %v1167 = vadd.f32 0.0, %v1166
        %1168 = vmatmul.f32.gmra.mxu0 %v1102
        %v1169 = vpop.f32.mrf.mxu0
        %v1170 = vadd.f32 0.0, %v1169
        %1171 = vdwg.mxu0
        %v1172 = vadd.f32 %v1018, %v1125
        %v1173 = vadd.f32 %v1019, %v1128
        %v1174 = vadd.f32 %v1020, %v1131
        %v1175 = vadd.f32 %v1021, %v1134
        %v1176 = vadd.f32 %v1022, %v1137
        %v1177 = vadd.f32 %v1023, %v1140
        %v1178 = vadd.f32 %v1024, %v1143
        %v1179 = vadd.f32 %v1025, %v1146
        %v1180 = vadd.f32 %v1026, %v1149
        %v1181 = vadd.f32 %v1027, %v1152
        %v1182 = vadd.f32 %v1028, %v1155
        %v1183 = vadd.f32 %v1029, %v1158
        %v1184 = vadd.f32 %v1030, %v1161
        %v1185 = vadd.f32 %v1031, %v1164
        %v1186 = vadd.f32 %v1032, %v1167
        %v1187 = vadd.f32 %v1033, %v1170
        %s1188 = scalar_lea.vmem %s248, 48
        %v1189 = vld [vmem:[%s1188] sm:$0xff]
        %v1190 = vld [vmem:[%s1188 + $0x8] sm:$0xff]
        %v1191 = vld [vmem:[%s1188 + $0x18] sm:$0xff]
        %v1192 = vld [vmem:[%s1188 + $0x20] sm:$0xff]
        %v1193 = vld [vmem:[%s1188 + $0x30] sm:$0xff]
        %v1194 = vld [vmem:[%s1188 + $0x38] sm:$0xff]
        %v1195 = vld [vmem:[%s1188 + $0x48] sm:$0xff]
        %v1196 = vld [vmem:[%s1188 + $0x50] sm:$0xff]
        %v1197 = vld [vmem:[%s1188 + $0x60] sm:$0xff]
        %v1198 = vld [vmem:[%s1188 + $0x68] sm:$0xff]
        %v1199 = vld [vmem:[%s1188 + $0x78] sm:$0xff]
        %v1200 = vld [vmem:[%s1188 + $0x80] sm:$0xff]
        %v1201 = vld [vmem:[%s1188 + $0x90] sm:$0xff]
        %v1202 = vld [vmem:[%s1188 + $0x98] sm:$0xff]
        %v1203 = vld [vmem:[%s1188 + $0xa8] sm:$0xff]
        %v1204 = vld [vmem:[%s1188 + $0xb0] sm:$0xff]
        %s1205 = scalar_lea.vmem %s2, 240
        %v1206 = vld [vmem:[%s1205] sm:$0xff]
        %v1207 = vld [vmem:[%s1205 + $0x8] sm:$0xff]
        %v1208 = vld [vmem:[%s1205 + $0x10] sm:$0xff]
        %v1209 = vld [vmem:[%s1205 + $0x18] sm:$0xff]
        %v1210 = vld [vmem:[%s1205 + $0x20] sm:$0xf]
        %v1212 = vsel %vm283, %v1189, 0
        %v1215 = vsel %vm283, %v1190, 0
        %v1218 = vsel %vm283, %v1191, 0
        %v1221 = vsel %vm283, %v1192, 0
        %v1224 = vsel %vm283, %v1193, 0
        %v1227 = vsel %vm283, %v1194, 0
        %v1230 = vsel %vm283, %v1195, 0
        %v1233 = vsel %vm283, %v1196, 0
        %v1236 = vsel %vm283, %v1197, 0
        %v1239 = vsel %vm283, %v1198, 0
        %v1242 = vsel %vm283, %v1199, 0
        %v1245 = vsel %vm283, %v1200, 0
        %v1248 = vsel %vm283, %v1201, 0
        %v1251 = vsel %vm283, %v1202, 0
        %v1254 = vsel %vm283, %v1203, 0
        %v1257 = vsel %vm283, %v1204, 0
        %v1260 = vsel %vm332, %v1210, 0
        %1262 = vmatpush.msra.mxu0 0.0
        %1263 = vmatpush.msra.mxu0 0.0
        %1264 = vmatpush.msra.mxu0 0.0
        %1265 = vmatpush.msra.mxu0 0.0
        %1266 = vmatpush.msra.mxu0 0.0
        %1267 = vmatpush.msra.mxu0 0.0
        %1268 = vmatpush.msra.mxu0 0.0
        %1269 = vmatpush.msra.mxu0 0.0
        %1270 = vmatpush.msra.mxu0 0.0
        %1271 = vmatpush.msra.mxu0 0.0
        %1272 = vmatpush.msra.mxu0 0.0
        %1273 = vmatpush.msra.mxu0 %v1260
        %1274 = vmatpush.msra.mxu0 %v1209
        %1275 = vmatpush.msra.mxu0 %v1208
        %1276 = vmatpush.msra.mxu0 %v1207
        %1277 = vmatpush.msra.mxu0 %v1206
        %1278 = vmatmul.f32.gmra.mxu0 %v1212
        %v1279 = vpop.f32.mrf.mxu0
        %v1280 = vadd.f32 0.0, %v1279
        %1281 = vmatmul.f32.gmra.mxu0 %v1215
        %v1282 = vpop.f32.mrf.mxu0
        %v1283 = vadd.f32 0.0, %v1282
        %1284 = vmatmul.f32.gmra.mxu0 %v1218
        %v1285 = vpop.f32.mrf.mxu0
        %v1286 = vadd.f32 0.0, %v1285
        %1287 = vmatmul.f32.gmra.mxu0 %v1221
        %v1288 = vpop.f32.mrf.mxu0
        %v1289 = vadd.f32 0.0, %v1288
        %1290 = vmatmul.f32.gmra.mxu0 %v1224
        %v1291 = vpop.f32.mrf.mxu0
        %v1292 = vadd.f32 0.0, %v1291
        %1293 = vmatmul.f32.gmra.mxu0 %v1227
        %v1294 = vpop.f32.mrf.mxu0
        %v1295 = vadd.f32 0.0, %v1294
        %1296 = vmatmul.f32.gmra.mxu0 %v1230
        %v1297 = vpop.f32.mrf.mxu0
        %v1298 = vadd.f32 0.0, %v1297
        %1299 = vmatmul.f32.gmra.mxu0 %v1233
        %v1300 = vpop.f32.mrf.mxu0
        %v1301 = vadd.f32 0.0, %v1300
        %1302 = vmatmul.f32.gmra.mxu0 %v1236
        %v1303 = vpop.f32.mrf.mxu0
        %v1304 = vadd.f32 0.0, %v1303
        %1305 = vmatmul.f32.gmra.mxu0 %v1239
        %v1306 = vpop.f32.mrf.mxu0
        %v1307 = vadd.f32 0.0, %v1306
        %1308 = vmatmul.f32.gmra.mxu0 %v1242
        %v1309 = vpop.f32.mrf.mxu0
        %v1310 = vadd.f32 0.0, %v1309
        %1311 = vmatmul.f32.gmra.mxu0 %v1245
        %v1312 = vpop.f32.mrf.mxu0
        %v1313 = vadd.f32 0.0, %v1312
        %1314 = vmatmul.f32.gmra.mxu0 %v1248
        %v1315 = vpop.f32.mrf.mxu0
        %v1316 = vadd.f32 0.0, %v1315
        %1317 = vmatmul.f32.gmra.mxu0 %v1251
        %v1318 = vpop.f32.mrf.mxu0
        %v1319 = vadd.f32 0.0, %v1318
        %1320 = vmatmul.f32.gmra.mxu0 %v1254
        %v1321 = vpop.f32.mrf.mxu0
        %v1322 = vadd.f32 0.0, %v1321
        %1323 = vmatmul.f32.gmra.mxu0 %v1257
        %v1324 = vpop.f32.mrf.mxu0
        %v1325 = vadd.f32 0.0, %v1324
        %1326 = vdwg.mxu0
        %v1327 = vadd.f32 %v1172, %v1280
        %v1328 = vadd.f32 %v1173, %v1283
        %v1329 = vadd.f32 %v1174, %v1286
        %v1330 = vadd.f32 %v1175, %v1289
        %v1331 = vadd.f32 %v1176, %v1292
        %v1332 = vadd.f32 %v1177, %v1295
        %v1333 = vadd.f32 %v1178, %v1298
        %v1334 = vadd.f32 %v1179, %v1301
        %v1335 = vadd.f32 %v1180, %v1304
        %v1336 = vadd.f32 %v1181, %v1307
        %v1337 = vadd.f32 %v1182, %v1310
        %v1338 = vadd.f32 %v1183, %v1313
        %v1339 = vadd.f32 %v1184, %v1316
        %v1340 = vadd.f32 %v1185, %v1319
        %v1341 = vadd.f32 %v1186, %v1322
        %v1342 = vadd.f32 %v1187, %v1325
        %v1343 = vld [vmem:[%s1188 + $0x1] sm:$0xff]
        %v1344 = vld [vmem:[%s1188 + $0x9] sm:$0xff]
        %v1345 = vld [vmem:[%s1188 + $0x19] sm:$0xff]
        %v1346 = vld [vmem:[%s1188 + $0x21] sm:$0xff]
        %v1347 = vld [vmem:[%s1188 + $0x31] sm:$0xff]
        %v1348 = vld [vmem:[%s1188 + $0x39] sm:$0xff]
        %v1349 = vld [vmem:[%s1188 + $0x49] sm:$0xff]
        %v1350 = vld [vmem:[%s1188 + $0x51] sm:$0xff]
        %v1351 = vld [vmem:[%s1188 + $0x61] sm:$0xff]
        %v1352 = vld [vmem:[%s1188 + $0x69] sm:$0xff]
        %v1353 = vld [vmem:[%s1188 + $0x79] sm:$0xff]
        %v1354 = vld [vmem:[%s1188 + $0x81] sm:$0xff]
        %v1355 = vld [vmem:[%s1188 + $0x91] sm:$0xff]
        %v1356 = vld [vmem:[%s1188 + $0x99] sm:$0xff]
        %v1357 = vld [vmem:[%s1188 + $0xa9] sm:$0xff]
        %v1358 = vld [vmem:[%s1188 + $0xb1] sm:$0xff]
        %s1359 = scalar_lea.vmem %s2, 280
        %v1360 = vld [vmem:[%s1359] sm:$0xff]
        %v1361 = vld [vmem:[%s1359 + $0x8] sm:$0xff]
        %v1362 = vld [vmem:[%s1359 + $0x10] sm:$0xff]
        %v1363 = vld [vmem:[%s1359 + $0x18] sm:$0xff]
        %v1364 = vld [vmem:[%s1359 + $0x20] sm:$0xf]
        %v1366 = vsel %vm283, %v1343, 0
        %v1369 = vsel %vm283, %v1344, 0
        %v1372 = vsel %vm283, %v1345, 0
        %v1375 = vsel %vm283, %v1346, 0
        %v1378 = vsel %vm283, %v1347, 0
        %v1381 = vsel %vm283, %v1348, 0
        %v1384 = vsel %vm283, %v1349, 0
        %v1387 = vsel %vm283, %v1350, 0
        %v1390 = vsel %vm283, %v1351, 0
        %v1393 = vsel %vm283, %v1352, 0
        %v1396 = vsel %vm283, %v1353, 0
        %v1399 = vsel %vm283, %v1354, 0
        %v1402 = vsel %vm283, %v1355, 0
        %v1405 = vsel %vm283, %v1356, 0
        %v1408 = vsel %vm283, %v1357, 0
        %v1411 = vsel %vm283, %v1358, 0
        %v1414 = vsel %vm332, %v1364, 0
        %1416 = vmatpush.msra.mxu0 0.0
        %1417 = vmatpush.msra.mxu0 0.0
        %1418 = vmatpush.msra.mxu0 0.0
        %1419 = vmatpush.msra.mxu0 0.0
        %1420 = vmatpush.msra.mxu0 0.0
        %1421 = vmatpush.msra.mxu0 0.0
        %1422 = vmatpush.msra.mxu0 0.0
        %1423 = vmatpush.msra.mxu0 0.0
        %1424 = vmatpush.msra.mxu0 0.0
        %1425 = vmatpush.msra.mxu0 0.0
        %1426 = vmatpush.msra.mxu0 0.0
        %1427 = vmatpush.msra.mxu0 %v1414
        %1428 = vmatpush.msra.mxu0 %v1363
        %1429 = vmatpush.msra.mxu0 %v1362
        %1430 = vmatpush.msra.mxu0 %v1361
        %1431 = vmatpush.msra.mxu0 %v1360
        %1432 = vmatmul.f32.gmra.mxu0 %v1366
        %v1433 = vpop.f32.mrf.mxu0
        %v1434 = vadd.f32 0.0, %v1433
        %1435 = vmatmul.f32.gmra.mxu0 %v1369
        %v1436 = vpop.f32.mrf.mxu0
        %v1437 = vadd.f32 0.0, %v1436
        %1438 = vmatmul.f32.gmra.mxu0 %v1372
        %v1439 = vpop.f32.mrf.mxu0
        %v1440 = vadd.f32 0.0, %v1439
        %1441 = vmatmul.f32.gmra.mxu0 %v1375
        %v1442 = vpop.f32.mrf.mxu0
        %v1443 = vadd.f32 0.0, %v1442
        %1444 = vmatmul.f32.gmra.mxu0 %v1378
        %v1445 = vpop.f32.mrf.mxu0
        %v1446 = vadd.f32 0.0, %v1445
        %1447 = vmatmul.f32.gmra.mxu0 %v1381
        %v1448 = vpop.f32.mrf.mxu0
        %v1449 = vadd.f32 0.0, %v1448
        %1450 = vmatmul.f32.gmra.mxu0 %v1384
        %v1451 = vpop.f32.mrf.mxu0
        %v1452 = vadd.f32 0.0, %v1451
        %1453 = vmatmul.f32.gmra.mxu0 %v1387
        %v1454 = vpop.f32.mrf.mxu0
        %v1455 = vadd.f32 0.0, %v1454
        %1456 = vmatmul.f32.gmra.mxu0 %v1390
        %v1457 = vpop.f32.mrf.mxu0
        %v1458 = vadd.f32 0.0, %v1457
        %1459 = vmatmul.f32.gmra.mxu0 %v1393
        %v1460 = vpop.f32.mrf.mxu0
        %v1461 = vadd.f32 0.0, %v1460
        %1462 = vmatmul.f32.gmra.mxu0 %v1396
        %v1463 = vpop.f32.mrf.mxu0
        %v1464 = vadd.f32 0.0, %v1463
        %1465 = vmatmul.f32.gmra.mxu0 %v1399
        %v1466 = vpop.f32.mrf.mxu0
        %v1467 = vadd.f32 0.0, %v1466
        %1468 = vmatmul.f32.gmra.mxu0 %v1402
        %v1469 = vpop.f32.mrf.mxu0
        %v1470 = vadd.f32 0.0, %v1469
        %1471 = vmatmul.f32.gmra.mxu0 %v1405
        %v1472 = vpop.f32.mrf.mxu0
        %v1473 = vadd.f32 0.0, %v1472
        %1474 = vmatmul.f32.gmra.mxu0 %v1408
        %v1475 = vpop.f32.mrf.mxu0
        %v1476 = vadd.f32 0.0, %v1475
        %1477 = vmatmul.f32.gmra.mxu0 %v1411
        %v1478 = vpop.f32.mrf.mxu0
        %v1479 = vadd.f32 0.0, %v1478
        %1480 = vdwg.mxu0
        %v1481 = vadd.f32 %v1327, %v1434
        %v1482 = vadd.f32 %v1328, %v1437
        %v1483 = vadd.f32 %v1329, %v1440
        %v1484 = vadd.f32 %v1330, %v1443
        %v1485 = vadd.f32 %v1331, %v1446
        %v1486 = vadd.f32 %v1332, %v1449
        %v1487 = vadd.f32 %v1333, %v1452
        %v1488 = vadd.f32 %v1334, %v1455
        %v1489 = vadd.f32 %v1335, %v1458
        %v1490 = vadd.f32 %v1336, %v1461
        %v1491 = vadd.f32 %v1337, %v1464
        %v1492 = vadd.f32 %v1338, %v1467
        %v1493 = vadd.f32 %v1339, %v1470
        %v1494 = vadd.f32 %v1340, %v1473
        %v1495 = vadd.f32 %v1341, %v1476
        %v1496 = vadd.f32 %v1342, %v1479
        %v1497 = vld [vmem:[%s1188 + $0x2] sm:$0xff]
        %v1498 = vld [vmem:[%s1188 + $0xa] sm:$0xff]
        %v1499 = vld [vmem:[%s1188 + $0x1a] sm:$0xff]
        %v1500 = vld [vmem:[%s1188 + $0x22] sm:$0xff]
        %v1501 = vld [vmem:[%s1188 + $0x32] sm:$0xff]
        %v1502 = vld [vmem:[%s1188 + $0x3a] sm:$0xff]
        %v1503 = vld [vmem:[%s1188 + $0x4a] sm:$0xff]
        %v1504 = vld [vmem:[%s1188 + $0x52] sm:$0xff]
        %v1505 = vld [vmem:[%s1188 + $0x62] sm:$0xff]
        %v1506 = vld [vmem:[%s1188 + $0x6a] sm:$0xff]
        %v1507 = vld [vmem:[%s1188 + $0x7a] sm:$0xff]
        %v1508 = vld [vmem:[%s1188 + $0x82] sm:$0xff]
        %v1509 = vld [vmem:[%s1188 + $0x92] sm:$0xff]
        %v1510 = vld [vmem:[%s1188 + $0x9a] sm:$0xff]
        %v1511 = vld [vmem:[%s1188 + $0xaa] sm:$0xff]
        %v1512 = vld [vmem:[%s1188 + $0xb2] sm:$0xff]
        %s1513 = scalar_lea.vmem %s2, 320
        %v1514 = vld [vmem:[%s1513] sm:$0xff]
        %v1515 = vld [vmem:[%s1513 + $0x8] sm:$0xff]
        %v1516 = vld [vmem:[%s1513 + $0x10] sm:$0xff]
        %v1517 = vld [vmem:[%s1513 + $0x18] sm:$0xff]
        %v1518 = vld [vmem:[%s1513 + $0x20] sm:$0xf]
        %v1520 = vsel %vm283, %v1497, 0
        %v1523 = vsel %vm283, %v1498, 0
        %v1526 = vsel %vm283, %v1499, 0
        %v1529 = vsel %vm283, %v1500, 0
        %v1532 = vsel %vm283, %v1501, 0
        %v1535 = vsel %vm283, %v1502, 0
        %v1538 = vsel %vm283, %v1503, 0
        %v1541 = vsel %vm283, %v1504, 0
        %v1544 = vsel %vm283, %v1505, 0
        %v1547 = vsel %vm283, %v1506, 0
        %v1550 = vsel %vm283, %v1507, 0
        %v1553 = vsel %vm283, %v1508, 0
        %v1556 = vsel %vm283, %v1509, 0
        %v1559 = vsel %vm283, %v1510, 0
        %v1562 = vsel %vm283, %v1511, 0
        %v1565 = vsel %vm283, %v1512, 0
        %v1568 = vsel %vm332, %v1518, 0
        %1570 = vmatpush.msra.mxu0 0.0
        %1571 = vmatpush.msra.mxu0 0.0
        %1572 = vmatpush.msra.mxu0 0.0
        %1573 = vmatpush.msra.mxu0 0.0
        %1574 = vmatpush.msra.mxu0 0.0
        %1575 = vmatpush.msra.mxu0 0.0
        %1576 = vmatpush.msra.mxu0 0.0
        %1577 = vmatpush.msra.mxu0 0.0
        %1578 = vmatpush.msra.mxu0 0.0
        %1579 = vmatpush.msra.mxu0 0.0
        %1580 = vmatpush.msra.mxu0 0.0
        %1581 = vmatpush.msra.mxu0 %v1568
        %1582 = vmatpush.msra.mxu0 %v1517
        %1583 = vmatpush.msra.mxu0 %v1516
        %1584 = vmatpush.msra.mxu0 %v1515
        %1585 = vmatpush.msra.mxu0 %v1514
        %1586 = vmatmul.f32.gmra.mxu0 %v1520
        %v1587 = vpop.f32.mrf.mxu0
        %v1588 = vadd.f32 0.0, %v1587
        %1589 = vmatmul.f32.gmra.mxu0 %v1523
        %v1590 = vpop.f32.mrf.mxu0
        %v1591 = vadd.f32 0.0, %v1590
        %1592 = vmatmul.f32.gmra.mxu0 %v1526
        %v1593 = vpop.f32.mrf.mxu0
        %v1594 = vadd.f32 0.0, %v1593
        %1595 = vmatmul.f32.gmra.mxu0 %v1529
        %v1596 = vpop.f32.mrf.mxu0
        %v1597 = vadd.f32 0.0, %v1596
        %1598 = vmatmul.f32.gmra.mxu0 %v1532
        %v1599 = vpop.f32.mrf.mxu0
        %v1600 = vadd.f32 0.0, %v1599
        %1601 = vmatmul.f32.gmra.mxu0 %v1535
        %v1602 = vpop.f32.mrf.mxu0
        %v1603 = vadd.f32 0.0, %v1602
        %1604 = vmatmul.f32.gmra.mxu0 %v1538
        %v1605 = vpop.f32.mrf.mxu0
        %v1606 = vadd.f32 0.0, %v1605
        %1607 = vmatmul.f32.gmra.mxu0 %v1541
        %v1608 = vpop.f32.mrf.mxu0
        %v1609 = vadd.f32 0.0, %v1608
        %1610 = vmatmul.f32.gmra.mxu0 %v1544
        %v1611 = vpop.f32.mrf.mxu0
        %v1612 = vadd.f32 0.0, %v1611
        %1613 = vmatmul.f32.gmra.mxu0 %v1547
        %v1614 = vpop.f32.mrf.mxu0
        %v1615 = vadd.f32 0.0, %v1614
        %1616 = vmatmul.f32.gmra.mxu0 %v1550
        %v1617 = vpop.f32.mrf.mxu0
        %v1618 = vadd.f32 0.0, %v1617
        %1619 = vmatmul.f32.gmra.mxu0 %v1553
        %v1620 = vpop.f32.mrf.mxu0
        %v1621 = vadd.f32 0.0, %v1620
        %1622 = vmatmul.f32.gmra.mxu0 %v1556
        %v1623 = vpop.f32.mrf.mxu0
        %v1624 = vadd.f32 0.0, %v1623
        %1625 = vmatmul.f32.gmra.mxu0 %v1559
        %v1626 = vpop.f32.mrf.mxu0
        %v1627 = vadd.f32 0.0, %v1626
        %1628 = vmatmul.f32.gmra.mxu0 %v1562
        %v1629 = vpop.f32.mrf.mxu0
        %v1630 = vadd.f32 0.0, %v1629
        %1631 = vmatmul.f32.gmra.mxu0 %v1565
        %v1632 = vpop.f32.mrf.mxu0
        %v1633 = vadd.f32 0.0, %v1632
        %1634 = vdwg.mxu0
        %v1635 = vadd.f32 %v1481, %v1588
        %v1636 = vadd.f32 %v1482, %v1591
        %v1637 = vadd.f32 %v1483, %v1594
        %v1638 = vadd.f32 %v1484, %v1597
        %v1639 = vadd.f32 %v1485, %v1600
        %v1640 = vadd.f32 %v1486, %v1603
        %v1641 = vadd.f32 %v1487, %v1606
        %v1642 = vadd.f32 %v1488, %v1609
        %v1643 = vadd.f32 %v1489, %v1612
        %v1644 = vadd.f32 %v1490, %v1615
        %v1645 = vadd.f32 %v1491, %v1618
        %v1646 = vadd.f32 %v1492, %v1621
        %v1647 = vadd.f32 %v1493, %v1624
        %v1648 = vadd.f32 %v1494, %v1627
        %v1649 = vadd.f32 %v1495, %v1630
        %v1650 = vadd.f32 %v1496, %v1633
        %v1651 = vmul.f32 %v1635, %v257
        %v1652 = vmul.f32 %v1636, %v257
        %v1653 = vmul.f32 %v1637, %v257
        %v1654 = vmul.f32 %v1638, %v257
        %v1655 = vmul.f32 %v1639, %v257
        %v1656 = vmul.f32 %v1640, %v257
        %v1657 = vmul.f32 %v1641, %v257
        %v1658 = vmul.f32 %v1642, %v257
        %v1659 = vmul.f32 %v1643, %v257
        %v1660 = vmul.f32 %v1644, %v257
        %v1661 = vmul.f32 %v1645, %v257
        %v1662 = vmul.f32 %v1646, %v257
        %v1663 = vmul.f32 %v1647, %v257
        %v1664 = vmul.f32 %v1648, %v257
        %v1665 = vmul.f32 %v1649, %v257
        %v1666 = vmul.f32 %v1650, %v257
        %v1667 = vsub.f32 0.0, %v1651
        %v1668 = vsub.f32 0.0, %v1652
        %v1669 = vsub.f32 0.0, %v1653
        %v1670 = vsub.f32 0.0, %v1654
        %v1671 = vsub.f32 0.0, %v1655
        %v1672 = vsub.f32 0.0, %v1656
        %v1673 = vsub.f32 0.0, %v1657
        %v1674 = vsub.f32 0.0, %v1658
        %v1675 = vsub.f32 0.0, %v1659
        %v1676 = vsub.f32 0.0, %v1660
        %v1677 = vsub.f32 0.0, %v1661
        %v1678 = vsub.f32 0.0, %v1662
        %v1679 = vsub.f32 0.0, %v1663
        %v1680 = vsub.f32 0.0, %v1664
        %v1681 = vsub.f32 0.0, %v1665
        %v1682 = vsub.f32 0.0, %v1666
        %v1683 = vmul.f32 %v1667, 1.442695
        %v1684 = vpow.pop %v1683
        %v1685 = vmul.f32 %v1668, 1.442695
        %v1686 = vpow.pop %v1685
        %v1687 = vmul.f32 %v1669, 1.442695
        %v1688 = vpow.pop %v1687
        %v1689 = vmul.f32 %v1670, 1.442695
        %v1690 = vpow.pop %v1689
        %v1691 = vmul.f32 %v1671, 1.442695
        %v1692 = vpow.pop %v1691
        %v1693 = vmul.f32 %v1672, 1.442695
        %v1694 = vpow.pop %v1693
        %v1695 = vmul.f32 %v1673, 1.442695
        %v1696 = vpow.pop %v1695
        %v1697 = vmul.f32 %v1674, 1.442695
        %v1698 = vpow.pop %v1697
        %v1699 = vmul.f32 %v1675, 1.442695
        %v1700 = vpow.pop %v1699
        %v1701 = vmul.f32 %v1676, 1.442695
        %v1702 = vpow.pop %v1701
        %v1703 = vmul.f32 %v1677, 1.442695
        %v1704 = vpow.pop %v1703
        %v1705 = vmul.f32 %v1678, 1.442695
        %v1706 = vpow.pop %v1705
        %v1707 = vmul.f32 %v1679, 1.442695
        %v1708 = vpow.pop %v1707
        %v1709 = vmul.f32 %v1680, 1.442695
        %v1710 = vpow.pop %v1709
        %v1711 = vmul.f32 %v1681, 1.442695
        %v1712 = vpow.pop %v1711
        %v1713 = vmul.f32 %v1682, 1.442695
        %v1714 = vpow.pop %v1713
        %v1715 = vadd.f32 %v1684, 1.0
        %v1716 = vadd.f32 %v1686, 1.0
        %v1717 = vadd.f32 %v1688, 1.0
        %v1718 = vadd.f32 %v1690, 1.0
        %v1719 = vadd.f32 %v1692, 1.0
        %v1720 = vadd.f32 %v1694, 1.0
        %v1721 = vadd.f32 %v1696, 1.0
        %v1722 = vadd.f32 %v1698, 1.0
        %v1723 = vadd.f32 %v1700, 1.0
        %v1724 = vadd.f32 %v1702, 1.0
        %v1725 = vadd.f32 %v1704, 1.0
        %v1726 = vadd.f32 %v1706, 1.0
        %v1727 = vadd.f32 %v1708, 1.0
        %v1728 = vadd.f32 %v1710, 1.0
        %v1729 = vadd.f32 %v1712, 1.0
        %v1730 = vadd.f32 %v1714, 1.0
        %v1731 = vrcp.pop %v1715
        %v1732 = vmul.f32 %v1715, %v1731
        %v1733 = vsub.f32 1.0, %v1732
        %v1734 = vmul.f32 %v1731, %v1733
        %v1735 = vadd.f32 %v1731, %v1734
        %vm1736 = vweird.f32 %v1715
        %vm1737 = vweird.f32 %v1731
        %vm1738 = vmor %vm1736, %vm1737
        %v1739 = vsel %vm1738, %v1731, %v1735
        %v1740 = vand.u32 2147483647, %v1715
        %vm1741 = vcmp.eq.f32.partialorder %v1740, 8.507059e+37
        %v1742 = vand.u32 %v1715, 2147483648
        %v1743 = vor.u32 1.1754944e-38, %v1742
        %v1744 = vsel %vm1741, %v1743, %v1739
        %v1745 = vmul.f32 1.0, %v1744
        %v1746 = vrcp.pop %v1716
        %v1747 = vmul.f32 %v1716, %v1746
        %v1748 = vsub.f32 1.0, %v1747
        %v1749 = vmul.f32 %v1746, %v1748
        %v1750 = vadd.f32 %v1746, %v1749
        %vm1751 = vweird.f32 %v1716
        %vm1752 = vweird.f32 %v1746
        %vm1753 = vmor %vm1751, %vm1752
        %v1754 = vsel %vm1753, %v1746, %v1750
        %v1755 = vand.u32 2147483647, %v1716
        %vm1756 = vcmp.eq.f32.partialorder %v1755, 8.507059e+37
        %v1757 = vand.u32 %v1716, 2147483648
        %v1758 = vor.u32 1.1754944e-38, %v1757
        %v1759 = vsel %vm1756, %v1758, %v1754
        %v1760 = vmul.f32 1.0, %v1759
        %v1761 = vrcp.pop %v1717
        %v1762 = vmul.f32 %v1717, %v1761
        %v1763 = vsub.f32 1.0, %v1762
        %v1764 = vmul.f32 %v1761, %v1763
        %v1765 = vadd.f32 %v1761, %v1764
        %vm1766 = vweird.f32 %v1717
        %vm1767 = vweird.f32 %v1761
        %vm1768 = vmor %vm1766, %vm1767
        %v1769 = vsel %vm1768, %v1761, %v1765
        %v1770 = vand.u32 2147483647, %v1717
        %vm1771 = vcmp.eq.f32.partialorder %v1770, 8.507059e+37
        %v1772 = vand.u32 %v1717, 2147483648
        %v1773 = vor.u32 1.1754944e-38, %v1772
        %v1774 = vsel %vm1771, %v1773, %v1769
        %v1775 = vmul.f32 1.0, %v1774
        %v1776 = vrcp.pop %v1718
        %v1777 = vmul.f32 %v1718, %v1776
        %v1778 = vsub.f32 1.0, %v1777
        %v1779 = vmul.f32 %v1776, %v1778
        %v1780 = vadd.f32 %v1776, %v1779
        %vm1781 = vweird.f32 %v1718
        %vm1782 = vweird.f32 %v1776
        %vm1783 = vmor %vm1781, %vm1782
        %v1784 = vsel %vm1783, %v1776, %v1780
        %v1785 = vand.u32 2147483647, %v1718
        %vm1786 = vcmp.eq.f32.partialorder %v1785, 8.507059e+37
        %v1787 = vand.u32 %v1718, 2147483648
        %v1788 = vor.u32 1.1754944e-38, %v1787
        %v1789 = vsel %vm1786, %v1788, %v1784
        %v1790 = vmul.f32 1.0, %v1789
        %v1791 = vrcp.pop %v1719
        %v1792 = vmul.f32 %v1719, %v1791
        %v1793 = vsub.f32 1.0, %v1792
        %v1794 = vmul.f32 %v1791, %v1793
        %v1795 = vadd.f32 %v1791, %v1794
        %vm1796 = vweird.f32 %v1719
        %vm1797 = vweird.f32 %v1791
        %vm1798 = vmor %vm1796, %vm1797
        %v1799 = vsel %vm1798, %v1791, %v1795
        %v1800 = vand.u32 2147483647, %v1719
        %vm1801 = vcmp.eq.f32.partialorder %v1800, 8.507059e+37
        %v1802 = vand.u32 %v1719, 2147483648
        %v1803 = vor.u32 1.1754944e-38, %v1802
        %v1804 = vsel %vm1801, %v1803, %v1799
        %v1805 = vmul.f32 1.0, %v1804
        %v1806 = vrcp.pop %v1720
        %v1807 = vmul.f32 %v1720, %v1806
        %v1808 = vsub.f32 1.0, %v1807
        %v1809 = vmul.f32 %v1806, %v1808
        %v1810 = vadd.f32 %v1806, %v1809
        %vm1811 = vweird.f32 %v1720
        %vm1812 = vweird.f32 %v1806
        %vm1813 = vmor %vm1811, %vm1812
        %v1814 = vsel %vm1813, %v1806, %v1810
        %v1815 = vand.u32 2147483647, %v1720
        %vm1816 = vcmp.eq.f32.partialorder %v1815, 8.507059e+37
        %v1817 = vand.u32 %v1720, 2147483648
        %v1818 = vor.u32 1.1754944e-38, %v1817
        %v1819 = vsel %vm1816, %v1818, %v1814
        %v1820 = vmul.f32 1.0, %v1819
        %v1821 = vrcp.pop %v1721
        %v1822 = vmul.f32 %v1721, %v1821
        %v1823 = vsub.f32 1.0, %v1822
        %v1824 = vmul.f32 %v1821, %v1823
        %v1825 = vadd.f32 %v1821, %v1824
        %vm1826 = vweird.f32 %v1721
        %vm1827 = vweird.f32 %v1821
        %vm1828 = vmor %vm1826, %vm1827
        %v1829 = vsel %vm1828, %v1821, %v1825
        %v1830 = vand.u32 2147483647, %v1721
        %vm1831 = vcmp.eq.f32.partialorder %v1830, 8.507059e+37
        %v1832 = vand.u32 %v1721, 2147483648
        %v1833 = vor.u32 1.1754944e-38, %v1832
        %v1834 = vsel %vm1831, %v1833, %v1829
        %v1835 = vmul.f32 1.0, %v1834
        %v1836 = vrcp.pop %v1722
        %v1837 = vmul.f32 %v1722, %v1836
        %v1838 = vsub.f32 1.0, %v1837
        %v1839 = vmul.f32 %v1836, %v1838
        %v1840 = vadd.f32 %v1836, %v1839
        %vm1841 = vweird.f32 %v1722
        %vm1842 = vweird.f32 %v1836
        %vm1843 = vmor %vm1841, %vm1842
        %v1844 = vsel %vm1843, %v1836, %v1840
        %v1845 = vand.u32 2147483647, %v1722
        %vm1846 = vcmp.eq.f32.partialorder %v1845, 8.507059e+37
        %v1847 = vand.u32 %v1722, 2147483648
        %v1848 = vor.u32 1.1754944e-38, %v1847
        %v1849 = vsel %vm1846, %v1848, %v1844
        %v1850 = vmul.f32 1.0, %v1849
        %v1851 = vrcp.pop %v1723
        %v1852 = vmul.f32 %v1723, %v1851
        %v1853 = vsub.f32 1.0, %v1852
        %v1854 = vmul.f32 %v1851, %v1853
        %v1855 = vadd.f32 %v1851, %v1854
        %vm1856 = vweird.f32 %v1723
        %vm1857 = vweird.f32 %v1851
        %vm1858 = vmor %vm1856, %vm1857
        %v1859 = vsel %vm1858, %v1851, %v1855
        %v1860 = vand.u32 2147483647, %v1723
        %vm1861 = vcmp.eq.f32.partialorder %v1860, 8.507059e+37
        %v1862 = vand.u32 %v1723, 2147483648
        %v1863 = vor.u32 1.1754944e-38, %v1862
        %v1864 = vsel %vm1861, %v1863, %v1859
        %v1865 = vmul.f32 1.0, %v1864
        %v1866 = vrcp.pop %v1724
        %v1867 = vmul.f32 %v1724, %v1866
        %v1868 = vsub.f32 1.0, %v1867
        %v1869 = vmul.f32 %v1866, %v1868
        %v1870 = vadd.f32 %v1866, %v1869
        %vm1871 = vweird.f32 %v1724
        %vm1872 = vweird.f32 %v1866
        %vm1873 = vmor %vm1871, %vm1872
        %v1874 = vsel %vm1873, %v1866, %v1870
        %v1875 = vand.u32 2147483647, %v1724
        %vm1876 = vcmp.eq.f32.partialorder %v1875, 8.507059e+37
        %v1877 = vand.u32 %v1724, 2147483648
        %v1878 = vor.u32 1.1754944e-38, %v1877
        %v1879 = vsel %vm1876, %v1878, %v1874
        %v1880 = vmul.f32 1.0, %v1879
        %v1881 = vrcp.pop %v1725
        %v1882 = vmul.f32 %v1725, %v1881
        %v1883 = vsub.f32 1.0, %v1882
        %v1884 = vmul.f32 %v1881, %v1883
        %v1885 = vadd.f32 %v1881, %v1884
        %vm1886 = vweird.f32 %v1725
        %vm1887 = vweird.f32 %v1881
        %vm1888 = vmor %vm1886, %vm1887
        %v1889 = vsel %vm1888, %v1881, %v1885
        %v1890 = vand.u32 2147483647, %v1725
        %vm1891 = vcmp.eq.f32.partialorder %v1890, 8.507059e+37
        %v1892 = vand.u32 %v1725, 2147483648
        %v1893 = vor.u32 1.1754944e-38, %v1892
        %v1894 = vsel %vm1891, %v1893, %v1889
        %v1895 = vmul.f32 1.0, %v1894
        %v1896 = vrcp.pop %v1726
        %v1897 = vmul.f32 %v1726, %v1896
        %v1898 = vsub.f32 1.0, %v1897
        %v1899 = vmul.f32 %v1896, %v1898
        %v1900 = vadd.f32 %v1896, %v1899
        %vm1901 = vweird.f32 %v1726
        %vm1902 = vweird.f32 %v1896
        %vm1903 = vmor %vm1901, %vm1902
        %v1904 = vsel %vm1903, %v1896, %v1900
        %v1905 = vand.u32 2147483647, %v1726
        %vm1906 = vcmp.eq.f32.partialorder %v1905, 8.507059e+37
        %v1907 = vand.u32 %v1726, 2147483648
        %v1908 = vor.u32 1.1754944e-38, %v1907
        %v1909 = vsel %vm1906, %v1908, %v1904
        %v1910 = vmul.f32 1.0, %v1909
        %v1911 = vrcp.pop %v1727
        %v1912 = vmul.f32 %v1727, %v1911
        %v1913 = vsub.f32 1.0, %v1912
        %v1914 = vmul.f32 %v1911, %v1913
        %v1915 = vadd.f32 %v1911, %v1914
        %vm1916 = vweird.f32 %v1727
        %vm1917 = vweird.f32 %v1911
        %vm1918 = vmor %vm1916, %vm1917
        %v1919 = vsel %vm1918, %v1911, %v1915
        %v1920 = vand.u32 2147483647, %v1727
        %vm1921 = vcmp.eq.f32.partialorder %v1920, 8.507059e+37
        %v1922 = vand.u32 %v1727, 2147483648
        %v1923 = vor.u32 1.1754944e-38, %v1922
        %v1924 = vsel %vm1921, %v1923, %v1919
        %v1925 = vmul.f32 1.0, %v1924
        %v1926 = vrcp.pop %v1728
        %v1927 = vmul.f32 %v1728, %v1926
        %v1928 = vsub.f32 1.0, %v1927
        %v1929 = vmul.f32 %v1926, %v1928
        %v1930 = vadd.f32 %v1926, %v1929
        %vm1931 = vweird.f32 %v1728
        %vm1932 = vweird.f32 %v1926
        %vm1933 = vmor %vm1931, %vm1932
        %v1934 = vsel %vm1933, %v1926, %v1930
        %v1935 = vand.u32 2147483647, %v1728
        %vm1936 = vcmp.eq.f32.partialorder %v1935, 8.507059e+37
        %v1937 = vand.u32 %v1728, 2147483648
        %v1938 = vor.u32 1.1754944e-38, %v1937
        %v1939 = vsel %vm1936, %v1938, %v1934
        %v1940 = vmul.f32 1.0, %v1939
        %v1941 = vrcp.pop %v1729
        %v1942 = vmul.f32 %v1729, %v1941
        %v1943 = vsub.f32 1.0, %v1942
        %v1944 = vmul.f32 %v1941, %v1943
        %v1945 = vadd.f32 %v1941, %v1944
        %vm1946 = vweird.f32 %v1729
        %vm1947 = vweird.f32 %v1941
        %vm1948 = vmor %vm1946, %vm1947
        %v1949 = vsel %vm1948, %v1941, %v1945
        %v1950 = vand.u32 2147483647, %v1729
        %vm1951 = vcmp.eq.f32.partialorder %v1950, 8.507059e+37
        %v1952 = vand.u32 %v1729, 2147483648
        %v1953 = vor.u32 1.1754944e-38, %v1952
        %v1954 = vsel %vm1951, %v1953, %v1949
        %v1955 = vmul.f32 1.0, %v1954
        %v1956 = vrcp.pop %v1730
        %v1957 = vmul.f32 %v1730, %v1956
        %v1958 = vsub.f32 1.0, %v1957
        %v1959 = vmul.f32 %v1956, %v1958
        %v1960 = vadd.f32 %v1956, %v1959
        %vm1961 = vweird.f32 %v1730
        %vm1962 = vweird.f32 %v1956
        %vm1963 = vmor %vm1961, %vm1962
        %v1964 = vsel %vm1963, %v1956, %v1960
        %v1965 = vand.u32 2147483647, %v1730
        %vm1966 = vcmp.eq.f32.partialorder %v1965, 8.507059e+37
        %v1967 = vand.u32 %v1730, 2147483648
        %v1968 = vor.u32 1.1754944e-38, %v1967
        %v1969 = vsel %vm1966, %v1968, %v1964
        %v1970 = vmul.f32 1.0, %v1969
        %v1971 = vmul.f32 %v1745, 2.0
        %v1972 = vmul.f32 %v1760, 2.0
        %v1973 = vmul.f32 %v1775, 2.0
        %v1974 = vmul.f32 %v1790, 2.0
        %v1975 = vmul.f32 %v1805, 2.0
        %v1976 = vmul.f32 %v1820, 2.0
        %v1977 = vmul.f32 %v1835, 2.0
        %v1978 = vmul.f32 %v1850, 2.0
        %v1979 = vmul.f32 %v1865, 2.0
        %v1980 = vmul.f32 %v1880, 2.0
        %v1981 = vmul.f32 %v1895, 2.0
        %v1982 = vmul.f32 %v1910, 2.0
        %v1983 = vmul.f32 %v1925, 2.0
        %v1984 = vmul.f32 %v1940, 2.0
        %v1985 = vmul.f32 %v1955, 2.0
        %v1986 = vmul.f32 %v1970, 2.0
        %v1987 = vsub.f32 %v1971, 1.0
        %v1988 = vsub.f32 %v1972, 1.0
        %v1989 = vsub.f32 %v1973, 1.0
        %v1990 = vsub.f32 %v1974, 1.0
        %v1991 = vsub.f32 %v1975, 1.0
        %v1992 = vsub.f32 %v1976, 1.0
        %v1993 = vsub.f32 %v1977, 1.0
        %v1994 = vsub.f32 %v1978, 1.0
        %v1995 = vsub.f32 %v1979, 1.0
        %v1996 = vsub.f32 %v1980, 1.0
        %v1997 = vsub.f32 %v1981, 1.0
        %v1998 = vsub.f32 %v1982, 1.0
        %v1999 = vsub.f32 %v1983, 1.0
        %v2000 = vsub.f32 %v1984, 1.0
        %v2001 = vsub.f32 %v1985, 1.0
        %v2002 = vsub.f32 %v1986, 1.0
        %v2003 = vld [vmem:[%s253] sm:$0xff]
        %v2004 = vld [vmem:[%s253 + $0x8] sm:$0xff]
        %v2005 = vld [vmem:[%s253 + $0x10] sm:$0xff]
        %v2006 = vld [vmem:[%s253 + $0x18] sm:$0xff]
        %v2007 = vld [vmem:[%s253 + $0x20] sm:$0xff]
        %v2008 = vld [vmem:[%s253 + $0x28] sm:$0xff]
        %v2009 = vld [vmem:[%s253 + $0x30] sm:$0xff]
        %v2010 = vld [vmem:[%s253 + $0x38] sm:$0xff]
        %v2011 = vld [vmem:[%s253 + $0x40] sm:$0xff]
        %v2012 = vld [vmem:[%s253 + $0x48] sm:$0xff]
        %v2013 = vld [vmem:[%s253 + $0x50] sm:$0xff]
        %v2014 = vld [vmem:[%s253 + $0x58] sm:$0xff]
        %v2015 = vld [vmem:[%s253 + $0x60] sm:$0xff]
        %v2016 = vld [vmem:[%s253 + $0x68] sm:$0xff]
        %v2017 = vld [vmem:[%s253 + $0x70] sm:$0xff]
        %v2018 = vld [vmem:[%s253 + $0x78] sm:$0xff]
        %2035 = vrot.lane.b32.xlu0 %v2003, 32
        %v2036 = vpop.permute.xlu0 %2035
        %2037 = vrot.lane.b32.xlu0 %v2004, 32
        %v2038 = vpop.permute.xlu0 %2037
        %2039 = vrot.lane.b32.xlu0 %v2005, 32
        %v2040 = vpop.permute.xlu0 %2039
        %2041 = vrot.lane.b32.xlu0 %v2006, 32
        %v2042 = vpop.permute.xlu0 %2041
        %2043 = vrot.lane.b32.xlu0 %v2007, 32
        %v2044 = vpop.permute.xlu0 %2043
        %2045 = vrot.lane.b32.xlu0 %v2008, 32
        %v2046 = vpop.permute.xlu0 %2045
        %2047 = vrot.lane.b32.xlu0 %v2009, 32
        %v2048 = vpop.permute.xlu0 %2047
        %2049 = vrot.lane.b32.xlu0 %v2010, 32
        %v2050 = vpop.permute.xlu0 %2049
        %2051 = vrot.lane.b32.xlu0 %v2011, 32
        %v2052 = vpop.permute.xlu0 %2051
        %2053 = vrot.lane.b32.xlu0 %v2012, 32
        %v2054 = vpop.permute.xlu0 %2053
        %2055 = vrot.lane.b32.xlu0 %v2013, 32
        %v2056 = vpop.permute.xlu0 %2055
        %2057 = vrot.lane.b32.xlu0 %v2014, 32
        %v2058 = vpop.permute.xlu0 %2057
        %2059 = vrot.lane.b32.xlu0 %v2015, 32
        %v2060 = vpop.permute.xlu0 %2059
        %2061 = vrot.lane.b32.xlu0 %v2016, 32
        %v2062 = vpop.permute.xlu0 %2061
        %2063 = vrot.lane.b32.xlu0 %v2017, 32
        %v2064 = vpop.permute.xlu0 %2063
        %2065 = vrot.lane.b32.xlu0 %v2018, 32
        %v2066 = vpop.permute.xlu0 %2065
        %v2083 = vmul.f32 %v1745, %v2036
        %v2084 = vmul.f32 %v1760, %v2038
        %v2085 = vmul.f32 %v1775, %v2040
        %v2086 = vmul.f32 %v1790, %v2042
        %v2087 = vmul.f32 %v1805, %v2044
        %v2088 = vmul.f32 %v1820, %v2046
        %v2089 = vmul.f32 %v1835, %v2048
        %v2090 = vmul.f32 %v1850, %v2050
        %v2091 = vmul.f32 %v1865, %v2052
        %v2092 = vmul.f32 %v1880, %v2054
        %v2093 = vmul.f32 %v1895, %v2056
        %v2094 = vmul.f32 %v1910, %v2058
        %v2095 = vmul.f32 %v1925, %v2060
        %v2096 = vmul.f32 %v1940, %v2062
        %v2097 = vmul.f32 %v1955, %v2064
        %v2098 = vmul.f32 %v1970, %v2066
        %2115 = vrot.lane.b32.xlu0 %v1987, 32
        %v2116 = vpop.permute.xlu0 %2115
        %2117 = vrot.lane.b32.xlu0 %v1988, 32
        %v2118 = vpop.permute.xlu0 %2117
        %2119 = vrot.lane.b32.xlu0 %v1989, 32
        %v2120 = vpop.permute.xlu0 %2119
        %2121 = vrot.lane.b32.xlu0 %v1990, 32
        %v2122 = vpop.permute.xlu0 %2121
        %2123 = vrot.lane.b32.xlu0 %v1991, 32
        %v2124 = vpop.permute.xlu0 %2123
        %2125 = vrot.lane.b32.xlu0 %v1992, 32
        %v2126 = vpop.permute.xlu0 %2125
        %2127 = vrot.lane.b32.xlu0 %v1993, 32
        %v2128 = vpop.permute.xlu0 %2127
        %2129 = vrot.lane.b32.xlu0 %v1994, 32
        %v2130 = vpop.permute.xlu0 %2129
        %2131 = vrot.lane.b32.xlu0 %v1995, 32
        %v2132 = vpop.permute.xlu0 %2131
        %2133 = vrot.lane.b32.xlu0 %v1996, 32
        %v2134 = vpop.permute.xlu0 %2133
        %2135 = vrot.lane.b32.xlu0 %v1997, 32
        %v2136 = vpop.permute.xlu0 %2135
        %2137 = vrot.lane.b32.xlu0 %v1998, 32
        %v2138 = vpop.permute.xlu0 %2137
        %2139 = vrot.lane.b32.xlu0 %v1999, 32
        %v2140 = vpop.permute.xlu0 %2139
        %2141 = vrot.lane.b32.xlu0 %v2000, 32
        %v2142 = vpop.permute.xlu0 %2141
        %2143 = vrot.lane.b32.xlu0 %v2001, 32
        %v2144 = vpop.permute.xlu0 %2143
        %2145 = vrot.lane.b32.xlu0 %v2002, 32
        %v2146 = vpop.permute.xlu0 %2145
        %v2163 = vmul.f32 %v1745, %v2116
        %v2164 = vmul.f32 %v1760, %v2118
        %v2165 = vmul.f32 %v1775, %v2120
        %v2166 = vmul.f32 %v1790, %v2122
        %v2167 = vmul.f32 %v1805, %v2124
        %v2168 = vmul.f32 %v1820, %v2126
        %v2169 = vmul.f32 %v1835, %v2128
        %v2170 = vmul.f32 %v1850, %v2130
        %v2171 = vmul.f32 %v1865, %v2132
        %v2172 = vmul.f32 %v1880, %v2134
        %v2173 = vmul.f32 %v1895, %v2136
        %v2174 = vmul.f32 %v1910, %v2138
        %v2175 = vmul.f32 %v1925, %v2140
        %v2176 = vmul.f32 %v1940, %v2142
        %v2177 = vmul.f32 %v1955, %v2144
        %v2178 = vmul.f32 %v1970, %v2146
        %2195 = vrot.lane.b32.xlu0 %v2163, 32
        %v2196 = vpop.permute.xlu0 %2195
        %2197 = vrot.lane.b32.xlu0 %v2164, 32
        %v2198 = vpop.permute.xlu0 %2197
        %2199 = vrot.lane.b32.xlu0 %v2165, 32
        %v2200 = vpop.permute.xlu0 %2199
        %2201 = vrot.lane.b32.xlu0 %v2166, 32
        %v2202 = vpop.permute.xlu0 %2201
        %2203 = vrot.lane.b32.xlu0 %v2167, 32
        %v2204 = vpop.permute.xlu0 %2203
        %2205 = vrot.lane.b32.xlu0 %v2168, 32
        %v2206 = vpop.permute.xlu0 %2205
        %2207 = vrot.lane.b32.xlu0 %v2169, 32
        %v2208 = vpop.permute.xlu0 %2207
        %2209 = vrot.lane.b32.xlu0 %v2170, 32
        %v2210 = vpop.permute.xlu0 %2209
        %2211 = vrot.lane.b32.xlu0 %v2171, 32
        %v2212 = vpop.permute.xlu0 %2211
        %2213 = vrot.lane.b32.xlu0 %v2172, 32
        %v2214 = vpop.permute.xlu0 %2213
        %2215 = vrot.lane.b32.xlu0 %v2173, 32
        %v2216 = vpop.permute.xlu0 %2215
        %2217 = vrot.lane.b32.xlu0 %v2174, 32
        %v2218 = vpop.permute.xlu0 %2217
        %2219 = vrot.lane.b32.xlu0 %v2175, 32
        %v2220 = vpop.permute.xlu0 %2219
        %2221 = vrot.lane.b32.xlu0 %v2176, 32
        %v2222 = vpop.permute.xlu0 %2221
        %2223 = vrot.lane.b32.xlu0 %v2177, 32
        %v2224 = vpop.permute.xlu0 %2223
        %2225 = vrot.lane.b32.xlu0 %v2178, 32
        %v2226 = vpop.permute.xlu0 %2225
        %v2243 = vadd.f32 %v2083, %v2196
        %v2244 = vadd.f32 %v2084, %v2198
        %v2245 = vadd.f32 %v2085, %v2200
        %v2246 = vadd.f32 %v2086, %v2202
        %v2247 = vadd.f32 %v2087, %v2204
        %v2248 = vadd.f32 %v2088, %v2206
        %v2249 = vadd.f32 %v2089, %v2208
        %v2250 = vadd.f32 %v2090, %v2210
        %v2251 = vadd.f32 %v2091, %v2212
        %v2252 = vadd.f32 %v2092, %v2214
        %v2253 = vadd.f32 %v2093, %v2216
        %v2254 = vadd.f32 %v2094, %v2218
        %v2255 = vadd.f32 %v2095, %v2220
        %v2256 = vadd.f32 %v2096, %v2222
        %v2257 = vadd.f32 %v2097, %v2224
        %v2258 = vadd.f32 %v2098, %v2226
        %v2259 = vtanh.pop %v2243
        %v2260 = vtanh.pop %v2244
        %v2261 = vtanh.pop %v2245
        %v2262 = vtanh.pop %v2246
        %v2263 = vtanh.pop %v2247
        %v2264 = vtanh.pop %v2248
        %v2265 = vtanh.pop %v2249
        %v2266 = vtanh.pop %v2250
        %v2267 = vtanh.pop %v2251
        %v2268 = vtanh.pop %v2252
        %v2269 = vtanh.pop %v2253
        %v2270 = vtanh.pop %v2254
        %v2271 = vtanh.pop %v2255
        %v2272 = vtanh.pop %v2256
        %v2273 = vtanh.pop %v2257
        %v2274 = vtanh.pop %v2258
        %2291 = vrot.lane.b32.xlu0 %v2259, 32
        %v2292 = vpop.permute.xlu0 %2291
        %2293 = vrot.lane.b32.xlu0 %v2260, 32
        %v2294 = vpop.permute.xlu0 %2293
        %2295 = vrot.lane.b32.xlu0 %v2261, 32
        %v2296 = vpop.permute.xlu0 %2295
        %2297 = vrot.lane.b32.xlu0 %v2262, 32
        %v2298 = vpop.permute.xlu0 %2297
        %2299 = vrot.lane.b32.xlu0 %v2263, 32
        %v2300 = vpop.permute.xlu0 %2299
        %2301 = vrot.lane.b32.xlu0 %v2264, 32
        %v2302 = vpop.permute.xlu0 %2301
        %2303 = vrot.lane.b32.xlu0 %v2265, 32
        %v2304 = vpop.permute.xlu0 %2303
        %2305 = vrot.lane.b32.xlu0 %v2266, 32
        %v2306 = vpop.permute.xlu0 %2305
        %2307 = vrot.lane.b32.xlu0 %v2267, 32
        %v2308 = vpop.permute.xlu0 %2307
        %2309 = vrot.lane.b32.xlu0 %v2268, 32
        %v2310 = vpop.permute.xlu0 %2309
        %2311 = vrot.lane.b32.xlu0 %v2269, 32
        %v2312 = vpop.permute.xlu0 %2311
        %2313 = vrot.lane.b32.xlu0 %v2270, 32
        %v2314 = vpop.permute.xlu0 %2313
        %2315 = vrot.lane.b32.xlu0 %v2271, 32
        %v2316 = vpop.permute.xlu0 %2315
        %2317 = vrot.lane.b32.xlu0 %v2272, 32
        %v2318 = vpop.permute.xlu0 %2317
        %2319 = vrot.lane.b32.xlu0 %v2273, 32
        %v2320 = vpop.permute.xlu0 %2319
        %2321 = vrot.lane.b32.xlu0 %v2274, 32
        %v2322 = vpop.permute.xlu0 %2321
        %v2339 = vmul.f32 %v1745, %v2292
        %v2340 = vmul.f32 %v1760, %v2294
        %v2341 = vmul.f32 %v1775, %v2296
        %v2342 = vmul.f32 %v1790, %v2298
        %v2343 = vmul.f32 %v1805, %v2300
        %v2344 = vmul.f32 %v1820, %v2302
        %v2345 = vmul.f32 %v1835, %v2304
        %v2346 = vmul.f32 %v1850, %v2306
        %v2347 = vmul.f32 %v1865, %v2308
        %v2348 = vmul.f32 %v1880, %v2310
        %v2349 = vmul.f32 %v1895, %v2312
        %v2350 = vmul.f32 %v1910, %v2314
        %v2351 = vmul.f32 %v1925, %v2316
        %v2352 = vmul.f32 %v1940, %v2318
        %v2353 = vmul.f32 %v1955, %v2320
        %v2354 = vmul.f32 %v1970, %v2322
        %2371 = vrot.lane.b32.xlu0 %v2339, 64
        %v2372 = vpop.permute.xlu0 %2371
        %2373 = vrot.lane.b32.xlu0 %v2340, 64
        %v2374 = vpop.permute.xlu0 %2373
        %2375 = vrot.lane.b32.xlu0 %v2341, 64
        %v2376 = vpop.permute.xlu0 %2375
        %2377 = vrot.lane.b32.xlu0 %v2342, 64
        %v2378 = vpop.permute.xlu0 %2377
        %2379 = vrot.lane.b32.xlu0 %v2343, 64
        %v2380 = vpop.permute.xlu0 %2379
        %2381 = vrot.lane.b32.xlu0 %v2344, 64
        %v2382 = vpop.permute.xlu0 %2381
        %2383 = vrot.lane.b32.xlu0 %v2345, 64
        %v2384 = vpop.permute.xlu0 %2383
        %2385 = vrot.lane.b32.xlu0 %v2346, 64
        %v2386 = vpop.permute.xlu0 %2385
        %2387 = vrot.lane.b32.xlu0 %v2347, 64
        %v2388 = vpop.permute.xlu0 %2387
        %2389 = vrot.lane.b32.xlu0 %v2348, 64
        %v2390 = vpop.permute.xlu0 %2389
        %2391 = vrot.lane.b32.xlu0 %v2349, 64
        %v2392 = vpop.permute.xlu0 %2391
        %2393 = vrot.lane.b32.xlu0 %v2350, 64
        %v2394 = vpop.permute.xlu0 %2393
        %2395 = vrot.lane.b32.xlu0 %v2351, 64
        %v2396 = vpop.permute.xlu0 %2395
        %2397 = vrot.lane.b32.xlu0 %v2352, 64
        %v2398 = vpop.permute.xlu0 %2397
        %2399 = vrot.lane.b32.xlu0 %v2353, 64
        %v2400 = vpop.permute.xlu0 %2399
        %2401 = vrot.lane.b32.xlu0 %v2354, 64
        %v2402 = vpop.permute.xlu0 %2401
        %vm2419 = vcmask 261120
        %2420 = vst.msk [vmem:[%s236] sm:$0xff] %vm2419, %v2372
        %2421 = vst.msk [vmem:[%s236 + $0x8] sm:$0xff] %vm2419, %v2374
        %2422 = vst.msk [vmem:[%s236 + $0x10] sm:$0xff] %vm2419, %v2376
        %2423 = vst.msk [vmem:[%s236 + $0x18] sm:$0xff] %vm2419, %v2378
        %2424 = vst.msk [vmem:[%s236 + $0x20] sm:$0xff] %vm2419, %v2380
        %2425 = vst.msk [vmem:[%s236 + $0x28] sm:$0xff] %vm2419, %v2382
        %2426 = vst.msk [vmem:[%s236 + $0x30] sm:$0xff] %vm2419, %v2384
        %2427 = vst.msk [vmem:[%s236 + $0x38] sm:$0xff] %vm2419, %v2386
        %2428 = vst.msk [vmem:[%s236 + $0x40] sm:$0xff] %vm2419, %v2388
        %2429 = vst.msk [vmem:[%s236 + $0x48] sm:$0xff] %vm2419, %v2390
        %2430 = vst.msk [vmem:[%s236 + $0x50] sm:$0xff] %vm2419, %v2392
        %2431 = vst.msk [vmem:[%s236 + $0x58] sm:$0xff] %vm2419, %v2394
        %2432 = vst.msk [vmem:[%s236 + $0x60] sm:$0xff] %vm2419, %v2396
        %2433 = vst.msk [vmem:[%s236 + $0x68] sm:$0xff] %vm2419, %v2398
        %2434 = vst.msk [vmem:[%s236 + $0x70] sm:$0xff] %vm2419, %v2400
        %2435 = vst.msk [vmem:[%s236 + $0x78] sm:$0xff] %vm2419, %v2402
        %2452 = vrot.lane.b32.xlu0 %v2243, 96
        %v2453 = vpop.permute.xlu0 %2452
        %2454 = vrot.lane.b32.xlu0 %v2244, 96
        %v2455 = vpop.permute.xlu0 %2454
        %2456 = vrot.lane.b32.xlu0 %v2245, 96
        %v2457 = vpop.permute.xlu0 %2456
        %2458 = vrot.lane.b32.xlu0 %v2246, 96
        %v2459 = vpop.permute.xlu0 %2458
        %2460 = vrot.lane.b32.xlu0 %v2247, 96
        %v2461 = vpop.permute.xlu0 %2460
        %2462 = vrot.lane.b32.xlu0 %v2248, 96
        %v2463 = vpop.permute.xlu0 %2462
        %2464 = vrot.lane.b32.xlu0 %v2249, 96
        %v2465 = vpop.permute.xlu0 %2464
        %2466 = vrot.lane.b32.xlu0 %v2250, 96
        %v2467 = vpop.permute.xlu0 %2466
        %2468 = vrot.lane.b32.xlu0 %v2251, 96
        %v2469 = vpop.permute.xlu0 %2468
        %2470 = vrot.lane.b32.xlu0 %v2252, 96
        %v2471 = vpop.permute.xlu0 %2470
        %2472 = vrot.lane.b32.xlu0 %v2253, 96
        %v2473 = vpop.permute.xlu0 %2472
        %2474 = vrot.lane.b32.xlu0 %v2254, 96
        %v2475 = vpop.permute.xlu0 %2474
        %2476 = vrot.lane.b32.xlu0 %v2255, 96
        %v2477 = vpop.permute.xlu0 %2476
        %2478 = vrot.lane.b32.xlu0 %v2256, 96
        %v2479 = vpop.permute.xlu0 %2478
        %2480 = vrot.lane.b32.xlu0 %v2257, 96
        %v2481 = vpop.permute.xlu0 %2480
        %2482 = vrot.lane.b32.xlu0 %v2258, 96
        %v2483 = vpop.permute.xlu0 %2482
        %2500 = vst.msk [vmem:[%s243] sm:$0xff] %vm2419, %v2453
        %2501 = vst.msk [vmem:[%s243 + $0x8] sm:$0xff] %vm2419, %v2455
        %2502 = vst.msk [vmem:[%s243 + $0x10] sm:$0xff] %vm2419, %v2457
        %2503 = vst.msk [vmem:[%s243 + $0x18] sm:$0xff] %vm2419, %v2459
        %2504 = vst.msk [vmem:[%s243 + $0x20] sm:$0xff] %vm2419, %v2461
        %2505 = vst.msk [vmem:[%s243 + $0x28] sm:$0xff] %vm2419, %v2463
        %2506 = vst.msk [vmem:[%s243 + $0x30] sm:$0xff] %vm2419, %v2465
        %2507 = vst.msk [vmem:[%s243 + $0x38] sm:$0xff] %vm2419, %v2467
        %2508 = vst.msk [vmem:[%s243 + $0x40] sm:$0xff] %vm2419, %v2469
        %2509 = vst.msk [vmem:[%s243 + $0x48] sm:$0xff] %vm2419, %v2471
        %2510 = vst.msk [vmem:[%s243 + $0x50] sm:$0xff] %vm2419, %v2473
        %2511 = vst.msk [vmem:[%s243 + $0x58] sm:$0xff] %vm2419, %v2475
        %2512 = vst.msk [vmem:[%s243 + $0x60] sm:$0xff] %vm2419, %v2477
        %2513 = vst.msk [vmem:[%s243 + $0x68] sm:$0xff] %vm2419, %v2479
        %2514 = vst.msk [vmem:[%s243 + $0x70] sm:$0xff] %vm2419, %v2481
        %2515 = vst.msk [vmem:[%s243 + $0x78] sm:$0xff] %vm2419, %v2483
        %v2516 = vld [vmem:[%s3] sm:$0x1]
        %v2518 = vperm.slane %v2516, 0
        %s2520 = scalar_lea.vmem %s248, 192
        %v2521 = vld [vmem:[%s2520] sm:$0xff]
        %v2522 = vld [vmem:[%s2520 + $0x8] sm:$0xff]
        %v2523 = vld [vmem:[%s2520 + $0x18] sm:$0xff]
        %v2524 = vld [vmem:[%s2520 + $0x20] sm:$0xff]
        %v2525 = vld [vmem:[%s2520 + $0x30] sm:$0xff]
        %v2526 = vld [vmem:[%s2520 + $0x38] sm:$0xff]
        %v2527 = vld [vmem:[%s2520 + $0x48] sm:$0xff]
        %v2528 = vld [vmem:[%s2520 + $0x50] sm:$0xff]
        %v2529 = vld [vmem:[%s2520 + $0x60] sm:$0xff]
        %v2530 = vld [vmem:[%s2520 + $0x68] sm:$0xff]
        %v2531 = vld [vmem:[%s2520 + $0x78] sm:$0xff]
        %v2532 = vld [vmem:[%s2520 + $0x80] sm:$0xff]
        %v2533 = vld [vmem:[%s2520 + $0x90] sm:$0xff]
        %v2534 = vld [vmem:[%s2520 + $0x98] sm:$0xff]
        %v2535 = vld [vmem:[%s2520 + $0xa8] sm:$0xff]
        %v2536 = vld [vmem:[%s2520 + $0xb0] sm:$0xff]
        %v2537 = vld [vmem:[%s2] sm:$0xff]
        %v2538 = vld [vmem:[%s2 + $0x8] sm:$0xff]
        %v2539 = vld [vmem:[%s2 + $0x10] sm:$0xff]
        %v2540 = vld [vmem:[%s2 + $0x18] sm:$0xff]
        %v2541 = vld [vmem:[%s2 + $0x20] sm:$0xf]
        %v2543 = vsel %vm283, %v2521, 0
        %v2546 = vsel %vm283, %v2522, 0
        %v2549 = vsel %vm283, %v2523, 0
        %v2552 = vsel %vm283, %v2524, 0
        %v2555 = vsel %vm283, %v2525, 0
        %v2558 = vsel %vm283, %v2526, 0
        %v2561 = vsel %vm283, %v2527, 0
        %v2564 = vsel %vm283, %v2528, 0
        %v2567 = vsel %vm283, %v2529, 0
        %v2570 = vsel %vm283, %v2530, 0
        %v2573 = vsel %vm283, %v2531, 0
        %v2576 = vsel %vm283, %v2532, 0
        %v2579 = vsel %vm283, %v2533, 0
        %v2582 = vsel %vm283, %v2534, 0
        %v2585 = vsel %vm283, %v2535, 0
        %v2588 = vsel %vm283, %v2536, 0
        %v2591 = vsel %vm332, %v2541, 0
        %2593 = vmatpush.msra.mxu0 0.0
        %2594 = vmatpush.msra.mxu0 0.0
        %2595 = vmatpush.msra.mxu0 0.0
        %2596 = vmatpush.msra.mxu0 0.0
        %2597 = vmatpush.msra.mxu0 0.0
        %2598 = vmatpush.msra.mxu0 0.0
        %2599 = vmatpush.msra.mxu0 0.0
        %2600 = vmatpush.msra.mxu0 0.0
        %2601 = vmatpush.msra.mxu0 0.0
        %2602 = vmatpush.msra.mxu0 0.0
        %2603 = vmatpush.msra.mxu0 0.0
        %2604 = vmatpush.msra.mxu0 %v2591
        %2605 = vmatpush.msra.mxu0 %v2540
        %2606 = vmatpush.msra.mxu0 %v2539
        %2607 = vmatpush.msra.mxu0 %v2538
        %2608 = vmatpush.msra.mxu0 %v2537
        %2609 = vmatmul.f32.gmra.mxu0 %v2543
        %v2610 = vpop.f32.mrf.mxu0
        %v2611 = vadd.f32 0.0, %v2610
        %2612 = vmatmul.f32.gmra.mxu0 %v2546
        %v2613 = vpop.f32.mrf.mxu0
        %v2614 = vadd.f32 0.0, %v2613
        %2615 = vmatmul.f32.gmra.mxu0 %v2549
        %v2616 = vpop.f32.mrf.mxu0
        %v2617 = vadd.f32 0.0, %v2616
        %2618 = vmatmul.f32.gmra.mxu0 %v2552
        %v2619 = vpop.f32.mrf.mxu0
        %v2620 = vadd.f32 0.0, %v2619
        %2621 = vmatmul.f32.gmra.mxu0 %v2555
        %v2622 = vpop.f32.mrf.mxu0
        %v2623 = vadd.f32 0.0, %v2622
        %2624 = vmatmul.f32.gmra.mxu0 %v2558
        %v2625 = vpop.f32.mrf.mxu0
        %v2626 = vadd.f32 0.0, %v2625
        %2627 = vmatmul.f32.gmra.mxu0 %v2561
        %v2628 = vpop.f32.mrf.mxu0
        %v2629 = vadd.f32 0.0, %v2628
        %2630 = vmatmul.f32.gmra.mxu0 %v2564
        %v2631 = vpop.f32.mrf.mxu0
        %v2632 = vadd.f32 0.0, %v2631
        %2633 = vmatmul.f32.gmra.mxu0 %v2567
        %v2634 = vpop.f32.mrf.mxu0
        %v2635 = vadd.f32 0.0, %v2634
        %2636 = vmatmul.f32.gmra.mxu0 %v2570
        %v2637 = vpop.f32.mrf.mxu0
        %v2638 = vadd.f32 0.0, %v2637
        %2639 = vmatmul.f32.gmra.mxu0 %v2573
        %v2640 = vpop.f32.mrf.mxu0
        %v2641 = vadd.f32 0.0, %v2640
        %2642 = vmatmul.f32.gmra.mxu0 %v2576
        %v2643 = vpop.f32.mrf.mxu0
        %v2644 = vadd.f32 0.0, %v2643
        %2645 = vmatmul.f32.gmra.mxu0 %v2579
        %v2646 = vpop.f32.mrf.mxu0
        %v2647 = vadd.f32 0.0, %v2646
        %2648 = vmatmul.f32.gmra.mxu0 %v2582
        %v2649 = vpop.f32.mrf.mxu0
        %v2650 = vadd.f32 0.0, %v2649
        %2651 = vmatmul.f32.gmra.mxu0 %v2585
        %v2652 = vpop.f32.mrf.mxu0
        %v2653 = vadd.f32 0.0, %v2652
        %2654 = vmatmul.f32.gmra.mxu0 %v2588
        %v2655 = vpop.f32.mrf.mxu0
        %v2656 = vadd.f32 0.0, %v2655
        %2657 = vdwg.mxu0
        %v2658 = vadd.f32 %v2518, %v2611
        %v2659 = vadd.f32 %v2518, %v2614
        %v2660 = vadd.f32 %v2518, %v2617
        %v2661 = vadd.f32 %v2518, %v2620
        %v2662 = vadd.f32 %v2518, %v2623
        %v2663 = vadd.f32 %v2518, %v2626
        %v2664 = vadd.f32 %v2518, %v2629
        %v2665 = vadd.f32 %v2518, %v2632
        %v2666 = vadd.f32 %v2518, %v2635
        %v2667 = vadd.f32 %v2518, %v2638
        %v2668 = vadd.f32 %v2518, %v2641
        %v2669 = vadd.f32 %v2518, %v2644
        %v2670 = vadd.f32 %v2518, %v2647
        %v2671 = vadd.f32 %v2518, %v2650
        %v2672 = vadd.f32 %v2518, %v2653
        %v2673 = vadd.f32 %v2518, %v2656
        %v2674 = vld [vmem:[%s2520 + $0x1] sm:$0xff]
        %v2675 = vld [vmem:[%s2520 + $0x9] sm:$0xff]
        %v2676 = vld [vmem:[%s2520 + $0x19] sm:$0xff]
        %v2677 = vld [vmem:[%s2520 + $0x21] sm:$0xff]
        %v2678 = vld [vmem:[%s2520 + $0x31] sm:$0xff]
        %v2679 = vld [vmem:[%s2520 + $0x39] sm:$0xff]
        %v2680 = vld [vmem:[%s2520 + $0x49] sm:$0xff]
        %v2681 = vld [vmem:[%s2520 + $0x51] sm:$0xff]
        %v2682 = vld [vmem:[%s2520 + $0x61] sm:$0xff]
        %v2683 = vld [vmem:[%s2520 + $0x69] sm:$0xff]
        %v2684 = vld [vmem:[%s2520 + $0x79] sm:$0xff]
        %v2685 = vld [vmem:[%s2520 + $0x81] sm:$0xff]
        %v2686 = vld [vmem:[%s2520 + $0x91] sm:$0xff]
        %v2687 = vld [vmem:[%s2520 + $0x99] sm:$0xff]
        %v2688 = vld [vmem:[%s2520 + $0xa9] sm:$0xff]
        %v2689 = vld [vmem:[%s2520 + $0xb1] sm:$0xff]
        %v2690 = vld [vmem:[%s433] sm:$0xff]
        %v2691 = vld [vmem:[%s433 + $0x8] sm:$0xff]
        %v2692 = vld [vmem:[%s433 + $0x10] sm:$0xff]
        %v2693 = vld [vmem:[%s433 + $0x18] sm:$0xff]
        %v2694 = vld [vmem:[%s433 + $0x20] sm:$0xf]
        %v2696 = vsel %vm283, %v2674, 0
        %v2699 = vsel %vm283, %v2675, 0
        %v2702 = vsel %vm283, %v2676, 0
        %v2705 = vsel %vm283, %v2677, 0
        %v2708 = vsel %vm283, %v2678, 0
        %v2711 = vsel %vm283, %v2679, 0
        %v2714 = vsel %vm283, %v2680, 0
        %v2717 = vsel %vm283, %v2681, 0
        %v2720 = vsel %vm283, %v2682, 0
        %v2723 = vsel %vm283, %v2683, 0
        %v2726 = vsel %vm283, %v2684, 0
        %v2729 = vsel %vm283, %v2685, 0
        %v2732 = vsel %vm283, %v2686, 0
        %v2735 = vsel %vm283, %v2687, 0
        %v2738 = vsel %vm283, %v2688, 0
        %v2741 = vsel %vm283, %v2689, 0
        %v2744 = vsel %vm332, %v2694, 0
        %2746 = vmatpush.msra.mxu0 0.0
        %2747 = vmatpush.msra.mxu0 0.0
        %2748 = vmatpush.msra.mxu0 0.0
        %2749 = vmatpush.msra.mxu0 0.0
        %2750 = vmatpush.msra.mxu0 0.0
        %2751 = vmatpush.msra.mxu0 0.0
        %2752 = vmatpush.msra.mxu0 0.0
        %2753 = vmatpush.msra.mxu0 0.0
        %2754 = vmatpush.msra.mxu0 0.0
        %2755 = vmatpush.msra.mxu0 0.0
        %2756 = vmatpush.msra.mxu0 0.0
        %2757 = vmatpush.msra.mxu0 %v2744
        %2758 = vmatpush.msra.mxu0 %v2693
        %2759 = vmatpush.msra.mxu0 %v2692
        %2760 = vmatpush.msra.mxu0 %v2691
        %2761 = vmatpush.msra.mxu0 %v2690
        %2762 = vmatmul.f32.gmra.mxu0 %v2696
        %v2763 = vpop.f32.mrf.mxu0
        %v2764 = vadd.f32 0.0, %v2763
        %2765 = vmatmul.f32.gmra.mxu0 %v2699
        %v2766 = vpop.f32.mrf.mxu0
        %v2767 = vadd.f32 0.0, %v2766
        %2768 = vmatmul.f32.gmra.mxu0 %v2702
        %v2769 = vpop.f32.mrf.mxu0
        %v2770 = vadd.f32 0.0, %v2769
        %2771 = vmatmul.f32.gmra.mxu0 %v2705
        %v2772 = vpop.f32.mrf.mxu0
        %v2773 = vadd.f32 0.0, %v2772
        %2774 = vmatmul.f32.gmra.mxu0 %v2708
        %v2775 = vpop.f32.mrf.mxu0
        %v2776 = vadd.f32 0.0, %v2775
        %2777 = vmatmul.f32.gmra.mxu0 %v2711
        %v2778 = vpop.f32.mrf.mxu0
        %v2779 = vadd.f32 0.0, %v2778
        %2780 = vmatmul.f32.gmra.mxu0 %v2714
        %v2781 = vpop.f32.mrf.mxu0
        %v2782 = vadd.f32 0.0, %v2781
        %2783 = vmatmul.f32.gmra.mxu0 %v2717
        %v2784 = vpop.f32.mrf.mxu0
        %v2785 = vadd.f32 0.0, %v2784
        %2786 = vmatmul.f32.gmra.mxu0 %v2720
        %v2787 = vpop.f32.mrf.mxu0
        %v2788 = vadd.f32 0.0, %v2787
        %2789 = vmatmul.f32.gmra.mxu0 %v2723
        %v2790 = vpop.f32.mrf.mxu0
        %v2791 = vadd.f32 0.0, %v2790
        %2792 = vmatmul.f32.gmra.mxu0 %v2726
        %v2793 = vpop.f32.mrf.mxu0
        %v2794 = vadd.f32 0.0, %v2793
        %2795 = vmatmul.f32.gmra.mxu0 %v2729
        %v2796 = vpop.f32.mrf.mxu0
        %v2797 = vadd.f32 0.0, %v2796
        %2798 = vmatmul.f32.gmra.mxu0 %v2732
        %v2799 = vpop.f32.mrf.mxu0
        %v2800 = vadd.f32 0.0, %v2799
        %2801 = vmatmul.f32.gmra.mxu0 %v2735
        %v2802 = vpop.f32.mrf.mxu0
        %v2803 = vadd.f32 0.0, %v2802
        %2804 = vmatmul.f32.gmra.mxu0 %v2738
        %v2805 = vpop.f32.mrf.mxu0
        %v2806 = vadd.f32 0.0, %v2805
        %2807 = vmatmul.f32.gmra.mxu0 %v2741
        %v2808 = vpop.f32.mrf.mxu0
        %v2809 = vadd.f32 0.0, %v2808
        %2810 = vdwg.mxu0
        %v2811 = vadd.f32 %v2658, %v2764
        %v2812 = vadd.f32 %v2659, %v2767
        %v2813 = vadd.f32 %v2660, %v2770
        %v2814 = vadd.f32 %v2661, %v2773
        %v2815 = vadd.f32 %v2662, %v2776
        %v2816 = vadd.f32 %v2663, %v2779
        %v2817 = vadd.f32 %v2664, %v2782
        %v2818 = vadd.f32 %v2665, %v2785
        %v2819 = vadd.f32 %v2666, %v2788
        %v2820 = vadd.f32 %v2667, %v2791
        %v2821 = vadd.f32 %v2668, %v2794
        %v2822 = vadd.f32 %v2669, %v2797
        %v2823 = vadd.f32 %v2670, %v2800
        %v2824 = vadd.f32 %v2671, %v2803
        %v2825 = vadd.f32 %v2672, %v2806
        %v2826 = vadd.f32 %v2673, %v2809
        %v2827 = vld [vmem:[%s2520 + $0x2] sm:$0xff]
        %v2828 = vld [vmem:[%s2520 + $0xa] sm:$0xff]
        %v2829 = vld [vmem:[%s2520 + $0x1a] sm:$0xff]
        %v2830 = vld [vmem:[%s2520 + $0x22] sm:$0xff]
        %v2831 = vld [vmem:[%s2520 + $0x32] sm:$0xff]
        %v2832 = vld [vmem:[%s2520 + $0x3a] sm:$0xff]
        %v2833 = vld [vmem:[%s2520 + $0x4a] sm:$0xff]
        %v2834 = vld [vmem:[%s2520 + $0x52] sm:$0xff]
        %v2835 = vld [vmem:[%s2520 + $0x62] sm:$0xff]
        %v2836 = vld [vmem:[%s2520 + $0x6a] sm:$0xff]
        %v2837 = vld [vmem:[%s2520 + $0x7a] sm:$0xff]
        %v2838 = vld [vmem:[%s2520 + $0x82] sm:$0xff]
        %v2839 = vld [vmem:[%s2520 + $0x92] sm:$0xff]
        %v2840 = vld [vmem:[%s2520 + $0x9a] sm:$0xff]
        %v2841 = vld [vmem:[%s2520 + $0xaa] sm:$0xff]
        %v2842 = vld [vmem:[%s2520 + $0xb2] sm:$0xff]
        %v2843 = vld [vmem:[%s587] sm:$0xff]
        %v2844 = vld [vmem:[%s587 + $0x8] sm:$0xff]
        %v2845 = vld [vmem:[%s587 + $0x10] sm:$0xff]
        %v2846 = vld [vmem:[%s587 + $0x18] sm:$0xff]
        %v2847 = vld [vmem:[%s587 + $0x20] sm:$0xf]
        %v2849 = vsel %vm283, %v2827, 0
        %v2852 = vsel %vm283, %v2828, 0
        %v2855 = vsel %vm283, %v2829, 0
        %v2858 = vsel %vm283, %v2830, 0
        %v2861 = vsel %vm283, %v2831, 0
        %v2864 = vsel %vm283, %v2832, 0
        %v2867 = vsel %vm283, %v2833, 0
        %v2870 = vsel %vm283, %v2834, 0
        %v2873 = vsel %vm283, %v2835, 0
        %v2876 = vsel %vm283, %v2836, 0
        %v2879 = vsel %vm283, %v2837, 0
        %v2882 = vsel %vm283, %v2838, 0
        %v2885 = vsel %vm283, %v2839, 0
        %v2888 = vsel %vm283, %v2840, 0
        %v2891 = vsel %vm283, %v2841, 0
        %v2894 = vsel %vm283, %v2842, 0
        %v2897 = vsel %vm332, %v2847, 0
        %2899 = vmatpush.msra.mxu0 0.0
        %2900 = vmatpush.msra.mxu0 0.0
        %2901 = vmatpush.msra.mxu0 0.0
        %2902 = vmatpush.msra.mxu0 0.0
        %2903 = vmatpush.msra.mxu0 0.0
        %2904 = vmatpush.msra.mxu0 0.0
        %2905 = vmatpush.msra.mxu0 0.0
        %2906 = vmatpush.msra.mxu0 0.0
        %2907 = vmatpush.msra.mxu0 0.0
        %2908 = vmatpush.msra.mxu0 0.0
        %2909 = vmatpush.msra.mxu0 0.0
        %2910 = vmatpush.msra.mxu0 %v2897
        %2911 = vmatpush.msra.mxu0 %v2846
        %2912 = vmatpush.msra.mxu0 %v2845
        %2913 = vmatpush.msra.mxu0 %v2844
        %2914 = vmatpush.msra.mxu0 %v2843
        %2915 = vmatmul.f32.gmra.mxu0 %v2849
        %v2916 = vpop.f32.mrf.mxu0
        %v2917 = vadd.f32 0.0, %v2916
        %2918 = vmatmul.f32.gmra.mxu0 %v2852
        %v2919 = vpop.f32.mrf.mxu0
        %v2920 = vadd.f32 0.0, %v2919
        %2921 = vmatmul.f32.gmra.mxu0 %v2855
        %v2922 = vpop.f32.mrf.mxu0
        %v2923 = vadd.f32 0.0, %v2922
        %2924 = vmatmul.f32.gmra.mxu0 %v2858
        %v2925 = vpop.f32.mrf.mxu0
        %v2926 = vadd.f32 0.0, %v2925
        %2927 = vmatmul.f32.gmra.mxu0 %v2861
        %v2928 = vpop.f32.mrf.mxu0
        %v2929 = vadd.f32 0.0, %v2928
        %2930 = vmatmul.f32.gmra.mxu0 %v2864
        %v2931 = vpop.f32.mrf.mxu0
        %v2932 = vadd.f32 0.0, %v2931
        %2933 = vmatmul.f32.gmra.mxu0 %v2867
        %v2934 = vpop.f32.mrf.mxu0
        %v2935 = vadd.f32 0.0, %v2934
        %2936 = vmatmul.f32.gmra.mxu0 %v2870
        %v2937 = vpop.f32.mrf.mxu0
        %v2938 = vadd.f32 0.0, %v2937
        %2939 = vmatmul.f32.gmra.mxu0 %v2873
        %v2940 = vpop.f32.mrf.mxu0
        %v2941 = vadd.f32 0.0, %v2940
        %2942 = vmatmul.f32.gmra.mxu0 %v2876
        %v2943 = vpop.f32.mrf.mxu0
        %v2944 = vadd.f32 0.0, %v2943
        %2945 = vmatmul.f32.gmra.mxu0 %v2879
        %v2946 = vpop.f32.mrf.mxu0
        %v2947 = vadd.f32 0.0, %v2946
        %2948 = vmatmul.f32.gmra.mxu0 %v2882
        %v2949 = vpop.f32.mrf.mxu0
        %v2950 = vadd.f32 0.0, %v2949
        %2951 = vmatmul.f32.gmra.mxu0 %v2885
        %v2952 = vpop.f32.mrf.mxu0
        %v2953 = vadd.f32 0.0, %v2952
        %2954 = vmatmul.f32.gmra.mxu0 %v2888
        %v2955 = vpop.f32.mrf.mxu0
        %v2956 = vadd.f32 0.0, %v2955
        %2957 = vmatmul.f32.gmra.mxu0 %v2891
        %v2958 = vpop.f32.mrf.mxu0
        %v2959 = vadd.f32 0.0, %v2958
        %2960 = vmatmul.f32.gmra.mxu0 %v2894
        %v2961 = vpop.f32.mrf.mxu0
        %v2962 = vadd.f32 0.0, %v2961
        %2963 = vdwg.mxu0
        %v2964 = vadd.f32 %v2811, %v2917
        %v2965 = vadd.f32 %v2812, %v2920
        %v2966 = vadd.f32 %v2813, %v2923
        %v2967 = vadd.f32 %v2814, %v2926
        %v2968 = vadd.f32 %v2815, %v2929
        %v2969 = vadd.f32 %v2816, %v2932
        %v2970 = vadd.f32 %v2817, %v2935
        %v2971 = vadd.f32 %v2818, %v2938
        %v2972 = vadd.f32 %v2819, %v2941
        %v2973 = vadd.f32 %v2820, %v2944
        %v2974 = vadd.f32 %v2821, %v2947
        %v2975 = vadd.f32 %v2822, %v2950
        %v2976 = vadd.f32 %v2823, %v2953
        %v2977 = vadd.f32 %v2824, %v2956
        %v2978 = vadd.f32 %v2825, %v2959
        %v2979 = vadd.f32 %v2826, %v2962
        %s2980 = scalar_lea.vmem %s248, 216
        %v2981 = vld [vmem:[%s2980] sm:$0xff]
        %v2982 = vld [vmem:[%s2980 + $0x8] sm:$0xff]
        %v2983 = vld [vmem:[%s2980 + $0x18] sm:$0xff]
        %v2984 = vld [vmem:[%s2980 + $0x20] sm:$0xff]
        %v2985 = vld [vmem:[%s2980 + $0x30] sm:$0xff]
        %v2986 = vld [vmem:[%s2980 + $0x38] sm:$0xff]
        %v2987 = vld [vmem:[%s2980 + $0x48] sm:$0xff]
        %v2988 = vld [vmem:[%s2980 + $0x50] sm:$0xff]
        %v2989 = vld [vmem:[%s2980 + $0x60] sm:$0xff]
        %v2990 = vld [vmem:[%s2980 + $0x68] sm:$0xff]
        %v2991 = vld [vmem:[%s2980 + $0x78] sm:$0xff]
        %v2992 = vld [vmem:[%s2980 + $0x80] sm:$0xff]
        %v2993 = vld [vmem:[%s2980 + $0x90] sm:$0xff]
        %v2994 = vld [vmem:[%s2980 + $0x98] sm:$0xff]
        %v2995 = vld [vmem:[%s2980 + $0xa8] sm:$0xff]
        %v2996 = vld [vmem:[%s2980 + $0xb0] sm:$0xff]
        %v2997 = vld [vmem:[%s742] sm:$0xff]
        %v2998 = vld [vmem:[%s742 + $0x8] sm:$0xff]
        %v2999 = vld [vmem:[%s742 + $0x10] sm:$0xff]
        %v3000 = vld [vmem:[%s742 + $0x18] sm:$0xff]
        %v3001 = vld [vmem:[%s742 + $0x20] sm:$0xf]
        %v3003 = vsel %vm283, %v2981, 0
        %v3006 = vsel %vm283, %v2982, 0
        %v3009 = vsel %vm283, %v2983, 0
        %v3012 = vsel %vm283, %v2984, 0
        %v3015 = vsel %vm283, %v2985, 0
        %v3018 = vsel %vm283, %v2986, 0
        %v3021 = vsel %vm283, %v2987, 0
        %v3024 = vsel %vm283, %v2988, 0
        %v3027 = vsel %vm283, %v2989, 0
        %v3030 = vsel %vm283, %v2990, 0
        %v3033 = vsel %vm283, %v2991, 0
        %v3036 = vsel %vm283, %v2992, 0
        %v3039 = vsel %vm283, %v2993, 0
        %v3042 = vsel %vm283, %v2994, 0
        %v3045 = vsel %vm283, %v2995, 0
        %v3048 = vsel %vm283, %v2996, 0
        %v3051 = vsel %vm332, %v3001, 0
        %3053 = vmatpush.msra.mxu0 0.0
        %3054 = vmatpush.msra.mxu0 0.0
        %3055 = vmatpush.msra.mxu0 0.0
        %3056 = vmatpush.msra.mxu0 0.0
        %3057 = vmatpush.msra.mxu0 0.0
        %3058 = vmatpush.msra.mxu0 0.0
        %3059 = vmatpush.msra.mxu0 0.0
        %3060 = vmatpush.msra.mxu0 0.0
        %3061 = vmatpush.msra.mxu0 0.0
        %3062 = vmatpush.msra.mxu0 0.0
        %3063 = vmatpush.msra.mxu0 0.0
        %3064 = vmatpush.msra.mxu0 %v3051
        %3065 = vmatpush.msra.mxu0 %v3000
        %3066 = vmatpush.msra.mxu0 %v2999
        %3067 = vmatpush.msra.mxu0 %v2998
        %3068 = vmatpush.msra.mxu0 %v2997
        %3069 = vmatmul.f32.gmra.mxu0 %v3003
        %v3070 = vpop.f32.mrf.mxu0
        %v3071 = vadd.f32 0.0, %v3070
        %3072 = vmatmul.f32.gmra.mxu0 %v3006
        %v3073 = vpop.f32.mrf.mxu0
        %v3074 = vadd.f32 0.0, %v3073
        %3075 = vmatmul.f32.gmra.mxu0 %v3009
        %v3076 = vpop.f32.mrf.mxu0
        %v3077 = vadd.f32 0.0, %v3076
        %3078 = vmatmul.f32.gmra.mxu0 %v3012
        %v3079 = vpop.f32.mrf.mxu0
        %v3080 = vadd.f32 0.0, %v3079
        %3081 = vmatmul.f32.gmra.mxu0 %v3015
        %v3082 = vpop.f32.mrf.mxu0
        %v3083 = vadd.f32 0.0, %v3082
        %3084 = vmatmul.f32.gmra.mxu0 %v3018
        %v3085 = vpop.f32.mrf.mxu0
        %v3086 = vadd.f32 0.0, %v3085
        %3087 = vmatmul.f32.gmra.mxu0 %v3021
        %v3088 = vpop.f32.mrf.mxu0
        %v3089 = vadd.f32 0.0, %v3088
        %3090 = vmatmul.f32.gmra.mxu0 %v3024
        %v3091 = vpop.f32.mrf.mxu0
        %v3092 = vadd.f32 0.0, %v3091
        %3093 = vmatmul.f32.gmra.mxu0 %v3027
        %v3094 = vpop.f32.mrf.mxu0
        %v3095 = vadd.f32 0.0, %v3094
        %3096 = vmatmul.f32.gmra.mxu0 %v3030
        %v3097 = vpop.f32.mrf.mxu0
        %v3098 = vadd.f32 0.0, %v3097
        %3099 = vmatmul.f32.gmra.mxu0 %v3033
        %v3100 = vpop.f32.mrf.mxu0
        %v3101 = vadd.f32 0.0, %v3100
        %3102 = vmatmul.f32.gmra.mxu0 %v3036
        %v3103 = vpop.f32.mrf.mxu0
        %v3104 = vadd.f32 0.0, %v3103
        %3105 = vmatmul.f32.gmra.mxu0 %v3039
        %v3106 = vpop.f32.mrf.mxu0
        %v3107 = vadd.f32 0.0, %v3106
        %3108 = vmatmul.f32.gmra.mxu0 %v3042
        %v3109 = vpop.f32.mrf.mxu0
        %v3110 = vadd.f32 0.0, %v3109
        %3111 = vmatmul.f32.gmra.mxu0 %v3045
        %v3112 = vpop.f32.mrf.mxu0
        %v3113 = vadd.f32 0.0, %v3112
        %3114 = vmatmul.f32.gmra.mxu0 %v3048
        %v3115 = vpop.f32.mrf.mxu0
        %v3116 = vadd.f32 0.0, %v3115
        %3117 = vdwg.mxu0
        %v3118 = vadd.f32 %v2964, %v3071
        %v3119 = vadd.f32 %v2965, %v3074
        %v3120 = vadd.f32 %v2966, %v3077
        %v3121 = vadd.f32 %v2967, %v3080
        %v3122 = vadd.f32 %v2968, %v3083
        %v3123 = vadd.f32 %v2969, %v3086
        %v3124 = vadd.f32 %v2970, %v3089
        %v3125 = vadd.f32 %v2971, %v3092
        %v3126 = vadd.f32 %v2972, %v3095
        %v3127 = vadd.f32 %v2973, %v3098
        %v3128 = vadd.f32 %v2974, %v3101
        %v3129 = vadd.f32 %v2975, %v3104
        %v3130 = vadd.f32 %v2976, %v3107
        %v3131 = vadd.f32 %v2977, %v3110
        %v3132 = vadd.f32 %v2978, %v3113
        %v3133 = vadd.f32 %v2979, %v3116
        %v3134 = vld [vmem:[%s2980 + $0x1] sm:$0xff]
        %v3135 = vld [vmem:[%s2980 + $0x9] sm:$0xff]
        %v3136 = vld [vmem:[%s2980 + $0x19] sm:$0xff]
        %v3137 = vld [vmem:[%s2980 + $0x21] sm:$0xff]
        %v3138 = vld [vmem:[%s2980 + $0x31] sm:$0xff]
        %v3139 = vld [vmem:[%s2980 + $0x39] sm:$0xff]
        %v3140 = vld [vmem:[%s2980 + $0x49] sm:$0xff]
        %v3141 = vld [vmem:[%s2980 + $0x51] sm:$0xff]
        %v3142 = vld [vmem:[%s2980 + $0x61] sm:$0xff]
        %v3143 = vld [vmem:[%s2980 + $0x69] sm:$0xff]
        %v3144 = vld [vmem:[%s2980 + $0x79] sm:$0xff]
        %v3145 = vld [vmem:[%s2980 + $0x81] sm:$0xff]
        %v3146 = vld [vmem:[%s2980 + $0x91] sm:$0xff]
        %v3147 = vld [vmem:[%s2980 + $0x99] sm:$0xff]
        %v3148 = vld [vmem:[%s2980 + $0xa9] sm:$0xff]
        %v3149 = vld [vmem:[%s2980 + $0xb1] sm:$0xff]
        %v3150 = vld [vmem:[%s896] sm:$0xff]
        %v3151 = vld [vmem:[%s896 + $0x8] sm:$0xff]
        %v3152 = vld [vmem:[%s896 + $0x10] sm:$0xff]
        %v3153 = vld [vmem:[%s896 + $0x18] sm:$0xff]
        %v3154 = vld [vmem:[%s896 + $0x20] sm:$0xf]
        %v3156 = vsel %vm283, %v3134, 0
        %v3159 = vsel %vm283, %v3135, 0
        %v3162 = vsel %vm283, %v3136, 0
        %v3165 = vsel %vm283, %v3137, 0
        %v3168 = vsel %vm283, %v3138, 0
        %v3171 = vsel %vm283, %v3139, 0
        %v3174 = vsel %vm283, %v3140, 0
        %v3177 = vsel %vm283, %v3141, 0
        %v3180 = vsel %vm283, %v3142, 0
        %v3183 = vsel %vm283, %v3143, 0
        %v3186 = vsel %vm283, %v3144, 0
        %v3189 = vsel %vm283, %v3145, 0
        %v3192 = vsel %vm283, %v3146, 0
        %v3195 = vsel %vm283, %v3147, 0
        %v3198 = vsel %vm283, %v3148, 0
        %v3201 = vsel %vm283, %v3149, 0
        %v3204 = vsel %vm332, %v3154, 0
        %3206 = vmatpush.msra.mxu0 0.0
        %3207 = vmatpush.msra.mxu0 0.0
        %3208 = vmatpush.msra.mxu0 0.0
        %3209 = vmatpush.msra.mxu0 0.0
        %3210 = vmatpush.msra.mxu0 0.0
        %3211 = vmatpush.msra.mxu0 0.0
        %3212 = vmatpush.msra.mxu0 0.0
        %3213 = vmatpush.msra.mxu0 0.0
        %3214 = vmatpush.msra.mxu0 0.0
        %3215 = vmatpush.msra.mxu0 0.0
        %3216 = vmatpush.msra.mxu0 0.0
        %3217 = vmatpush.msra.mxu0 %v3204
        %3218 = vmatpush.msra.mxu0 %v3153
        %3219 = vmatpush.msra.mxu0 %v3152
        %3220 = vmatpush.msra.mxu0 %v3151
        %3221 = vmatpush.msra.mxu0 %v3150
        %3222 = vmatmul.f32.gmra.mxu0 %v3156
        %v3223 = vpop.f32.mrf.mxu0
        %v3224 = vadd.f32 0.0, %v3223
        %3225 = vmatmul.f32.gmra.mxu0 %v3159
        %v3226 = vpop.f32.mrf.mxu0
        %v3227 = vadd.f32 0.0, %v3226
        %3228 = vmatmul.f32.gmra.mxu0 %v3162
        %v3229 = vpop.f32.mrf.mxu0
        %v3230 = vadd.f32 0.0, %v3229
        %3231 = vmatmul.f32.gmra.mxu0 %v3165
        %v3232 = vpop.f32.mrf.mxu0
        %v3233 = vadd.f32 0.0, %v3232
        %3234 = vmatmul.f32.gmra.mxu0 %v3168
        %v3235 = vpop.f32.mrf.mxu0
        %v3236 = vadd.f32 0.0, %v3235
        %3237 = vmatmul.f32.gmra.mxu0 %v3171
        %v3238 = vpop.f32.mrf.mxu0
        %v3239 = vadd.f32 0.0, %v3238
        %3240 = vmatmul.f32.gmra.mxu0 %v3174
        %v3241 = vpop.f32.mrf.mxu0
        %v3242 = vadd.f32 0.0, %v3241
        %3243 = vmatmul.f32.gmra.mxu0 %v3177
        %v3244 = vpop.f32.mrf.mxu0
        %v3245 = vadd.f32 0.0, %v3244
        %3246 = vmatmul.f32.gmra.mxu0 %v3180
        %v3247 = vpop.f32.mrf.mxu0
        %v3248 = vadd.f32 0.0, %v3247
        %3249 = vmatmul.f32.gmra.mxu0 %v3183
        %v3250 = vpop.f32.mrf.mxu0
        %v3251 = vadd.f32 0.0, %v3250
        %3252 = vmatmul.f32.gmra.mxu0 %v3186
        %v3253 = vpop.f32.mrf.mxu0
        %v3254 = vadd.f32 0.0, %v3253
        %3255 = vmatmul.f32.gmra.mxu0 %v3189
        %v3256 = vpop.f32.mrf.mxu0
        %v3257 = vadd.f32 0.0, %v3256
        %3258 = vmatmul.f32.gmra.mxu0 %v3192
        %v3259 = vpop.f32.mrf.mxu0
        %v3260 = vadd.f32 0.0, %v3259
        %3261 = vmatmul.f32.gmra.mxu0 %v3195
        %v3262 = vpop.f32.mrf.mxu0
        %v3263 = vadd.f32 0.0, %v3262
        %3264 = vmatmul.f32.gmra.mxu0 %v3198
        %v3265 = vpop.f32.mrf.mxu0
        %v3266 = vadd.f32 0.0, %v3265
        %3267 = vmatmul.f32.gmra.mxu0 %v3201
        %v3268 = vpop.f32.mrf.mxu0
        %v3269 = vadd.f32 0.0, %v3268
        %3270 = vdwg.mxu0
        %v3271 = vadd.f32 %v3118, %v3224
        %v3272 = vadd.f32 %v3119, %v3227
        %v3273 = vadd.f32 %v3120, %v3230
        %v3274 = vadd.f32 %v3121, %v3233
        %v3275 = vadd.f32 %v3122, %v3236
        %v3276 = vadd.f32 %v3123, %v3239
        %v3277 = vadd.f32 %v3124, %v3242
        %v3278 = vadd.f32 %v3125, %v3245
        %v3279 = vadd.f32 %v3126, %v3248
        %v3280 = vadd.f32 %v3127, %v3251
        %v3281 = vadd.f32 %v3128, %v3254
        %v3282 = vadd.f32 %v3129, %v3257
        %v3283 = vadd.f32 %v3130, %v3260
        %v3284 = vadd.f32 %v3131, %v3263
        %v3285 = vadd.f32 %v3132, %v3266
        %v3286 = vadd.f32 %v3133, %v3269
        %v3287 = vld [vmem:[%s2980 + $0x2] sm:$0xff]
        %v3288 = vld [vmem:[%s2980 + $0xa] sm:$0xff]
        %v3289 = vld [vmem:[%s2980 + $0x1a] sm:$0xff]
        %v3290 = vld [vmem:[%s2980 + $0x22] sm:$0xff]
        %v3291 = vld [vmem:[%s2980 + $0x32] sm:$0xff]
        %v3292 = vld [vmem:[%s2980 + $0x3a] sm:$0xff]
        %v3293 = vld [vmem:[%s2980 + $0x4a] sm:$0xff]
        %v3294 = vld [vmem:[%s2980 + $0x52] sm:$0xff]
        %v3295 = vld [vmem:[%s2980 + $0x62] sm:$0xff]
        %v3296 = vld [vmem:[%s2980 + $0x6a] sm:$0xff]
        %v3297 = vld [vmem:[%s2980 + $0x7a] sm:$0xff]
        %v3298 = vld [vmem:[%s2980 + $0x82] sm:$0xff]
        %v3299 = vld [vmem:[%s2980 + $0x92] sm:$0xff]
        %v3300 = vld [vmem:[%s2980 + $0x9a] sm:$0xff]
        %v3301 = vld [vmem:[%s2980 + $0xaa] sm:$0xff]
        %v3302 = vld [vmem:[%s2980 + $0xb2] sm:$0xff]
        %v3303 = vld [vmem:[%s1050] sm:$0xff]
        %v3304 = vld [vmem:[%s1050 + $0x8] sm:$0xff]
        %v3305 = vld [vmem:[%s1050 + $0x10] sm:$0xff]
        %v3306 = vld [vmem:[%s1050 + $0x18] sm:$0xff]
        %v3307 = vld [vmem:[%s1050 + $0x20] sm:$0xf]
        %v3309 = vsel %vm283, %v3287, 0
        %v3312 = vsel %vm283, %v3288, 0
        %v3315 = vsel %vm283, %v3289, 0
        %v3318 = vsel %vm283, %v3290, 0
        %v3321 = vsel %vm283, %v3291, 0
        %v3324 = vsel %vm283, %v3292, 0
        %v3327 = vsel %vm283, %v3293, 0
        %v3330 = vsel %vm283, %v3294, 0
        %v3333 = vsel %vm283, %v3295, 0
        %v3336 = vsel %vm283, %v3296, 0
        %v3339 = vsel %vm283, %v3297, 0
        %v3342 = vsel %vm283, %v3298, 0
        %v3345 = vsel %vm283, %v3299, 0
        %v3348 = vsel %vm283, %v3300, 0
        %v3351 = vsel %vm283, %v3301, 0
        %v3354 = vsel %vm283, %v3302, 0
        %v3357 = vsel %vm332, %v3307, 0
        %3359 = vmatpush.msra.mxu0 0.0
        %3360 = vmatpush.msra.mxu0 0.0
        %3361 = vmatpush.msra.mxu0 0.0
        %3362 = vmatpush.msra.mxu0 0.0
        %3363 = vmatpush.msra.mxu0 0.0
        %3364 = vmatpush.msra.mxu0 0.0
        %3365 = vmatpush.msra.mxu0 0.0
        %3366 = vmatpush.msra.mxu0 0.0
        %3367 = vmatpush.msra.mxu0 0.0
        %3368 = vmatpush.msra.mxu0 0.0
        %3369 = vmatpush.msra.mxu0 0.0
        %3370 = vmatpush.msra.mxu0 %v3357
        %3371 = vmatpush.msra.mxu0 %v3306
        %3372 = vmatpush.msra.mxu0 %v3305
        %3373 = vmatpush.msra.mxu0 %v3304
        %3374 = vmatpush.msra.mxu0 %v3303
        %3375 = vmatmul.f32.gmra.mxu0 %v3309
        %v3376 = vpop.f32.mrf.mxu0
        %v3377 = vadd.f32 0.0, %v3376
        %3378 = vmatmul.f32.gmra.mxu0 %v3312
        %v3379 = vpop.f32.mrf.mxu0
        %v3380 = vadd.f32 0.0, %v3379
        %3381 = vmatmul.f32.gmra.mxu0 %v3315
        %v3382 = vpop.f32.mrf.mxu0
        %v3383 = vadd.f32 0.0, %v3382
        %3384 = vmatmul.f32.gmra.mxu0 %v3318
        %v3385 = vpop.f32.mrf.mxu0
        %v3386 = vadd.f32 0.0, %v3385
        %3387 = vmatmul.f32.gmra.mxu0 %v3321
        %v3388 = vpop.f32.mrf.mxu0
        %v3389 = vadd.f32 0.0, %v3388
        %3390 = vmatmul.f32.gmra.mxu0 %v3324
        %v3391 = vpop.f32.mrf.mxu0
        %v3392 = vadd.f32 0.0, %v3391
        %3393 = vmatmul.f32.gmra.mxu0 %v3327
        %v3394 = vpop.f32.mrf.mxu0
        %v3395 = vadd.f32 0.0, %v3394
        %3396 = vmatmul.f32.gmra.mxu0 %v3330
        %v3397 = vpop.f32.mrf.mxu0
        %v3398 = vadd.f32 0.0, %v3397
        %3399 = vmatmul.f32.gmra.mxu0 %v3333
        %v3400 = vpop.f32.mrf.mxu0
        %v3401 = vadd.f32 0.0, %v3400
        %3402 = vmatmul.f32.gmra.mxu0 %v3336
        %v3403 = vpop.f32.mrf.mxu0
        %v3404 = vadd.f32 0.0, %v3403
        %3405 = vmatmul.f32.gmra.mxu0 %v3339
        %v3406 = vpop.f32.mrf.mxu0
        %v3407 = vadd.f32 0.0, %v3406
        %3408 = vmatmul.f32.gmra.mxu0 %v3342
        %v3409 = vpop.f32.mrf.mxu0
        %v3410 = vadd.f32 0.0, %v3409
        %3411 = vmatmul.f32.gmra.mxu0 %v3345
        %v3412 = vpop.f32.mrf.mxu0
        %v3413 = vadd.f32 0.0, %v3412
        %3414 = vmatmul.f32.gmra.mxu0 %v3348
        %v3415 = vpop.f32.mrf.mxu0
        %v3416 = vadd.f32 0.0, %v3415
        %3417 = vmatmul.f32.gmra.mxu0 %v3351
        %v3418 = vpop.f32.mrf.mxu0
        %v3419 = vadd.f32 0.0, %v3418
        %3420 = vmatmul.f32.gmra.mxu0 %v3354
        %v3421 = vpop.f32.mrf.mxu0
        %v3422 = vadd.f32 0.0, %v3421
        %3423 = vdwg.mxu0
        %v3424 = vadd.f32 %v3271, %v3377
        %v3425 = vadd.f32 %v3272, %v3380
        %v3426 = vadd.f32 %v3273, %v3383
        %v3427 = vadd.f32 %v3274, %v3386
        %v3428 = vadd.f32 %v3275, %v3389
        %v3429 = vadd.f32 %v3276, %v3392
        %v3430 = vadd.f32 %v3277, %v3395
        %v3431 = vadd.f32 %v3278, %v3398
        %v3432 = vadd.f32 %v3279, %v3401
        %v3433 = vadd.f32 %v3280, %v3404
        %v3434 = vadd.f32 %v3281, %v3407
        %v3435 = vadd.f32 %v3282, %v3410
        %v3436 = vadd.f32 %v3283, %v3413
        %v3437 = vadd.f32 %v3284, %v3416
        %v3438 = vadd.f32 %v3285, %v3419
        %v3439 = vadd.f32 %v3286, %v3422
        %s3440 = scalar_lea.vmem %s248, 240
        %v3441 = vld [vmem:[%s3440] sm:$0xff]
        %v3442 = vld [vmem:[%s3440 + $0x8] sm:$0xff]
        %v3443 = vld [vmem:[%s3440 + $0x18] sm:$0xff]
        %v3444 = vld [vmem:[%s3440 + $0x20] sm:$0xff]
        %v3445 = vld [vmem:[%s3440 + $0x30] sm:$0xff]
        %v3446 = vld [vmem:[%s3440 + $0x38] sm:$0xff]
        %v3447 = vld [vmem:[%s3440 + $0x48] sm:$0xff]
        %v3448 = vld [vmem:[%s3440 + $0x50] sm:$0xff]
        %v3449 = vld [vmem:[%s3440 + $0x60] sm:$0xff]
        %v3450 = vld [vmem:[%s3440 + $0x68] sm:$0xff]
        %v3451 = vld [vmem:[%s3440 + $0x78] sm:$0xff]
        %v3452 = vld [vmem:[%s3440 + $0x80] sm:$0xff]
        %v3453 = vld [vmem:[%s3440 + $0x90] sm:$0xff]
        %v3454 = vld [vmem:[%s3440 + $0x98] sm:$0xff]
        %v3455 = vld [vmem:[%s3440 + $0xa8] sm:$0xff]
        %v3456 = vld [vmem:[%s3440 + $0xb0] sm:$0xff]
        %v3457 = vld [vmem:[%s1205] sm:$0xff]
        %v3458 = vld [vmem:[%s1205 + $0x8] sm:$0xff]
        %v3459 = vld [vmem:[%s1205 + $0x10] sm:$0xff]
        %v3460 = vld [vmem:[%s1205 + $0x18] sm:$0xff]
        %v3461 = vld [vmem:[%s1205 + $0x20] sm:$0xf]
        %v3463 = vsel %vm283, %v3441, 0
        %v3466 = vsel %vm283, %v3442, 0
        %v3469 = vsel %vm283, %v3443, 0
        %v3472 = vsel %vm283, %v3444, 0
        %v3475 = vsel %vm283, %v3445, 0
        %v3478 = vsel %vm283, %v3446, 0
        %v3481 = vsel %vm283, %v3447, 0
        %v3484 = vsel %vm283, %v3448, 0
        %v3487 = vsel %vm283, %v3449, 0
        %v3490 = vsel %vm283, %v3450, 0
        %v3493 = vsel %vm283, %v3451, 0
        %v3496 = vsel %vm283, %v3452, 0
        %v3499 = vsel %vm283, %v3453, 0
        %v3502 = vsel %vm283, %v3454, 0
        %v3505 = vsel %vm283, %v3455, 0
        %v3508 = vsel %vm283, %v3456, 0
        %v3511 = vsel %vm332, %v3461, 0
        %3513 = vmatpush.msra.mxu0 0.0
        %3514 = vmatpush.msra.mxu0 0.0
        %3515 = vmatpush.msra.mxu0 0.0
        %3516 = vmatpush.msra.mxu0 0.0
        %3517 = vmatpush.msra.mxu0 0.0
        %3518 = vmatpush.msra.mxu0 0.0
        %3519 = vmatpush.msra.mxu0 0.0
        %3520 = vmatpush.msra.mxu0 0.0
        %3521 = vmatpush.msra.mxu0 0.0
        %3522 = vmatpush.msra.mxu0 0.0
        %3523 = vmatpush.msra.mxu0 0.0
        %3524 = vmatpush.msra.mxu0 %v3511
        %3525 = vmatpush.msra.mxu0 %v3460
        %3526 = vmatpush.msra.mxu0 %v3459
        %3527 = vmatpush.msra.mxu0 %v3458
        %3528 = vmatpush.msra.mxu0 %v3457
        %3529 = vmatmul.f32.gmra.mxu0 %v3463
        %v3530 = vpop.f32.mrf.mxu0
        %v3531 = vadd.f32 0.0, %v3530
        %3532 = vmatmul.f32.gmra.mxu0 %v3466
        %v3533 = vpop.f32.mrf.mxu0
        %v3534 = vadd.f32 0.0, %v3533
        %3535 = vmatmul.f32.gmra.mxu0 %v3469
        %v3536 = vpop.f32.mrf.mxu0
        %v3537 = vadd.f32 0.0, %v3536
        %3538 = vmatmul.f32.gmra.mxu0 %v3472
        %v3539 = vpop.f32.mrf.mxu0
        %v3540 = vadd.f32 0.0, %v3539
        %3541 = vmatmul.f32.gmra.mxu0 %v3475
        %v3542 = vpop.f32.mrf.mxu0
        %v3543 = vadd.f32 0.0, %v3542
        %3544 = vmatmul.f32.gmra.mxu0 %v3478
        %v3545 = vpop.f32.mrf.mxu0
        %v3546 = vadd.f32 0.0, %v3545
        %3547 = vmatmul.f32.gmra.mxu0 %v3481
        %v3548 = vpop.f32.mrf.mxu0
        %v3549 = vadd.f32 0.0, %v3548
        %3550 = vmatmul.f32.gmra.mxu0 %v3484
        %v3551 = vpop.f32.mrf.mxu0
        %v3552 = vadd.f32 0.0, %v3551
        %3553 = vmatmul.f32.gmra.mxu0 %v3487
        %v3554 = vpop.f32.mrf.mxu0
        %v3555 = vadd.f32 0.0, %v3554
        %3556 = vmatmul.f32.gmra.mxu0 %v3490
        %v3557 = vpop.f32.mrf.mxu0
        %v3558 = vadd.f32 0.0, %v3557
        %3559 = vmatmul.f32.gmra.mxu0 %v3493
        %v3560 = vpop.f32.mrf.mxu0
        %v3561 = vadd.f32 0.0, %v3560
        %3562 = vmatmul.f32.gmra.mxu0 %v3496
        %v3563 = vpop.f32.mrf.mxu0
        %v3564 = vadd.f32 0.0, %v3563
        %3565 = vmatmul.f32.gmra.mxu0 %v3499
        %v3566 = vpop.f32.mrf.mxu0
        %v3567 = vadd.f32 0.0, %v3566
        %3568 = vmatmul.f32.gmra.mxu0 %v3502
        %v3569 = vpop.f32.mrf.mxu0
        %v3570 = vadd.f32 0.0, %v3569
        %3571 = vmatmul.f32.gmra.mxu0 %v3505
        %v3572 = vpop.f32.mrf.mxu0
        %v3573 = vadd.f32 0.0, %v3572
        %3574 = vmatmul.f32.gmra.mxu0 %v3508
        %v3575 = vpop.f32.mrf.mxu0
        %v3576 = vadd.f32 0.0, %v3575
        %3577 = vdwg.mxu0
        %v3578 = vadd.f32 %v3424, %v3531
        %v3579 = vadd.f32 %v3425, %v3534
        %v3580 = vadd.f32 %v3426, %v3537
        %v3581 = vadd.f32 %v3427, %v3540
        %v3582 = vadd.f32 %v3428, %v3543
        %v3583 = vadd.f32 %v3429, %v3546
        %v3584 = vadd.f32 %v3430, %v3549
        %v3585 = vadd.f32 %v3431, %v3552
        %v3586 = vadd.f32 %v3432, %v3555
        %v3587 = vadd.f32 %v3433, %v3558
        %v3588 = vadd.f32 %v3434, %v3561
        %v3589 = vadd.f32 %v3435, %v3564
        %v3590 = vadd.f32 %v3436, %v3567
        %v3591 = vadd.f32 %v3437, %v3570
        %v3592 = vadd.f32 %v3438, %v3573
        %v3593 = vadd.f32 %v3439, %v3576
        %v3594 = vld [vmem:[%s3440 + $0x1] sm:$0xff]
        %v3595 = vld [vmem:[%s3440 + $0x9] sm:$0xff]
        %v3596 = vld [vmem:[%s3440 + $0x19] sm:$0xff]
        %v3597 = vld [vmem:[%s3440 + $0x21] sm:$0xff]
        %v3598 = vld [vmem:[%s3440 + $0x31] sm:$0xff]
        %v3599 = vld [vmem:[%s3440 + $0x39] sm:$0xff]
        %v3600 = vld [vmem:[%s3440 + $0x49] sm:$0xff]
        %v3601 = vld [vmem:[%s3440 + $0x51] sm:$0xff]
        %v3602 = vld [vmem:[%s3440 + $0x61] sm:$0xff]
        %v3603 = vld [vmem:[%s3440 + $0x69] sm:$0xff]
        %v3604 = vld [vmem:[%s3440 + $0x79] sm:$0xff]
        %v3605 = vld [vmem:[%s3440 + $0x81] sm:$0xff]
        %v3606 = vld [vmem:[%s3440 + $0x91] sm:$0xff]
        %v3607 = vld [vmem:[%s3440 + $0x99] sm:$0xff]
        %v3608 = vld [vmem:[%s3440 + $0xa9] sm:$0xff]
        %v3609 = vld [vmem:[%s3440 + $0xb1] sm:$0xff]
        %v3610 = vld [vmem:[%s1359] sm:$0xff]
        %v3611 = vld [vmem:[%s1359 + $0x8] sm:$0xff]
        %v3612 = vld [vmem:[%s1359 + $0x10] sm:$0xff]
        %v3613 = vld [vmem:[%s1359 + $0x18] sm:$0xff]
        %v3614 = vld [vmem:[%s1359 + $0x20] sm:$0xf]
        %v3616 = vsel %vm283, %v3594, 0
        %v3619 = vsel %vm283, %v3595, 0
        %v3622 = vsel %vm283, %v3596, 0
        %v3625 = vsel %vm283, %v3597, 0
        %v3628 = vsel %vm283, %v3598, 0
        %v3631 = vsel %vm283, %v3599, 0
        %v3634 = vsel %vm283, %v3600, 0
        %v3637 = vsel %vm283, %v3601, 0
        %v3640 = vsel %vm283, %v3602, 0
        %v3643 = vsel %vm283, %v3603, 0
        %v3646 = vsel %vm283, %v3604, 0
        %v3649 = vsel %vm283, %v3605, 0
        %v3652 = vsel %vm283, %v3606, 0
        %v3655 = vsel %vm283, %v3607, 0
        %v3658 = vsel %vm283, %v3608, 0
        %v3661 = vsel %vm283, %v3609, 0
        %v3664 = vsel %vm332, %v3614, 0
        %3666 = vmatpush.msra.mxu0 0.0
        %3667 = vmatpush.msra.mxu0 0.0
        %3668 = vmatpush.msra.mxu0 0.0
        %3669 = vmatpush.msra.mxu0 0.0
        %3670 = vmatpush.msra.mxu0 0.0
        %3671 = vmatpush.msra.mxu0 0.0
        %3672 = vmatpush.msra.mxu0 0.0
        %3673 = vmatpush.msra.mxu0 0.0
        %3674 = vmatpush.msra.mxu0 0.0
        %3675 = vmatpush.msra.mxu0 0.0
        %3676 = vmatpush.msra.mxu0 0.0
        %3677 = vmatpush.msra.mxu0 %v3664
        %3678 = vmatpush.msra.mxu0 %v3613
        %3679 = vmatpush.msra.mxu0 %v3612
        %3680 = vmatpush.msra.mxu0 %v3611
        %3681 = vmatpush.msra.mxu0 %v3610
        %3682 = vmatmul.f32.gmra.mxu0 %v3616
        %v3683 = vpop.f32.mrf.mxu0
        %v3684 = vadd.f32 0.0, %v3683
        %3685 = vmatmul.f32.gmra.mxu0 %v3619
        %v3686 = vpop.f32.mrf.mxu0
        %v3687 = vadd.f32 0.0, %v3686
        %3688 = vmatmul.f32.gmra.mxu0 %v3622
        %v3689 = vpop.f32.mrf.mxu0
        %v3690 = vadd.f32 0.0, %v3689
        %3691 = vmatmul.f32.gmra.mxu0 %v3625
        %v3692 = vpop.f32.mrf.mxu0
        %v3693 = vadd.f32 0.0, %v3692
        %3694 = vmatmul.f32.gmra.mxu0 %v3628
        %v3695 = vpop.f32.mrf.mxu0
        %v3696 = vadd.f32 0.0, %v3695
        %3697 = vmatmul.f32.gmra.mxu0 %v3631
        %v3698 = vpop.f32.mrf.mxu0
        %v3699 = vadd.f32 0.0, %v3698
        %3700 = vmatmul.f32.gmra.mxu0 %v3634
        %v3701 = vpop.f32.mrf.mxu0
        %v3702 = vadd.f32 0.0, %v3701
        %3703 = vmatmul.f32.gmra.mxu0 %v3637
        %v3704 = vpop.f32.mrf.mxu0
        %v3705 = vadd.f32 0.0, %v3704
        %3706 = vmatmul.f32.gmra.mxu0 %v3640
        %v3707 = vpop.f32.mrf.mxu0
        %v3708 = vadd.f32 0.0, %v3707
        %3709 = vmatmul.f32.gmra.mxu0 %v3643
        %v3710 = vpop.f32.mrf.mxu0
        %v3711 = vadd.f32 0.0, %v3710
        %3712 = vmatmul.f32.gmra.mxu0 %v3646
        %v3713 = vpop.f32.mrf.mxu0
        %v3714 = vadd.f32 0.0, %v3713
        %3715 = vmatmul.f32.gmra.mxu0 %v3649
        %v3716 = vpop.f32.mrf.mxu0
        %v3717 = vadd.f32 0.0, %v3716
        %3718 = vmatmul.f32.gmra.mxu0 %v3652
        %v3719 = vpop.f32.mrf.mxu0
        %v3720 = vadd.f32 0.0, %v3719
        %3721 = vmatmul.f32.gmra.mxu0 %v3655
        %v3722 = vpop.f32.mrf.mxu0
        %v3723 = vadd.f32 0.0, %v3722
        %3724 = vmatmul.f32.gmra.mxu0 %v3658
        %v3725 = vpop.f32.mrf.mxu0
        %v3726 = vadd.f32 0.0, %v3725
        %3727 = vmatmul.f32.gmra.mxu0 %v3661
        %v3728 = vpop.f32.mrf.mxu0
        %v3729 = vadd.f32 0.0, %v3728
        %3730 = vdwg.mxu0
        %v3731 = vadd.f32 %v3578, %v3684
        %v3732 = vadd.f32 %v3579, %v3687
        %v3733 = vadd.f32 %v3580, %v3690
        %v3734 = vadd.f32 %v3581, %v3693
        %v3735 = vadd.f32 %v3582, %v3696
        %v3736 = vadd.f32 %v3583, %v3699
        %v3737 = vadd.f32 %v3584, %v3702
        %v3738 = vadd.f32 %v3585, %v3705
        %v3739 = vadd.f32 %v3586, %v3708
        %v3740 = vadd.f32 %v3587, %v3711
        %v3741 = vadd.f32 %v3588, %v3714
        %v3742 = vadd.f32 %v3589, %v3717
        %v3743 = vadd.f32 %v3590, %v3720
        %v3744 = vadd.f32 %v3591, %v3723
        %v3745 = vadd.f32 %v3592, %v3726
        %v3746 = vadd.f32 %v3593, %v3729
        %v3747 = vld [vmem:[%s3440 + $0x2] sm:$0xff]
        %v3748 = vld [vmem:[%s3440 + $0xa] sm:$0xff]
        %v3749 = vld [vmem:[%s3440 + $0x1a] sm:$0xff]
        %v3750 = vld [vmem:[%s3440 + $0x22] sm:$0xff]
        %v3751 = vld [vmem:[%s3440 + $0x32] sm:$0xff]
        %v3752 = vld [vmem:[%s3440 + $0x3a] sm:$0xff]
        %v3753 = vld [vmem:[%s3440 + $0x4a] sm:$0xff]
        %v3754 = vld [vmem:[%s3440 + $0x52] sm:$0xff]
        %v3755 = vld [vmem:[%s3440 + $0x62] sm:$0xff]
        %v3756 = vld [vmem:[%s3440 + $0x6a] sm:$0xff]
        %v3757 = vld [vmem:[%s3440 + $0x7a] sm:$0xff]
        %v3758 = vld [vmem:[%s3440 + $0x82] sm:$0xff]
        %v3759 = vld [vmem:[%s3440 + $0x92] sm:$0xff]
        %v3760 = vld [vmem:[%s3440 + $0x9a] sm:$0xff]
        %v3761 = vld [vmem:[%s3440 + $0xaa] sm:$0xff]
        %v3762 = vld [vmem:[%s3440 + $0xb2] sm:$0xff]
        %v3763 = vld [vmem:[%s1513] sm:$0xff]
        %v3764 = vld [vmem:[%s1513 + $0x8] sm:$0xff]
        %v3765 = vld [vmem:[%s1513 + $0x10] sm:$0xff]
        %v3766 = vld [vmem:[%s1513 + $0x18] sm:$0xff]
        %v3767 = vld [vmem:[%s1513 + $0x20] sm:$0xf]
        %v3769 = vsel %vm283, %v3747, 0
        %v3772 = vsel %vm283, %v3748, 0
        %v3775 = vsel %vm283, %v3749, 0
        %v3778 = vsel %vm283, %v3750, 0
        %v3781 = vsel %vm283, %v3751, 0
        %v3784 = vsel %vm283, %v3752, 0
        %v3787 = vsel %vm283, %v3753, 0
        %v3790 = vsel %vm283, %v3754, 0
        %v3793 = vsel %vm283, %v3755, 0
        %v3796 = vsel %vm283, %v3756, 0
        %v3799 = vsel %vm283, %v3757, 0
        %v3802 = vsel %vm283, %v3758, 0
        %v3805 = vsel %vm283, %v3759, 0
        %v3808 = vsel %vm283, %v3760, 0
        %v3811 = vsel %vm283, %v3761, 0
        %v3814 = vsel %vm283, %v3762, 0
        %v3817 = vsel %vm332, %v3767, 0
        %3819 = vmatpush.msra.mxu0 0.0
        %3820 = vmatpush.msra.mxu0 0.0
        %3821 = vmatpush.msra.mxu0 0.0
        %3822 = vmatpush.msra.mxu0 0.0
        %3823 = vmatpush.msra.mxu0 0.0
        %3824 = vmatpush.msra.mxu0 0.0
        %3825 = vmatpush.msra.mxu0 0.0
        %3826 = vmatpush.msra.mxu0 0.0
        %3827 = vmatpush.msra.mxu0 0.0
        %3828 = vmatpush.msra.mxu0 0.0
        %3829 = vmatpush.msra.mxu0 0.0
        %3830 = vmatpush.msra.mxu0 %v3817
        %3831 = vmatpush.msra.mxu0 %v3766
        %3832 = vmatpush.msra.mxu0 %v3765
        %3833 = vmatpush.msra.mxu0 %v3764
        %3834 = vmatpush.msra.mxu0 %v3763
        %3835 = vmatmul.f32.gmra.mxu0 %v3769
        %v3836 = vpop.f32.mrf.mxu0
        %v3837 = vadd.f32 0.0, %v3836
        %3838 = vmatmul.f32.gmra.mxu0 %v3772
        %v3839 = vpop.f32.mrf.mxu0
        %v3840 = vadd.f32 0.0, %v3839
        %3841 = vmatmul.f32.gmra.mxu0 %v3775
        %v3842 = vpop.f32.mrf.mxu0
        %v3843 = vadd.f32 0.0, %v3842
        %3844 = vmatmul.f32.gmra.mxu0 %v3778
        %v3845 = vpop.f32.mrf.mxu0
        %v3846 = vadd.f32 0.0, %v3845
        %3847 = vmatmul.f32.gmra.mxu0 %v3781
        %v3848 = vpop.f32.mrf.mxu0
        %v3849 = vadd.f32 0.0, %v3848
        %3850 = vmatmul.f32.gmra.mxu0 %v3784
        %v3851 = vpop.f32.mrf.mxu0
        %v3852 = vadd.f32 0.0, %v3851
        %3853 = vmatmul.f32.gmra.mxu0 %v3787
        %v3854 = vpop.f32.mrf.mxu0
        %v3855 = vadd.f32 0.0, %v3854
        %3856 = vmatmul.f32.gmra.mxu0 %v3790
        %v3857 = vpop.f32.mrf.mxu0
        %v3858 = vadd.f32 0.0, %v3857
        %3859 = vmatmul.f32.gmra.mxu0 %v3793
        %v3860 = vpop.f32.mrf.mxu0
        %v3861 = vadd.f32 0.0, %v3860
        %3862 = vmatmul.f32.gmra.mxu0 %v3796
        %v3863 = vpop.f32.mrf.mxu0
        %v3864 = vadd.f32 0.0, %v3863
        %3865 = vmatmul.f32.gmra.mxu0 %v3799
        %v3866 = vpop.f32.mrf.mxu0
        %v3867 = vadd.f32 0.0, %v3866
        %3868 = vmatmul.f32.gmra.mxu0 %v3802
        %v3869 = vpop.f32.mrf.mxu0
        %v3870 = vadd.f32 0.0, %v3869
        %3871 = vmatmul.f32.gmra.mxu0 %v3805
        %v3872 = vpop.f32.mrf.mxu0
        %v3873 = vadd.f32 0.0, %v3872
        %3874 = vmatmul.f32.gmra.mxu0 %v3808
        %v3875 = vpop.f32.mrf.mxu0
        %v3876 = vadd.f32 0.0, %v3875
        %3877 = vmatmul.f32.gmra.mxu0 %v3811
        %v3878 = vpop.f32.mrf.mxu0
        %v3879 = vadd.f32 0.0, %v3878
        %3880 = vmatmul.f32.gmra.mxu0 %v3814
        %v3881 = vpop.f32.mrf.mxu0
        %v3882 = vadd.f32 0.0, %v3881
        %3883 = vdwg.mxu0
        %v3884 = vadd.f32 %v3731, %v3837
        %v3885 = vadd.f32 %v3732, %v3840
        %v3886 = vadd.f32 %v3733, %v3843
        %v3887 = vadd.f32 %v3734, %v3846
        %v3888 = vadd.f32 %v3735, %v3849
        %v3889 = vadd.f32 %v3736, %v3852
        %v3890 = vadd.f32 %v3737, %v3855
        %v3891 = vadd.f32 %v3738, %v3858
        %v3892 = vadd.f32 %v3739, %v3861
        %v3893 = vadd.f32 %v3740, %v3864
        %v3894 = vadd.f32 %v3741, %v3867
        %v3895 = vadd.f32 %v3742, %v3870
        %v3896 = vadd.f32 %v3743, %v3873
        %v3897 = vadd.f32 %v3744, %v3876
        %v3898 = vadd.f32 %v3745, %v3879
        %v3899 = vadd.f32 %v3746, %v3882
        %v3900 = vmul.f32 %v3884, %v257
        %v3901 = vmul.f32 %v3885, %v257
        %v3902 = vmul.f32 %v3886, %v257
        %v3903 = vmul.f32 %v3887, %v257
        %v3904 = vmul.f32 %v3888, %v257
        %v3905 = vmul.f32 %v3889, %v257
        %v3906 = vmul.f32 %v3890, %v257
        %v3907 = vmul.f32 %v3891, %v257
        %v3908 = vmul.f32 %v3892, %v257
        %v3909 = vmul.f32 %v3893, %v257
        %v3910 = vmul.f32 %v3894, %v257
        %v3911 = vmul.f32 %v3895, %v257
        %v3912 = vmul.f32 %v3896, %v257
        %v3913 = vmul.f32 %v3897, %v257
        %v3914 = vmul.f32 %v3898, %v257
        %v3915 = vmul.f32 %v3899, %v257
        %v3916 = vsub.f32 0.0, %v3900
        %v3917 = vsub.f32 0.0, %v3901
        %v3918 = vsub.f32 0.0, %v3902
        %v3919 = vsub.f32 0.0, %v3903
        %v3920 = vsub.f32 0.0, %v3904
        %v3921 = vsub.f32 0.0, %v3905
        %v3922 = vsub.f32 0.0, %v3906
        %v3923 = vsub.f32 0.0, %v3907
        %v3924 = vsub.f32 0.0, %v3908
        %v3925 = vsub.f32 0.0, %v3909
        %v3926 = vsub.f32 0.0, %v3910
        %v3927 = vsub.f32 0.0, %v3911
        %v3928 = vsub.f32 0.0, %v3912
        %v3929 = vsub.f32 0.0, %v3913
        %v3930 = vsub.f32 0.0, %v3914
        %v3931 = vsub.f32 0.0, %v3915
        %v3932 = vmul.f32 %v3916, 1.442695
        %v3933 = vpow.pop %v3932
        %v3934 = vmul.f32 %v3917, 1.442695
        %v3935 = vpow.pop %v3934
        %v3936 = vmul.f32 %v3918, 1.442695
        %v3937 = vpow.pop %v3936
        %v3938 = vmul.f32 %v3919, 1.442695
        %v3939 = vpow.pop %v3938
        %v3940 = vmul.f32 %v3920, 1.442695
        %v3941 = vpow.pop %v3940
        %v3942 = vmul.f32 %v3921, 1.442695
        %v3943 = vpow.pop %v3942
        %v3944 = vmul.f32 %v3922, 1.442695
        %v3945 = vpow.pop %v3944
        %v3946 = vmul.f32 %v3923, 1.442695
        %v3947 = vpow.pop %v3946
        %v3948 = vmul.f32 %v3924, 1.442695
        %v3949 = vpow.pop %v3948
        %v3950 = vmul.f32 %v3925, 1.442695
        %v3951 = vpow.pop %v3950
        %v3952 = vmul.f32 %v3926, 1.442695
        %v3953 = vpow.pop %v3952
        %v3954 = vmul.f32 %v3927, 1.442695
        %v3955 = vpow.pop %v3954
        %v3956 = vmul.f32 %v3928, 1.442695
        %v3957 = vpow.pop %v3956
        %v3958 = vmul.f32 %v3929, 1.442695
        %v3959 = vpow.pop %v3958
        %v3960 = vmul.f32 %v3930, 1.442695
        %v3961 = vpow.pop %v3960
        %v3962 = vmul.f32 %v3931, 1.442695
        %v3963 = vpow.pop %v3962
        %v3964 = vadd.f32 %v3933, 1.0
        %v3965 = vadd.f32 %v3935, 1.0
        %v3966 = vadd.f32 %v3937, 1.0
        %v3967 = vadd.f32 %v3939, 1.0
        %v3968 = vadd.f32 %v3941, 1.0
        %v3969 = vadd.f32 %v3943, 1.0
        %v3970 = vadd.f32 %v3945, 1.0
        %v3971 = vadd.f32 %v3947, 1.0
        %v3972 = vadd.f32 %v3949, 1.0
        %v3973 = vadd.f32 %v3951, 1.0
        %v3974 = vadd.f32 %v3953, 1.0
        %v3975 = vadd.f32 %v3955, 1.0
        %v3976 = vadd.f32 %v3957, 1.0
        %v3977 = vadd.f32 %v3959, 1.0
        %v3978 = vadd.f32 %v3961, 1.0
        %v3979 = vadd.f32 %v3963, 1.0
        %v3980 = vrcp.pop %v3964
        %v3981 = vmul.f32 %v3964, %v3980
        %v3982 = vsub.f32 1.0, %v3981
        %v3983 = vmul.f32 %v3980, %v3982
        %v3984 = vadd.f32 %v3980, %v3983
        %vm3985 = vweird.f32 %v3964
        %vm3986 = vweird.f32 %v3980
        %vm3987 = vmor %vm3985, %vm3986
        %v3988 = vsel %vm3987, %v3980, %v3984
        %v3989 = vand.u32 2147483647, %v3964
        %vm3990 = vcmp.eq.f32.partialorder %v3989, 8.507059e+37
        %v3991 = vand.u32 %v3964, 2147483648
        %v3992 = vor.u32 1.1754944e-38, %v3991
        %v3993 = vsel %vm3990, %v3992, %v3988
        %v3994 = vmul.f32 1.0, %v3993
        %v3995 = vrcp.pop %v3965
        %v3996 = vmul.f32 %v3965, %v3995
        %v3997 = vsub.f32 1.0, %v3996
        %v3998 = vmul.f32 %v3995, %v3997
        %v3999 = vadd.f32 %v3995, %v3998
        %vm4000 = vweird.f32 %v3965
        %vm4001 = vweird.f32 %v3995
        %vm4002 = vmor %vm4000, %vm4001
        %v4003 = vsel %vm4002, %v3995, %v3999
        %v4004 = vand.u32 2147483647, %v3965
        %vm4005 = vcmp.eq.f32.partialorder %v4004, 8.507059e+37
        %v4006 = vand.u32 %v3965, 2147483648
        %v4007 = vor.u32 1.1754944e-38, %v4006
        %v4008 = vsel %vm4005, %v4007, %v4003
        %v4009 = vmul.f32 1.0, %v4008
        %v4010 = vrcp.pop %v3966
        %v4011 = vmul.f32 %v3966, %v4010
        %v4012 = vsub.f32 1.0, %v4011
        %v4013 = vmul.f32 %v4010, %v4012
        %v4014 = vadd.f32 %v4010, %v4013
        %vm4015 = vweird.f32 %v3966
        %vm4016 = vweird.f32 %v4010
        %vm4017 = vmor %vm4015, %vm4016
        %v4018 = vsel %vm4017, %v4010, %v4014
        %v4019 = vand.u32 2147483647, %v3966
        %vm4020 = vcmp.eq.f32.partialorder %v4019, 8.507059e+37
        %v4021 = vand.u32 %v3966, 2147483648
        %v4022 = vor.u32 1.1754944e-38, %v4021
        %v4023 = vsel %vm4020, %v4022, %v4018
        %v4024 = vmul.f32 1.0, %v4023
        %v4025 = vrcp.pop %v3967
        %v4026 = vmul.f32 %v3967, %v4025
        %v4027 = vsub.f32 1.0, %v4026
        %v4028 = vmul.f32 %v4025, %v4027
        %v4029 = vadd.f32 %v4025, %v4028
        %vm4030 = vweird.f32 %v3967
        %vm4031 = vweird.f32 %v4025
        %vm4032 = vmor %vm4030, %vm4031
        %v4033 = vsel %vm4032, %v4025, %v4029
        %v4034 = vand.u32 2147483647, %v3967
        %vm4035 = vcmp.eq.f32.partialorder %v4034, 8.507059e+37
        %v4036 = vand.u32 %v3967, 2147483648
        %v4037 = vor.u32 1.1754944e-38, %v4036
        %v4038 = vsel %vm4035, %v4037, %v4033
        %v4039 = vmul.f32 1.0, %v4038
        %v4040 = vrcp.pop %v3968
        %v4041 = vmul.f32 %v3968, %v4040
        %v4042 = vsub.f32 1.0, %v4041
        %v4043 = vmul.f32 %v4040, %v4042
        %v4044 = vadd.f32 %v4040, %v4043
        %vm4045 = vweird.f32 %v3968
        %vm4046 = vweird.f32 %v4040
        %vm4047 = vmor %vm4045, %vm4046
        %v4048 = vsel %vm4047, %v4040, %v4044
        %v4049 = vand.u32 2147483647, %v3968
        %vm4050 = vcmp.eq.f32.partialorder %v4049, 8.507059e+37
        %v4051 = vand.u32 %v3968, 2147483648
        %v4052 = vor.u32 1.1754944e-38, %v4051
        %v4053 = vsel %vm4050, %v4052, %v4048
        %v4054 = vmul.f32 1.0, %v4053
        %v4055 = vrcp.pop %v3969
        %v4056 = vmul.f32 %v3969, %v4055
        %v4057 = vsub.f32 1.0, %v4056
        %v4058 = vmul.f32 %v4055, %v4057
        %v4059 = vadd.f32 %v4055, %v4058
        %vm4060 = vweird.f32 %v3969
        %vm4061 = vweird.f32 %v4055
        %vm4062 = vmor %vm4060, %vm4061
        %v4063 = vsel %vm4062, %v4055, %v4059
        %v4064 = vand.u32 2147483647, %v3969
        %vm4065 = vcmp.eq.f32.partialorder %v4064, 8.507059e+37
        %v4066 = vand.u32 %v3969, 2147483648
        %v4067 = vor.u32 1.1754944e-38, %v4066
        %v4068 = vsel %vm4065, %v4067, %v4063
        %v4069 = vmul.f32 1.0, %v4068
        %v4070 = vrcp.pop %v3970
        %v4071 = vmul.f32 %v3970, %v4070
        %v4072 = vsub.f32 1.0, %v4071
        %v4073 = vmul.f32 %v4070, %v4072
        %v4074 = vadd.f32 %v4070, %v4073
        %vm4075 = vweird.f32 %v3970
        %vm4076 = vweird.f32 %v4070
        %vm4077 = vmor %vm4075, %vm4076
        %v4078 = vsel %vm4077, %v4070, %v4074
        %v4079 = vand.u32 2147483647, %v3970
        %vm4080 = vcmp.eq.f32.partialorder %v4079, 8.507059e+37
        %v4081 = vand.u32 %v3970, 2147483648
        %v4082 = vor.u32 1.1754944e-38, %v4081
        %v4083 = vsel %vm4080, %v4082, %v4078
        %v4084 = vmul.f32 1.0, %v4083
        %v4085 = vrcp.pop %v3971
        %v4086 = vmul.f32 %v3971, %v4085
        %v4087 = vsub.f32 1.0, %v4086
        %v4088 = vmul.f32 %v4085, %v4087
        %v4089 = vadd.f32 %v4085, %v4088
        %vm4090 = vweird.f32 %v3971
        %vm4091 = vweird.f32 %v4085
        %vm4092 = vmor %vm4090, %vm4091
        %v4093 = vsel %vm4092, %v4085, %v4089
        %v4094 = vand.u32 2147483647, %v3971
        %vm4095 = vcmp.eq.f32.partialorder %v4094, 8.507059e+37
        %v4096 = vand.u32 %v3971, 2147483648
        %v4097 = vor.u32 1.1754944e-38, %v4096
        %v4098 = vsel %vm4095, %v4097, %v4093
        %v4099 = vmul.f32 1.0, %v4098
        %v4100 = vrcp.pop %v3972
        %v4101 = vmul.f32 %v3972, %v4100
        %v4102 = vsub.f32 1.0, %v4101
        %v4103 = vmul.f32 %v4100, %v4102
        %v4104 = vadd.f32 %v4100, %v4103
        %vm4105 = vweird.f32 %v3972
        %vm4106 = vweird.f32 %v4100
        %vm4107 = vmor %vm4105, %vm4106
        %v4108 = vsel %vm4107, %v4100, %v4104
        %v4109 = vand.u32 2147483647, %v3972
        %vm4110 = vcmp.eq.f32.partialorder %v4109, 8.507059e+37
        %v4111 = vand.u32 %v3972, 2147483648
        %v4112 = vor.u32 1.1754944e-38, %v4111
        %v4113 = vsel %vm4110, %v4112, %v4108
        %v4114 = vmul.f32 1.0, %v4113
        %v4115 = vrcp.pop %v3973
        %v4116 = vmul.f32 %v3973, %v4115
        %v4117 = vsub.f32 1.0, %v4116
        %v4118 = vmul.f32 %v4115, %v4117
        %v4119 = vadd.f32 %v4115, %v4118
        %vm4120 = vweird.f32 %v3973
        %vm4121 = vweird.f32 %v4115
        %vm4122 = vmor %vm4120, %vm4121
        %v4123 = vsel %vm4122, %v4115, %v4119
        %v4124 = vand.u32 2147483647, %v3973
        %vm4125 = vcmp.eq.f32.partialorder %v4124, 8.507059e+37
        %v4126 = vand.u32 %v3973, 2147483648
        %v4127 = vor.u32 1.1754944e-38, %v4126
        %v4128 = vsel %vm4125, %v4127, %v4123
        %v4129 = vmul.f32 1.0, %v4128
        %v4130 = vrcp.pop %v3974
        %v4131 = vmul.f32 %v3974, %v4130
        %v4132 = vsub.f32 1.0, %v4131
        %v4133 = vmul.f32 %v4130, %v4132
        %v4134 = vadd.f32 %v4130, %v4133
        %vm4135 = vweird.f32 %v3974
        %vm4136 = vweird.f32 %v4130
        %vm4137 = vmor %vm4135, %vm4136
        %v4138 = vsel %vm4137, %v4130, %v4134
        %v4139 = vand.u32 2147483647, %v3974
        %vm4140 = vcmp.eq.f32.partialorder %v4139, 8.507059e+37
        %v4141 = vand.u32 %v3974, 2147483648
        %v4142 = vor.u32 1.1754944e-38, %v4141
        %v4143 = vsel %vm4140, %v4142, %v4138
        %v4144 = vmul.f32 1.0, %v4143
        %v4145 = vrcp.pop %v3975
        %v4146 = vmul.f32 %v3975, %v4145
        %v4147 = vsub.f32 1.0, %v4146
        %v4148 = vmul.f32 %v4145, %v4147
        %v4149 = vadd.f32 %v4145, %v4148
        %vm4150 = vweird.f32 %v3975
        %vm4151 = vweird.f32 %v4145
        %vm4152 = vmor %vm4150, %vm4151
        %v4153 = vsel %vm4152, %v4145, %v4149
        %v4154 = vand.u32 2147483647, %v3975
        %vm4155 = vcmp.eq.f32.partialorder %v4154, 8.507059e+37
        %v4156 = vand.u32 %v3975, 2147483648
        %v4157 = vor.u32 1.1754944e-38, %v4156
        %v4158 = vsel %vm4155, %v4157, %v4153
        %v4159 = vmul.f32 1.0, %v4158
        %v4160 = vrcp.pop %v3976
        %v4161 = vmul.f32 %v3976, %v4160
        %v4162 = vsub.f32 1.0, %v4161
        %v4163 = vmul.f32 %v4160, %v4162
        %v4164 = vadd.f32 %v4160, %v4163
        %vm4165 = vweird.f32 %v3976
        %vm4166 = vweird.f32 %v4160
        %vm4167 = vmor %vm4165, %vm4166
        %v4168 = vsel %vm4167, %v4160, %v4164
        %v4169 = vand.u32 2147483647, %v3976
        %vm4170 = vcmp.eq.f32.partialorder %v4169, 8.507059e+37
        %v4171 = vand.u32 %v3976, 2147483648
        %v4172 = vor.u32 1.1754944e-38, %v4171
        %v4173 = vsel %vm4170, %v4172, %v4168
        %v4174 = vmul.f32 1.0, %v4173
        %v4175 = vrcp.pop %v3977
        %v4176 = vmul.f32 %v3977, %v4175
        %v4177 = vsub.f32 1.0, %v4176
        %v4178 = vmul.f32 %v4175, %v4177
        %v4179 = vadd.f32 %v4175, %v4178
        %vm4180 = vweird.f32 %v3977
        %vm4181 = vweird.f32 %v4175
        %vm4182 = vmor %vm4180, %vm4181
        %v4183 = vsel %vm4182, %v4175, %v4179
        %v4184 = vand.u32 2147483647, %v3977
        %vm4185 = vcmp.eq.f32.partialorder %v4184, 8.507059e+37
        %v4186 = vand.u32 %v3977, 2147483648
        %v4187 = vor.u32 1.1754944e-38, %v4186
        %v4188 = vsel %vm4185, %v4187, %v4183
        %v4189 = vmul.f32 1.0, %v4188
        %v4190 = vrcp.pop %v3978
        %v4191 = vmul.f32 %v3978, %v4190
        %v4192 = vsub.f32 1.0, %v4191
        %v4193 = vmul.f32 %v4190, %v4192
        %v4194 = vadd.f32 %v4190, %v4193
        %vm4195 = vweird.f32 %v3978
        %vm4196 = vweird.f32 %v4190
        %vm4197 = vmor %vm4195, %vm4196
        %v4198 = vsel %vm4197, %v4190, %v4194
        %v4199 = vand.u32 2147483647, %v3978
        %vm4200 = vcmp.eq.f32.partialorder %v4199, 8.507059e+37
        %v4201 = vand.u32 %v3978, 2147483648
        %v4202 = vor.u32 1.1754944e-38, %v4201
        %v4203 = vsel %vm4200, %v4202, %v4198
        %v4204 = vmul.f32 1.0, %v4203
        %v4205 = vrcp.pop %v3979
        %v4206 = vmul.f32 %v3979, %v4205
        %v4207 = vsub.f32 1.0, %v4206
        %v4208 = vmul.f32 %v4205, %v4207
        %v4209 = vadd.f32 %v4205, %v4208
        %vm4210 = vweird.f32 %v3979
        %vm4211 = vweird.f32 %v4205
        %vm4212 = vmor %vm4210, %vm4211
        %v4213 = vsel %vm4212, %v4205, %v4209
        %v4214 = vand.u32 2147483647, %v3979
        %vm4215 = vcmp.eq.f32.partialorder %v4214, 8.507059e+37
        %v4216 = vand.u32 %v3979, 2147483648
        %v4217 = vor.u32 1.1754944e-38, %v4216
        %v4218 = vsel %vm4215, %v4217, %v4213
        %v4219 = vmul.f32 1.0, %v4218
        %v4220 = vmul.f32 %v3994, 2.0
        %v4221 = vmul.f32 %v4009, 2.0
        %v4222 = vmul.f32 %v4024, 2.0
        %v4223 = vmul.f32 %v4039, 2.0
        %v4224 = vmul.f32 %v4054, 2.0
        %v4225 = vmul.f32 %v4069, 2.0
        %v4226 = vmul.f32 %v4084, 2.0
        %v4227 = vmul.f32 %v4099, 2.0
        %v4228 = vmul.f32 %v4114, 2.0
        %v4229 = vmul.f32 %v4129, 2.0
        %v4230 = vmul.f32 %v4144, 2.0
        %v4231 = vmul.f32 %v4159, 2.0
        %v4232 = vmul.f32 %v4174, 2.0
        %v4233 = vmul.f32 %v4189, 2.0
        %v4234 = vmul.f32 %v4204, 2.0
        %v4235 = vmul.f32 %v4219, 2.0
        %v4236 = vsub.f32 %v4220, 1.0
        %v4237 = vsub.f32 %v4221, 1.0
        %v4238 = vsub.f32 %v4222, 1.0
        %v4239 = vsub.f32 %v4223, 1.0
        %v4240 = vsub.f32 %v4224, 1.0
        %v4241 = vsub.f32 %v4225, 1.0
        %v4242 = vsub.f32 %v4226, 1.0
        %v4243 = vsub.f32 %v4227, 1.0
        %v4244 = vsub.f32 %v4228, 1.0
        %v4245 = vsub.f32 %v4229, 1.0
        %v4246 = vsub.f32 %v4230, 1.0
        %v4247 = vsub.f32 %v4231, 1.0
        %v4248 = vsub.f32 %v4232, 1.0
        %v4249 = vsub.f32 %v4233, 1.0
        %v4250 = vsub.f32 %v4234, 1.0
        %v4251 = vsub.f32 %v4235, 1.0
        %s4252 = scalar_lea.vmem %s253, 128
        %v4253 = vld [vmem:[%s4252] sm:$0xff]
        %v4254 = vld [vmem:[%s4252 + $0x8] sm:$0xff]
        %v4255 = vld [vmem:[%s4252 + $0x10] sm:$0xff]
        %v4256 = vld [vmem:[%s4252 + $0x18] sm:$0xff]
        %v4257 = vld [vmem:[%s4252 + $0x20] sm:$0xff]
        %v4258 = vld [vmem:[%s4252 + $0x28] sm:$0xff]
        %v4259 = vld [vmem:[%s4252 + $0x30] sm:$0xff]
        %v4260 = vld [vmem:[%s4252 + $0x38] sm:$0xff]
        %v4261 = vld [vmem:[%s4252 + $0x40] sm:$0xff]
        %v4262 = vld [vmem:[%s4252 + $0x48] sm:$0xff]
        %v4263 = vld [vmem:[%s4252 + $0x50] sm:$0xff]
        %v4264 = vld [vmem:[%s4252 + $0x58] sm:$0xff]
        %v4265 = vld [vmem:[%s4252 + $0x60] sm:$0xff]
        %v4266 = vld [vmem:[%s4252 + $0x68] sm:$0xff]
        %v4267 = vld [vmem:[%s4252 + $0x70] sm:$0xff]
        %v4268 = vld [vmem:[%s4252 + $0x78] sm:$0xff]
        %4285 = vrot.lane.b32.xlu0 %v4253, 32
        %v4286 = vpop.permute.xlu0 %4285
        %4287 = vrot.lane.b32.xlu0 %v4254, 32
        %v4288 = vpop.permute.xlu0 %4287
        %4289 = vrot.lane.b32.xlu0 %v4255, 32
        %v4290 = vpop.permute.xlu0 %4289
        %4291 = vrot.lane.b32.xlu0 %v4256, 32
        %v4292 = vpop.permute.xlu0 %4291
        %4293 = vrot.lane.b32.xlu0 %v4257, 32
        %v4294 = vpop.permute.xlu0 %4293
        %4295 = vrot.lane.b32.xlu0 %v4258, 32
        %v4296 = vpop.permute.xlu0 %4295
        %4297 = vrot.lane.b32.xlu0 %v4259, 32
        %v4298 = vpop.permute.xlu0 %4297
        %4299 = vrot.lane.b32.xlu0 %v4260, 32
        %v4300 = vpop.permute.xlu0 %4299
        %4301 = vrot.lane.b32.xlu0 %v4261, 32
        %v4302 = vpop.permute.xlu0 %4301
        %4303 = vrot.lane.b32.xlu0 %v4262, 32
        %v4304 = vpop.permute.xlu0 %4303
        %4305 = vrot.lane.b32.xlu0 %v4263, 32
        %v4306 = vpop.permute.xlu0 %4305
        %4307 = vrot.lane.b32.xlu0 %v4264, 32
        %v4308 = vpop.permute.xlu0 %4307
        %4309 = vrot.lane.b32.xlu0 %v4265, 32
        %v4310 = vpop.permute.xlu0 %4309
        %4311 = vrot.lane.b32.xlu0 %v4266, 32
        %v4312 = vpop.permute.xlu0 %4311
        %4313 = vrot.lane.b32.xlu0 %v4267, 32
        %v4314 = vpop.permute.xlu0 %4313
        %4315 = vrot.lane.b32.xlu0 %v4268, 32
        %v4316 = vpop.permute.xlu0 %4315
        %v4333 = vmul.f32 %v3994, %v4286
        %v4334 = vmul.f32 %v4009, %v4288
        %v4335 = vmul.f32 %v4024, %v4290
        %v4336 = vmul.f32 %v4039, %v4292
        %v4337 = vmul.f32 %v4054, %v4294
        %v4338 = vmul.f32 %v4069, %v4296
        %v4339 = vmul.f32 %v4084, %v4298
        %v4340 = vmul.f32 %v4099, %v4300
        %v4341 = vmul.f32 %v4114, %v4302
        %v4342 = vmul.f32 %v4129, %v4304
        %v4343 = vmul.f32 %v4144, %v4306
        %v4344 = vmul.f32 %v4159, %v4308
        %v4345 = vmul.f32 %v4174, %v4310
        %v4346 = vmul.f32 %v4189, %v4312
        %v4347 = vmul.f32 %v4204, %v4314
        %v4348 = vmul.f32 %v4219, %v4316
        %4365 = vrot.lane.b32.xlu0 %v4236, 32
        %v4366 = vpop.permute.xlu0 %4365
        %4367 = vrot.lane.b32.xlu0 %v4237, 32
        %v4368 = vpop.permute.xlu0 %4367
        %4369 = vrot.lane.b32.xlu0 %v4238, 32
        %v4370 = vpop.permute.xlu0 %4369
        %4371 = vrot.lane.b32.xlu0 %v4239, 32
        %v4372 = vpop.permute.xlu0 %4371
        %4373 = vrot.lane.b32.xlu0 %v4240, 32
        %v4374 = vpop.permute.xlu0 %4373
        %4375 = vrot.lane.b32.xlu0 %v4241, 32
        %v4376 = vpop.permute.xlu0 %4375
        %4377 = vrot.lane.b32.xlu0 %v4242, 32
        %v4378 = vpop.permute.xlu0 %4377
        %4379 = vrot.lane.b32.xlu0 %v4243, 32
        %v4380 = vpop.permute.xlu0 %4379
        %4381 = vrot.lane.b32.xlu0 %v4244, 32
        %v4382 = vpop.permute.xlu0 %4381
        %4383 = vrot.lane.b32.xlu0 %v4245, 32
        %v4384 = vpop.permute.xlu0 %4383
        %4385 = vrot.lane.b32.xlu0 %v4246, 32
        %v4386 = vpop.permute.xlu0 %4385
        %4387 = vrot.lane.b32.xlu0 %v4247, 32
        %v4388 = vpop.permute.xlu0 %4387
        %4389 = vrot.lane.b32.xlu0 %v4248, 32
        %v4390 = vpop.permute.xlu0 %4389
        %4391 = vrot.lane.b32.xlu0 %v4249, 32
        %v4392 = vpop.permute.xlu0 %4391
        %4393 = vrot.lane.b32.xlu0 %v4250, 32
        %v4394 = vpop.permute.xlu0 %4393
        %4395 = vrot.lane.b32.xlu0 %v4251, 32
        %v4396 = vpop.permute.xlu0 %4395
        %v4413 = vmul.f32 %v3994, %v4366
        %v4414 = vmul.f32 %v4009, %v4368
        %v4415 = vmul.f32 %v4024, %v4370
        %v4416 = vmul.f32 %v4039, %v4372
        %v4417 = vmul.f32 %v4054, %v4374
        %v4418 = vmul.f32 %v4069, %v4376
        %v4419 = vmul.f32 %v4084, %v4378
        %v4420 = vmul.f32 %v4099, %v4380
        %v4421 = vmul.f32 %v4114, %v4382
        %v4422 = vmul.f32 %v4129, %v4384
        %v4423 = vmul.f32 %v4144, %v4386
        %v4424 = vmul.f32 %v4159, %v4388
        %v4425 = vmul.f32 %v4174, %v4390
        %v4426 = vmul.f32 %v4189, %v4392
        %v4427 = vmul.f32 %v4204, %v4394
        %v4428 = vmul.f32 %v4219, %v4396
        %4445 = vrot.lane.b32.xlu0 %v4413, 32
        %v4446 = vpop.permute.xlu0 %4445
        %4447 = vrot.lane.b32.xlu0 %v4414, 32
        %v4448 = vpop.permute.xlu0 %4447
        %4449 = vrot.lane.b32.xlu0 %v4415, 32
        %v4450 = vpop.permute.xlu0 %4449
        %4451 = vrot.lane.b32.xlu0 %v4416, 32
        %v4452 = vpop.permute.xlu0 %4451
        %4453 = vrot.lane.b32.xlu0 %v4417, 32
        %v4454 = vpop.permute.xlu0 %4453
        %4455 = vrot.lane.b32.xlu0 %v4418, 32
        %v4456 = vpop.permute.xlu0 %4455
        %4457 = vrot.lane.b32.xlu0 %v4419, 32
        %v4458 = vpop.permute.xlu0 %4457
        %4459 = vrot.lane.b32.xlu0 %v4420, 32
        %v4460 = vpop.permute.xlu0 %4459
        %4461 = vrot.lane.b32.xlu0 %v4421, 32
        %v4462 = vpop.permute.xlu0 %4461
        %4463 = vrot.lane.b32.xlu0 %v4422, 32
        %v4464 = vpop.permute.xlu0 %4463
        %4465 = vrot.lane.b32.xlu0 %v4423, 32
        %v4466 = vpop.permute.xlu0 %4465
        %4467 = vrot.lane.b32.xlu0 %v4424, 32
        %v4468 = vpop.permute.xlu0 %4467
        %4469 = vrot.lane.b32.xlu0 %v4425, 32
        %v4470 = vpop.permute.xlu0 %4469
        %4471 = vrot.lane.b32.xlu0 %v4426, 32
        %v4472 = vpop.permute.xlu0 %4471
        %4473 = vrot.lane.b32.xlu0 %v4427, 32
        %v4474 = vpop.permute.xlu0 %4473
        %4475 = vrot.lane.b32.xlu0 %v4428, 32
        %v4476 = vpop.permute.xlu0 %4475
        %v4493 = vadd.f32 %v4333, %v4446
        %v4494 = vadd.f32 %v4334, %v4448
        %v4495 = vadd.f32 %v4335, %v4450
        %v4496 = vadd.f32 %v4336, %v4452
        %v4497 = vadd.f32 %v4337, %v4454
        %v4498 = vadd.f32 %v4338, %v4456
        %v4499 = vadd.f32 %v4339, %v4458
        %v4500 = vadd.f32 %v4340, %v4460
        %v4501 = vadd.f32 %v4341, %v4462
        %v4502 = vadd.f32 %v4342, %v4464
        %v4503 = vadd.f32 %v4343, %v4466
        %v4504 = vadd.f32 %v4344, %v4468
        %v4505 = vadd.f32 %v4345, %v4470
        %v4506 = vadd.f32 %v4346, %v4472
        %v4507 = vadd.f32 %v4347, %v4474
        %v4508 = vadd.f32 %v4348, %v4476
        %v4509 = vtanh.pop %v4493
        %v4510 = vtanh.pop %v4494
        %v4511 = vtanh.pop %v4495
        %v4512 = vtanh.pop %v4496
        %v4513 = vtanh.pop %v4497
        %v4514 = vtanh.pop %v4498
        %v4515 = vtanh.pop %v4499
        %v4516 = vtanh.pop %v4500
        %v4517 = vtanh.pop %v4501
        %v4518 = vtanh.pop %v4502
        %v4519 = vtanh.pop %v4503
        %v4520 = vtanh.pop %v4504
        %v4521 = vtanh.pop %v4505
        %v4522 = vtanh.pop %v4506
        %v4523 = vtanh.pop %v4507
        %v4524 = vtanh.pop %v4508
        %4541 = vrot.lane.b32.xlu0 %v4509, 32
        %v4542 = vpop.permute.xlu0 %4541
        %4543 = vrot.lane.b32.xlu0 %v4510, 32
        %v4544 = vpop.permute.xlu0 %4543
        %4545 = vrot.lane.b32.xlu0 %v4511, 32
        %v4546 = vpop.permute.xlu0 %4545
        %4547 = vrot.lane.b32.xlu0 %v4512, 32
        %v4548 = vpop.permute.xlu0 %4547
        %4549 = vrot.lane.b32.xlu0 %v4513, 32
        %v4550 = vpop.permute.xlu0 %4549
        %4551 = vrot.lane.b32.xlu0 %v4514, 32
        %v4552 = vpop.permute.xlu0 %4551
        %4553 = vrot.lane.b32.xlu0 %v4515, 32
        %v4554 = vpop.permute.xlu0 %4553
        %4555 = vrot.lane.b32.xlu0 %v4516, 32
        %v4556 = vpop.permute.xlu0 %4555
        %4557 = vrot.lane.b32.xlu0 %v4517, 32
        %v4558 = vpop.permute.xlu0 %4557
        %4559 = vrot.lane.b32.xlu0 %v4518, 32
        %v4560 = vpop.permute.xlu0 %4559
        %4561 = vrot.lane.b32.xlu0 %v4519, 32
        %v4562 = vpop.permute.xlu0 %4561
        %4563 = vrot.lane.b32.xlu0 %v4520, 32
        %v4564 = vpop.permute.xlu0 %4563
        %4565 = vrot.lane.b32.xlu0 %v4521, 32
        %v4566 = vpop.permute.xlu0 %4565
        %4567 = vrot.lane.b32.xlu0 %v4522, 32
        %v4568 = vpop.permute.xlu0 %4567
        %4569 = vrot.lane.b32.xlu0 %v4523, 32
        %v4570 = vpop.permute.xlu0 %4569
        %4571 = vrot.lane.b32.xlu0 %v4524, 32
        %v4572 = vpop.permute.xlu0 %4571
        %v4589 = vmul.f32 %v3994, %v4542
        %v4590 = vmul.f32 %v4009, %v4544
        %v4591 = vmul.f32 %v4024, %v4546
        %v4592 = vmul.f32 %v4039, %v4548
        %v4593 = vmul.f32 %v4054, %v4550
        %v4594 = vmul.f32 %v4069, %v4552
        %v4595 = vmul.f32 %v4084, %v4554
        %v4596 = vmul.f32 %v4099, %v4556
        %v4597 = vmul.f32 %v4114, %v4558
        %v4598 = vmul.f32 %v4129, %v4560
        %v4599 = vmul.f32 %v4144, %v4562
        %v4600 = vmul.f32 %v4159, %v4564
        %v4601 = vmul.f32 %v4174, %v4566
        %v4602 = vmul.f32 %v4189, %v4568
        %v4603 = vmul.f32 %v4204, %v4570
        %v4604 = vmul.f32 %v4219, %v4572
        %4621 = vrot.lane.b32.xlu0 %v4589, 64
        %v4622 = vpop.permute.xlu0 %4621
        %4623 = vrot.lane.b32.xlu0 %v4590, 64
        %v4624 = vpop.permute.xlu0 %4623
        %4625 = vrot.lane.b32.xlu0 %v4591, 64
        %v4626 = vpop.permute.xlu0 %4625
        %4627 = vrot.lane.b32.xlu0 %v4592, 64
        %v4628 = vpop.permute.xlu0 %4627
        %4629 = vrot.lane.b32.xlu0 %v4593, 64
        %v4630 = vpop.permute.xlu0 %4629
        %4631 = vrot.lane.b32.xlu0 %v4594, 64
        %v4632 = vpop.permute.xlu0 %4631
        %4633 = vrot.lane.b32.xlu0 %v4595, 64
        %v4634 = vpop.permute.xlu0 %4633
        %4635 = vrot.lane.b32.xlu0 %v4596, 64
        %v4636 = vpop.permute.xlu0 %4635
        %4637 = vrot.lane.b32.xlu0 %v4597, 64
        %v4638 = vpop.permute.xlu0 %4637
        %4639 = vrot.lane.b32.xlu0 %v4598, 64
        %v4640 = vpop.permute.xlu0 %4639
        %4641 = vrot.lane.b32.xlu0 %v4599, 64
        %v4642 = vpop.permute.xlu0 %4641
        %4643 = vrot.lane.b32.xlu0 %v4600, 64
        %v4644 = vpop.permute.xlu0 %4643
        %4645 = vrot.lane.b32.xlu0 %v4601, 64
        %v4646 = vpop.permute.xlu0 %4645
        %4647 = vrot.lane.b32.xlu0 %v4602, 64
        %v4648 = vpop.permute.xlu0 %4647
        %4649 = vrot.lane.b32.xlu0 %v4603, 64
        %v4650 = vpop.permute.xlu0 %4649
        %4651 = vrot.lane.b32.xlu0 %v4604, 64
        %v4652 = vpop.permute.xlu0 %4651
        %s4669 = scalar_lea.vmem %s236, 128 [#allocation2]
        %4670 = vst.msk [vmem:[%s4669] sm:$0xff] %vm2419, %v4622
        %4671 = vst.msk [vmem:[%s4669 + $0x8] sm:$0xff] %vm2419, %v4624
        %4672 = vst.msk [vmem:[%s4669 + $0x10] sm:$0xff] %vm2419, %v4626
        %4673 = vst.msk [vmem:[%s4669 + $0x18] sm:$0xff] %vm2419, %v4628
        %4674 = vst.msk [vmem:[%s4669 + $0x20] sm:$0xff] %vm2419, %v4630
        %4675 = vst.msk [vmem:[%s4669 + $0x28] sm:$0xff] %vm2419, %v4632
        %4676 = vst.msk [vmem:[%s4669 + $0x30] sm:$0xff] %vm2419, %v4634
        %4677 = vst.msk [vmem:[%s4669 + $0x38] sm:$0xff] %vm2419, %v4636
        %4678 = vst.msk [vmem:[%s4669 + $0x40] sm:$0xff] %vm2419, %v4638
        %4679 = vst.msk [vmem:[%s4669 + $0x48] sm:$0xff] %vm2419, %v4640
        %4680 = vst.msk [vmem:[%s4669 + $0x50] sm:$0xff] %vm2419, %v4642
        %4681 = vst.msk [vmem:[%s4669 + $0x58] sm:$0xff] %vm2419, %v4644
        %4682 = vst.msk [vmem:[%s4669 + $0x60] sm:$0xff] %vm2419, %v4646
        %4683 = vst.msk [vmem:[%s4669 + $0x68] sm:$0xff] %vm2419, %v4648
        %4684 = vst.msk [vmem:[%s4669 + $0x70] sm:$0xff] %vm2419, %v4650
        %4685 = vst.msk [vmem:[%s4669 + $0x78] sm:$0xff] %vm2419, %v4652
        %4702 = vrot.lane.b32.xlu0 %v4493, 96
        %v4703 = vpop.permute.xlu0 %4702
        %4704 = vrot.lane.b32.xlu0 %v4494, 96
        %v4705 = vpop.permute.xlu0 %4704
        %4706 = vrot.lane.b32.xlu0 %v4495, 96
        %v4707 = vpop.permute.xlu0 %4706
        %4708 = vrot.lane.b32.xlu0 %v4496, 96
        %v4709 = vpop.permute.xlu0 %4708
        %4710 = vrot.lane.b32.xlu0 %v4497, 96
        %v4711 = vpop.permute.xlu0 %4710
        %4712 = vrot.lane.b32.xlu0 %v4498, 96
        %v4713 = vpop.permute.xlu0 %4712
        %4714 = vrot.lane.b32.xlu0 %v4499, 96
        %v4715 = vpop.permute.xlu0 %4714
        %4716 = vrot.lane.b32.xlu0 %v4500, 96
        %v4717 = vpop.permute.xlu0 %4716
        %4718 = vrot.lane.b32.xlu0 %v4501, 96
        %v4719 = vpop.permute.xlu0 %4718
        %4720 = vrot.lane.b32.xlu0 %v4502, 96
        %v4721 = vpop.permute.xlu0 %4720
        %4722 = vrot.lane.b32.xlu0 %v4503, 96
        %v4723 = vpop.permute.xlu0 %4722
        %4724 = vrot.lane.b32.xlu0 %v4504, 96
        %v4725 = vpop.permute.xlu0 %4724
        %4726 = vrot.lane.b32.xlu0 %v4505, 96
        %v4727 = vpop.permute.xlu0 %4726
        %4728 = vrot.lane.b32.xlu0 %v4506, 96
        %v4729 = vpop.permute.xlu0 %4728
        %4730 = vrot.lane.b32.xlu0 %v4507, 96
        %v4731 = vpop.permute.xlu0 %4730
        %4732 = vrot.lane.b32.xlu0 %v4508, 96
        %v4733 = vpop.permute.xlu0 %4732
        %s4750 = scalar_lea.vmem %s243, 128 [#allocation4]
        %4751 = vst.msk [vmem:[%s4750] sm:$0xff] %vm2419, %v4703
        %4752 = vst.msk [vmem:[%s4750 + $0x8] sm:$0xff] %vm2419, %v4705
        %4753 = vst.msk [vmem:[%s4750 + $0x10] sm:$0xff] %vm2419, %v4707
        %4754 = vst.msk [vmem:[%s4750 + $0x18] sm:$0xff] %vm2419, %v4709
        %4755 = vst.msk [vmem:[%s4750 + $0x20] sm:$0xff] %vm2419, %v4711
        %4756 = vst.msk [vmem:[%s4750 + $0x28] sm:$0xff] %vm2419, %v4713
        %4757 = vst.msk [vmem:[%s4750 + $0x30] sm:$0xff] %vm2419, %v4715
        %4758 = vst.msk [vmem:[%s4750 + $0x38] sm:$0xff] %vm2419, %v4717
        %4759 = vst.msk [vmem:[%s4750 + $0x40] sm:$0xff] %vm2419, %v4719
        %4760 = vst.msk [vmem:[%s4750 + $0x48] sm:$0xff] %vm2419, %v4721
        %4761 = vst.msk [vmem:[%s4750 + $0x50] sm:$0xff] %vm2419, %v4723
        %4762 = vst.msk [vmem:[%s4750 + $0x58] sm:$0xff] %vm2419, %v4725
        %4763 = vst.msk [vmem:[%s4750 + $0x60] sm:$0xff] %vm2419, %v4727
        %4764 = vst.msk [vmem:[%s4750 + $0x68] sm:$0xff] %vm2419, %v4729
        %4765 = vst.msk [vmem:[%s4750 + $0x70] sm:$0xff] %vm2419, %v4731
        %4766 = vst.msk [vmem:[%s4750 + $0x78] sm:$0xff] %vm2419, %v4733
        %s4767 = sand.u32 %s125, 1
        %s4768 = scalar_lea.sflag [#allocation3], %s4767
        %s4769 = sand.u32 %s125, 1
        %s4770 = smul.addr %s4769, 256
        %s4771 = scalar_lea.vmem [#allocation2], %s4770
        %s4772 = sand.u32 %s151, 1
        %s4773 = scalar_lea.sflag [#allocation5], %s4772
        %s4774 = sand.u32 %s151, 1
        %s4775 = smul.addr %s4774, 256
        %s4776 = scalar_lea.vmem [#allocation4], %s4775
        // Predicated region
        $region37: #{convlstm_cell_forward.1} parent=35 // pred_check
          %p4777 = pneg %p135
        $region38: #{convlstm_cell_forward.1} parent=35 // pred_check_branch
          %4779 = sbr.rel (%p4777) target = $region40
        $region39: #{convlstm_cell_forward.1} parent=35 // pred_region
          %4781 = vsyncadd %s4768, 0
          %s4782 = smul.addr %s23, 32
          %s4783 = smul.addr %s4782, 8
          %s4784 = scalar_lea.hbm %s4, %s4783
          %s4785 = sshll.u32 %s4771, 4
          %s4786 = int_to_ptr.vmem [resolvable:$true] %s4785
          %s4787 = sshll.u32 %s4784, 4
          %s4788 = int_to_ptr.hbm [resolvable:$true] %s4787
          %4793 = dma.vmem_to_hbm [thread:$0]  %s4786, 4096, %s4788, %s4768, 128, 128, 8
        $region40: #{convlstm_cell_forward.1} parent=35 // pred_fallthru
          _
        // Predicated region
        $region41: #{convlstm_cell_forward.1} parent=35 // pred_check
          %p4794 = pneg %p161
        $region42: #{convlstm_cell_forward.1} parent=35 // pred_check_branch
          %4796 = sbr.rel (%p4794) target = $region44
        $region43: #{convlstm_cell_forward.1} parent=35 // pred_region
          %4798 = vsyncadd %s4773, 0
          %s4799 = smul.addr %s23, 32
          %s4800 = smul.addr %s4799, 8
          %s4801 = scalar_lea.hbm %s5, %s4800
          %s4802 = sshll.u32 %s4776, 4
          %s4803 = int_to_ptr.vmem [resolvable:$true] %s4802
          %s4804 = sshll.u32 %s4801, 4
          %s4805 = int_to_ptr.hbm [resolvable:$true] %s4804
          %4810 = dma.vmem_to_hbm [thread:$0]  %s4803, 4096, %s4805, %s4773, 128, 128, 8
        $region44: #{convlstm_cell_forward.1} parent=35 // pred_fallthru
          _
      $region36: #{convlstm_cell_forward.1} parent=5 // pred_fallthru
        _
      %p4811 = scmp.le.s32.totalorder 2, %s18
      // Predicated region
      $region45: #{convlstm_cell_forward.1} parent=5 // pred_check
        %p4812 = pneg %p4811
      $region46: #{convlstm_cell_forward.1} parent=5 // pred_check_branch
        %4814 = sbr.rel (%p4812) target = $region48
      $region47: #{convlstm_cell_forward.1} parent=5 // pred_region
        %s4815 = ssub.s32 %s18, 2
        // Predicated region
        $region49: #{convlstm_cell_forward.1} parent=47 // pred_check
          %p4816 = pneg %p141
        $region50: #{convlstm_cell_forward.1} parent=47 // pred_check_branch
          %4818 = sbr.rel (%p4816) target = $region52
        $region51: #{convlstm_cell_forward.1} parent=47 // pred_region
          %s4819 = sand.u32 %s126, 1
          %s4820 = scalar_lea.sflag [#allocation3], %s4819
          %s4821 = sand.u32 %s126, 1
          %s4822 = smul.addr %s4821, 256
          %s4823 = scalar_lea.vmem [#allocation2], %s4822
          %4825 = dma.done %s4820, 4096
        $region52: #{convlstm_cell_forward.1} parent=47 // pred_fallthru
          _
        // Predicated region
        $region53: #{convlstm_cell_forward.1} parent=47 // pred_check
          %p4826 = pneg %p167
        $region54: #{convlstm_cell_forward.1} parent=47 // pred_check_branch
          %4828 = sbr.rel (%p4826) target = $region56
        $region55: #{convlstm_cell_forward.1} parent=47 // pred_region
          %s4829 = sand.u32 %s152, 1
          %s4830 = scalar_lea.sflag [#allocation5], %s4829
          %s4831 = sand.u32 %s152, 1
          %s4832 = smul.addr %s4831, 256
          %s4833 = scalar_lea.vmem [#allocation4], %s4832
          %4835 = dma.done %s4830, 4096
        $region56: #{convlstm_cell_forward.1} parent=47 // pred_fallthru
          _
      $region48: #{convlstm_cell_forward.1} parent=5 // pred_fallthru
        _
    $region6: #{convlstm_cell_forward.1} parent=1 // loop_footer
      %s22 = sadd.s32 1, %s18
    $region7: #{convlstm_cell_forward.1} parent=1 // loop_footer_branch
      %17 = sbr.rel target = $region3
    $region8: #{convlstm_cell_forward.1} parent=1 // loop_exit
      _
    %4836 = vsyncpa [#allocation3], 1
    %s4837 = scalar_lea.sflag [#allocation3], 1
    %4838 = vsyncpa %s4837, 1
    %4839 = vsyncpa [#allocation5], 1
    %s4840 = scalar_lea.sflag [#allocation5], 1
    %4841 = vsyncpa %s4840, 1

</llo_original>
